<compile_context>
chip_gen: v6e
topology: v6e:2x2x1
jax: 0.10.0
libtpu: 0.0.40
codegen_flags: <defaults>
</compile_context>

<pallas_src>
import jax
import jax.numpy as jnp
from jax import lax
from jax.experimental import pallas as pl
from jax.experimental.pallas import tpu as pltpu

LANE = 128


def _round_up(x, m):
    return (x + m - 1) // m * m


def _pad_axis(a, axis, target):
    if a.shape[axis] == target:
        return a
    widths = [(0, 0)] * a.ndim
    widths[axis] = (0, target - a.shape[axis])
    return jnp.pad(a, widths)


def _fold_bn(gamma, beta, mean, var, eps=1e-5):
    scale = gamma / jnp.sqrt(var + eps)
    return scale, beta - mean * scale


def prepare_bottleneck_params(w1_oihw, bn1, w2_oihw, bn2, w3_oihw, bn3, eps=1e-5):
    """One-time constant transform of the PyTorch parameters.

    Folds the inference-mode BN scale into the conv weights, pads all channel
    dims to multiples of 128 lanes, reshapes conv2 to im2col layout (9*P, P)
    and casts weights to bf16 (biases stay f32).
    """
    planes = w1_oihw.shape[0]
    cin = w1_oihw.shape[1]
    cout = w3_oihw.shape[0]
    cin_p, p_p, cout_p = (_round_up(c, LANE) for c in (cin, planes, cout))

    s1, b1 = _fold_bn(*bn1, eps)
    s2, b2 = _fold_bn(*bn2, eps)
    s3, b3 = _fold_bn(*bn3, eps)

    # conv1: OIHW (P, Cin, 1, 1) -> (Cin, P); scale folded into output columns.
    w1 = jnp.transpose(w1_oihw[:, :, 0, 0], (1, 0)) * s1[None, :]
    w1 = _pad_axis(_pad_axis(w1, 0, cin_p), 1, p_p)

    # conv2: OIHW (P, P, 3, 3) -> (ky, kx, Pin, Pout) -> (9*Pp, Pp).
    w2 = jnp.transpose(w2_oihw, (2, 3, 1, 0)) * s2[None, None, None, :]
    w2 = _pad_axis(_pad_axis(w2, 2, p_p), 3, p_p).reshape(9 * p_p, p_p)

    # conv3: OIHW (Cout, P, 1, 1) -> (P, Cout).
    w3 = jnp.transpose(w3_oihw[:, :, 0, 0], (1, 0)) * s3[None, :]
    w3 = _pad_axis(_pad_axis(w3, 0, p_p), 1, cout_p)

    return (w1.astype(jnp.bfloat16),
            _pad_axis(b1, 0, p_p).reshape(1, p_p).astype(jnp.float32),
            w2.astype(jnp.bfloat16),
            _pad_axis(b2, 0, p_p).reshape(1, p_p).astype(jnp.float32),
            w3.astype(jnp.bfloat16),
            _pad_axis(b3, 0, cout_p).reshape(1, cout_p).astype(jnp.float32))


def _bottleneck_kernel(x_ref, x_hbm_ref, w1_ref, b1_ref, w2_ref, b2_ref,
                       w3_ref, b3_ref, o_ref,
                       top_buf, bot_buf, sem, pad_ref):
    # x_ref: (1, TH, W, Cin)  (channels lane-padded);  x_hbm_ref: full x in HBM
    _, TH, W, Cin = x_ref.shape
    Pm = w1_ref.shape[1]
    Cout = w3_ref.shape[1]
    H = x_hbm_ref.shape[1]

    n = pl.program_id(0)
    r = pl.program_id(1)
    nrows = pl.num_programs(1)

    # ---- kick off the two conv2 halo-row DMAs (clamped, masked later) ----
    row0 = r * TH
    top_row = jnp.maximum(row0 - 1, 0)
    bot_row = jnp.minimum(row0 + TH, H - 1)
    top_cp = pltpu.make_async_copy(x_hbm_ref.at[n, top_row], top_buf, sem.at[0])
    bot_cp = pltpu.make_async_copy(x_hbm_ref.at[n, bot_row], bot_buf, sem.at[1])
    top_cp.start()
    bot_cp.start()

    # ---- conv1 (1x1, BN folded into w1) + ReLU on the main row block -----
    x2d = x_ref[0].reshape(TH * W, Cin)                           # f32
    y1 = jnp.dot(x2d.astype(jnp.bfloat16), w1_ref[...],
                 preferred_element_type=jnp.float32)
    y1 = jnp.maximum(y1 + b1_ref[...], 0.0)                       # (TH*W, Pm)

    # Stage into the zero-padded conv2 input (bf16 scratch).  Only the two
    # zero halo columns are (re)written explicitly; every other element is
    # fully overwritten each grid step, so no whole-buffer zeroing is needed.
    pad_ref[:, 0:1, :] = jnp.zeros((TH + 2, 1, Pm), jnp.bfloat16)
    pad_ref[:, W + 1:W + 2, :] = jnp.zeros((TH + 2, 1, Pm), jnp.bfloat16)
    pad_ref[1:TH + 1, 1:W + 1, :] = y1.reshape(TH, W, Pm).astype(jnp.bfloat16)

    # ---- conv1 + ReLU on the two halo rows (zeroed outside the image) ----
    top_cp.wait()
    bot_cp.wait()
    halo = jnp.concatenate([top_buf[...], bot_buf[...]], axis=0)  # (2W, Cin)
    y1h = jnp.dot(halo.astype(jnp.bfloat16), w1_ref[...],
                  preferred_element_type=jnp.float32)
    y1h = jnp.maximum(y1h + b1_ref[...], 0.0)
    top_valid = (r > 0).astype(jnp.float32)
    bot_valid = (r < nrows - 1).astype(jnp.float32)
    pad_ref[0:1, 1:W + 1, :] = (
        (y1h[:W] * top_valid).astype(jnp.bfloat16).reshape(1, W, Pm))
    pad_ref[TH + 1:TH + 2, 1:W + 1, :] = (
        (y1h[W:] * bot_valid).astype(jnp.bfloat16).reshape(1, W, Pm))

    # ---- conv2 (3x3, BN folded) + ReLU as ONE im2col matmul ---------------
    cols = [pad_ref[dy:dy + TH, dx:dx + W, :].reshape(TH * W, Pm)
            for dy in range(3) for dx in range(3)]
    im2col = jnp.concatenate(cols, axis=-1)                       # (TH*W, 9*Pm)
    y2 = jnp.dot(im2col, w2_ref[...], preferred_element_type=jnp.float32)
    y2 = jnp.maximum(y2 + b2_ref[...], 0.0)                       # (TH*W, Pm)

    # ---- conv3 (1x1, BN folded) + identity residual (no_relu=True) --------
    y3 = jnp.dot(y2.astype(jnp.bfloat16), w3_ref[...],
                 preferred_element_type=jnp.float32) + b3_ref[...]
    o_ref[0] = (y3 + x2d).reshape(TH, W, Cout)


def bottleneck_pallas(x_nhwc, w1, b1, w2, b2, w3, b3, *, block_rows=8):
    """Fused Bottleneck forward (stride=1, downsample=None, no_relu=True).

    x_nhwc: (N, H, W, Cin) float32; returns (N, H, W, Cin) float32.
    Weights/biases come from `prepare_bottleneck_params`.
    """
    N, H, W, Cin = x_nhwc.shape
    Cin_p, Pm = w1.shape
    Cout_p = w3.shape[1]
    assert Cin_p == Cout_p == _round_up(Cin, LANE), \
        "identity residual requires Cout == Cin (downsample=None)"

    # lane-dense channel padding (no-op when Cin is already a multiple of 128)
    x = _pad_axis(x_nhwc.astype(jnp.float32), 3, Cin_p)

    TH = block_rows if (H % block_rows == 0) else H
    R = H // TH

    out = pl.pallas_call(
        _bottleneck_kernel,
        out_shape=jax.ShapeDtypeStruct((N, H, W, Cout_p), jnp.float32),
        grid_spec=pltpu.PrefetchScalarGridSpec(
            num_scalar_prefetch=0,
            grid=(N, R),
            in_specs=[
                pl.BlockSpec((1, TH, W, Cin_p), lambda n, r: (n, r, 0, 0)),
                pl.BlockSpec(memory_space=pl.ANY),     # same x, for halo rows
                pl.BlockSpec(w1.shape, lambda n, r: (0, 0)),
                pl.BlockSpec(b1.shape, lambda n, r: (0, 0)),
                pl.BlockSpec(w2.shape, lambda n, r: (0, 0)),
                pl.BlockSpec(b2.shape, lambda n, r: (0, 0)),
                pl.BlockSpec(w3.shape, lambda n, r: (0, 0)),
                pl.BlockSpec(b3.shape, lambda n, r: (0, 0)),
            ],
            out_specs=pl.BlockSpec((1, TH, W, Cout_p), lambda n, r: (n, r, 0, 0)),
            scratch_shapes=[
                pltpu.VMEM((W, Cin_p), jnp.float32),             # top halo row
                pltpu.VMEM((W, Cin_p), jnp.float32),             # bottom halo row
                pltpu.SemaphoreType.DMA((2,)),
                pltpu.VMEM((TH + 2, W + 2, Pm), jnp.bfloat16),   # conv2 padded input
            ],
        ),
        compiler_params=pltpu.CompilerParams(
            dimension_semantics=("parallel", "arbitrary"),
            vmem_limit_bytes=32 * 1024 * 1024,
        ),
    )(x, x, w1, b1, w2, b2, w3, b3)

    return out[..., :Cin]                 # strip channel padding, stay NHWC


# ------------------------- pure-JAX f32 reference ------------------------
def bottleneck_reference(x, w1_pt, bn1, w2_pt, bn2, w3_pt, bn3, eps=1e-5):
    dn = ('NCHW', 'OIHW', 'NCHW')

    def bn(v, p):
        gamma, beta, mean, var = p
        inv = gamma / jnp.sqrt(var + eps)
        return v * inv[None, :, None, None] + (beta - mean * inv)[None, :, None, None]

    y = lax.conv_general_dilated(x, w1_pt, (1, 1), 'VALID', dimension_numbers=dn)
    y = jnp.maximum(bn(y, bn1), 0.0)
    y = lax.conv_general_dilated(y, w2_pt, (1, 1), ((1, 1), (1, 1)), dimension_numbers=dn)
    y = jnp.maximum(bn(y, bn2), 0.0)
    y = lax.conv_general_dilated(y, w3_pt, (1, 1), 'VALID', dimension_numbers=dn)
    y = bn(y, bn3)
    return y + x                                   # no_relu=True


if __name__ == "__main__":
    key = jax.random.PRNGKey(0)
    N, inplanes, planes, H, W = 2, 8, 4, 16, 16    # expansion=2 -> Cout=8=Cin
    expansion = 2

    keys = jax.random.split(key, 16)
    x_nchw = jax.random.normal(keys[0], (N, inplanes, H, W), jnp.float32)

    w1_pt = 0.1 * jax.random.normal(keys[1], (planes, inplanes, 1, 1), jnp.float32)
    w2_pt = 0.1 * jax.random.normal(keys[2], (planes, planes, 3, 3), jnp.float32)
    w3_pt = 0.1 * jax.random.normal(keys[3], (planes * expansion, planes, 1, 1),
                                    jnp.float32)

    def bn_params(kg, kb, km, kv, c):
        gamma = 1.0 + 0.1 * jax.random.normal(kg, (c,), jnp.float32)
        beta = 0.1 * jax.random.normal(kb, (c,), jnp.float32)
        mean = 0.1 * jax.random.normal(km, (c,), jnp.float32)
        var = jnp.abs(jax.random.normal(kv, (c,), jnp.float32)) + 0.5
        return gamma, beta, mean, var

    bn1 = bn_params(keys[4], keys[5], keys[6], keys[7], planes)
    bn2 = bn_params(keys[8], keys[9], keys[10], keys[11], planes)
    bn3 = bn_params(keys[12], keys[13], keys[14], keys[15], planes * expansion)

    params = prepare_bottleneck_params(w1_pt, bn1, w2_pt, bn2, w3_pt, bn3)

    # The kernel is NHWC end-to-end; NCHW<->NHWC only at this test boundary.
    x_nhwc = jnp.transpose(x_nchw, (0, 2, 3, 1))
    out_nhwc = bottleneck_pallas(x_nhwc, *params, block_rows=8)
    out_nhwc = jax.block_until_ready(out_nhwc)
    out = jnp.transpose(out_nhwc, (0, 3, 1, 2))

    ref = bottleneck_reference(x_nchw, w1_pt, bn1, w2_pt, bn2, w3_pt, bn3)

    assert out.shape == ref.shape == (N, inplanes, H, W)
    max_err = float(jnp.max(jnp.abs(out - ref)))
    # bf16 matmul operands vs f32 reference -> tolerance accounts for bf16 rounding
    if not jnp.allclose(out, ref, atol=5e-2, rtol=5e-2):
        raise AssertionError(f"Pallas output mismatch, max abs err = {max_err}")

    print("KERNEL_OK")
</pallas_src>

<mosaic_0001>
module attributes {stable_mosaic.version = 11 : i64} {
  func.func @_bottleneck_kernel(%arg0: i32, %arg1: i32, %arg2: memref<1x8x16x128xf32, #tpu.memory_space<vmem>>, %arg3: memref<2x16x16x128xf32, #tpu.memory_space<any>>, %arg4: memref<128x128xbf16, #tpu.memory_space<vmem>>, %arg5: memref<1x128xf32, #tpu.memory_space<vmem>>, %arg6: memref<1152x128xbf16, #tpu.memory_space<vmem>>, %arg7: memref<1x128xf32, #tpu.memory_space<vmem>>, %arg8: memref<128x128xbf16, #tpu.memory_space<vmem>>, %arg9: memref<1x128xf32, #tpu.memory_space<vmem>>, %arg10: memref<1x8x16x128xf32, #tpu.memory_space<vmem>>, %arg11: memref<16x128xf32, #tpu.memory_space<vmem>>, %arg12: memref<16x128xf32, #tpu.memory_space<vmem>>, %arg13: memref<2x!tpu.dma_semaphore, #tpu.memory_space<semaphore_mem>>, %arg14: memref<10x18x128xbf16, #tpu.memory_space<vmem>>) attributes {dimension_semantics = [#tpu.dimension_semantics<parallel>, #tpu.dimension_semantics<arbitrary>], iteration_bounds = array<i64: 2, 2>, scalar_prefetch = 0 : i64, scratch_operands = 4 : i64, tpu.core_type = #tpu.core_type<tc>, window_params = [{transform_indices = @transform_0, window_bounds = array<i64: 1, 8, 16, 128>}, {}, {pipeline_mode = #tpu.pipeline_mode<synchronous>, transform_indices = @transform_2, window_bounds = array<i64: 128, 128>}, {pipeline_mode = #tpu.pipeline_mode<synchronous>, transform_indices = @transform_3, window_bounds = array<i64: 1, 128>}, {pipeline_mode = #tpu.pipeline_mode<synchronous>, transform_indices = @transform_4, window_bounds = array<i64: 1152, 128>}, {pipeline_mode = #tpu.pipeline_mode<synchronous>, transform_indices = @transform_5, window_bounds = array<i64: 1, 128>}, {pipeline_mode = #tpu.pipeline_mode<synchronous>, transform_indices = @transform_6, window_bounds = array<i64: 128, 128>}, {pipeline_mode = #tpu.pipeline_mode<synchronous>, transform_indices = @transform_7, window_bounds = array<i64: 1, 128>}, {transform_indices = @transform_8, window_bounds = array<i64: 1, 8, 16, 128>}]} {
    %c8_i32 = arith.constant 8 : i32
    %0 = arith.muli %arg1, %c8_i32 : i32
    %c1_i32 = arith.constant 1 : i32
    %1 = arith.subi %0, %c1_i32 : i32
    %c0_i32 = arith.constant 0 : i32
    %2 = arith.maxsi %1, %c0_i32 : i32
    %c8_i32_0 = arith.constant 8 : i32
    %3 = arith.addi %0, %c8_i32_0 : i32
    %c15_i32 = arith.constant 15 : i32
    %4 = arith.minsi %3, %c15_i32 : i32
    %c0_i32_1 = arith.constant 0 : i32
    %c0_i32_2 = arith.constant 0 : i32
    %c0_i32_3 = arith.constant 0 : i32
    %5 = tpu.memref_slice %arg3[%arg0, %2, %c0_i32_2, %c0_i32_3] : memref<2x16x16x128xf32, #tpu.memory_space<any>> -> memref<1x1x16x128xf32, #tpu.memory_space<any>>
    %6 = tpu.memref_squeeze %5 : memref<1x1x16x128xf32, #tpu.memory_space<any>> -> memref<16x128xf32, #tpu.memory_space<any>>
    %7 = tpu.memref_slice %arg13[%c0_i32_1] : memref<2x!tpu.dma_semaphore, #tpu.memory_space<semaphore_mem>> -> memref<1x!tpu.dma_semaphore, #tpu.memory_space<semaphore_mem>>
    %8 = tpu.memref_squeeze %7 : memref<1x!tpu.dma_semaphore, #tpu.memory_space<semaphore_mem>> -> memref<!tpu.dma_semaphore, #tpu.memory_space<semaphore_mem>>
    tpu.enqueue_dma source(%6 : memref<16x128xf32, #tpu.memory_space<any>>) target(%arg11 : memref<16x128xf32, #tpu.memory_space<vmem>>) target_semaphore(%8 : memref<!tpu.dma_semaphore, #tpu.memory_space<semaphore_mem>>)
    %c1_i32_4 = arith.constant 1 : i32
    %c0_i32_5 = arith.constant 0 : i32
    %c0_i32_6 = arith.constant 0 : i32
    %9 = tpu.memref_slice %arg3[%arg0, %4, %c0_i32_5, %c0_i32_6] : memref<2x16x16x128xf32, #tpu.memory_space<any>> -> memref<1x1x16x128xf32, #tpu.memory_space<any>>
    %10 = tpu.memref_squeeze %9 : memref<1x1x16x128xf32, #tpu.memory_space<any>> -> memref<16x128xf32, #tpu.memory_space<any>>
    %11 = tpu.memref_slice %arg13[%c1_i32_4] : memref<2x!tpu.dma_semaphore, #tpu.memory_space<semaphore_mem>> -> memref<1x!tpu.dma_semaphore, #tpu.memory_space<semaphore_mem>>
    %12 = tpu.memref_squeeze %11 : memref<1x!tpu.dma_semaphore, #tpu.memory_space<semaphore_mem>> -> memref<!tpu.dma_semaphore, #tpu.memory_space<semaphore_mem>>
    tpu.enqueue_dma source(%10 : memref<16x128xf32, #tpu.memory_space<any>>) target(%arg12 : memref<16x128xf32, #tpu.memory_space<vmem>>) target_semaphore(%12 : memref<!tpu.dma_semaphore, #tpu.memory_space<semaphore_mem>>)
    %c0 = arith.constant 0 : index
    %c0_7 = arith.constant 0 : index
    %c0_8 = arith.constant 0 : index
    %c0_9 = arith.constant 0 : index
    %13 = vector.load %arg2[%c0, %c0_7, %c0_8, %c0_9] : memref<1x8x16x128xf32, #tpu.memory_space<vmem>>, vector<1x8x16x128xf32>
    %14 = vector.shape_cast %13 : vector<1x8x16x128xf32> to vector<8x16x128xf32>
    %15 = vector.shape_cast %14 : vector<8x16x128xf32> to vector<128x128xf32>
    %16 = arith.truncf %15 : vector<128x128xf32> to vector<128x128xbf16>
    %c0_10 = arith.constant 0 : index
    %c0_11 = arith.constant 0 : index
    %17 = vector.load %arg4[%c0_10, %c0_11] : memref<128x128xbf16, #tpu.memory_space<vmem>>, vector<128x128xbf16>
    %cst = arith.constant dense<0.000000e+00> : vector<128x128xf32>
    %18 = tpu.matmul %16, %17, %cst {dimension_numbers = #tpu.dot_dimension_numbers<[1], [0], [0], [1], [0, 0, 1, 1], [], []>} : vector<128x128xbf16>, vector<128x128xbf16>, vector<128x128xf32> -> vector<128x128xf32>
    %c0_12 = arith.constant 0 : index
    %c0_13 = arith.constant 0 : index
    %19 = vector.load %arg5[%c0_12, %c0_13] : memref<1x128xf32, #tpu.memory_space<vmem>>, vector<1x128xf32>
    %20 = vector.broadcast %19 : vector<1x128xf32> to vector<128x128xf32>
    %21 = arith.addf %18, %20 : vector<128x128xf32>
    %cst_14 = arith.constant 0.000000e+00 : f32
    %22 = vector.broadcast %cst_14 : f32 to vector<128x128xf32>
    %23 = arith.maximumf %21, %22 : vector<128x128xf32>
    %cst_15 = arith.constant 0.000000e+00 : bf16
    %24 = vector.broadcast %cst_15 : bf16 to vector<10x1x128xbf16>
    %c0_16 = arith.constant 0 : index
    %c0_17 = arith.constant 0 : index
    %c0_18 = arith.constant 0 : index
    %25 = vector.load %arg14[%c0_16, %c0_17, %c0_18] : memref<10x18x128xbf16, #tpu.memory_space<vmem>>, vector<10x1x128xbf16>
    tpu.vector_store %arg14[%c0_16, %c0_17, %c0_18], %24 {strides = array<i32>} : memref<10x18x128xbf16, #tpu.memory_space<vmem>>, vector<10x1x128xbf16>,
    %cst_19 = arith.constant 0.000000e+00 : bf16
    %26 = vector.broadcast %cst_19 : bf16 to vector<10x1x128xbf16>
    %c0_20 = arith.constant 0 : index
    %c17 = arith.constant 17 : index
    %c0_21 = arith.constant 0 : index
    %27 = vector.load %arg14[%c0_20, %c17, %c0_21] : memref<10x18x128xbf16, #tpu.memory_space<vmem>>, vector<10x1x128xbf16>
    tpu.vector_store %arg14[%c0_20, %c17, %c0_21], %26 {strides = array<i32>} : memref<10x18x128xbf16, #tpu.memory_space<vmem>>, vector<10x1x128xbf16>,
    %28 = vector.shape_cast %23 : vector<128x128xf32> to vector<8x16x128xf32>
    %29 = arith.truncf %28 : vector<8x16x128xf32> to vector<8x16x128xbf16>
    %c1 = arith.constant 1 : index
    %c1_22 = arith.constant 1 : index
    %c0_23 = arith.constant 0 : index
    %30 = vector.load %arg14[%c1, %c1_22, %c0_23] : memref<10x18x128xbf16, #tpu.memory_space<vmem>>, vector<8x16x128xbf16>
    tpu.vector_store %arg14[%c1, %c1_22, %c0_23], %29 {strides = array<i32>} : memref<10x18x128xbf16, #tpu.memory_space<vmem>>, vector<8x16x128xbf16>,
    %c0_i32_24 = arith.constant 0 : i32
    %c0_i32_25 = arith.constant 0 : i32
    %c0_i32_26 = arith.constant 0 : i32
    %31 = tpu.memref_slice %arg3[%arg0, %2, %c0_i32_25, %c0_i32_26] : memref<2x16x16x128xf32, #tpu.memory_space<any>> -> memref<1x1x16x128xf32, #tpu.memory_space<any>>
    %32 = tpu.memref_squeeze %31 : memref<1x1x16x128xf32, #tpu.memory_space<any>> -> memref<16x128xf32, #tpu.memory_space<any>>
    %33 = tpu.memref_slice %arg13[%c0_i32_24] : memref<2x!tpu.dma_semaphore, #tpu.memory_space<semaphore_mem>> -> memref<1x!tpu.dma_semaphore, #tpu.memory_space<semaphore_mem>>
    %34 = tpu.memref_squeeze %33 : memref<1x!tpu.dma_semaphore, #tpu.memory_space<semaphore_mem>> -> memref<!tpu.dma_semaphore, #tpu.memory_space<semaphore_mem>>
    tpu.wait_dma2 semaphore(%34 : memref<!tpu.dma_semaphore, #tpu.memory_space<semaphore_mem>>) src(%32 : memref<16x128xf32, #tpu.memory_space<any>>) dst(%arg11 : memref<16x128xf32, #tpu.memory_space<vmem>>)
    %c1_i32_27 = arith.constant 1 : i32
    %c0_i32_28 = arith.constant 0 : i32
    %c0_i32_29 = arith.constant 0 : i32
    %35 = tpu.memref_slice %arg3[%arg0, %4, %c0_i32_28, %c0_i32_29] : memref<2x16x16x128xf32, #tpu.memory_space<any>> -> memref<1x1x16x128xf32, #tpu.memory_space<any>>
    %36 = tpu.memref_squeeze %35 : memref<1x1x16x128xf32, #tpu.memory_space<any>> -> memref<16x128xf32, #tpu.memory_space<any>>
    %37 = tpu.memref_slice %arg13[%c1_i32_27] : memref<2x!tpu.dma_semaphore, #tpu.memory_space<semaphore_mem>> -> memref<1x!tpu.dma_semaphore, #tpu.memory_space<semaphore_mem>>
    %38 = tpu.memref_squeeze %37 : memref<1x!tpu.dma_semaphore, #tpu.memory_space<semaphore_mem>> -> memref<!tpu.dma_semaphore, #tpu.memory_space<semaphore_mem>>
    tpu.wait_dma2 semaphore(%38 : memref<!tpu.dma_semaphore, #tpu.memory_space<semaphore_mem>>) src(%36 : memref<16x128xf32, #tpu.memory_space<any>>) dst(%arg12 : memref<16x128xf32, #tpu.memory_space<vmem>>)
    %c0_30 = arith.constant 0 : index
    %c0_31 = arith.constant 0 : index
    %39 = vector.load %arg11[%c0_30, %c0_31] : memref<16x128xf32, #tpu.memory_space<vmem>>, vector<16x128xf32>
    %c0_32 = arith.constant 0 : index
    %c0_33 = arith.constant 0 : index
    %40 = vector.load %arg12[%c0_32, %c0_33] : memref<16x128xf32, #tpu.memory_space<vmem>>, vector<16x128xf32>
    %41 = tpu.concatenate %39, %40 in 0 : vector<16x128xf32>, vector<16x128xf32> -> vector<32x128xf32>
    %42 = arith.truncf %41 : vector<32x128xf32> to vector<32x128xbf16>
    %c0_34 = arith.constant 0 : index
    %c0_35 = arith.constant 0 : index
    %43 = vector.load %arg4[%c0_34, %c0_35] : memref<128x128xbf16, #tpu.memory_space<vmem>>, vector<128x128xbf16>
    %cst_36 = arith.constant dense<0.000000e+00> : vector<32x128xf32>
    %44 = tpu.matmul %42, %43, %cst_36 {dimension_numbers = #tpu.dot_dimension_numbers<[1], [0], [0], [1], [0, 0, 1, 1], [], []>} : vector<32x128xbf16>, vector<128x128xbf16>, vector<32x128xf32> -> vector<32x128xf32>
    %c0_37 = arith.constant 0 : index
    %c0_38 = arith.constant 0 : index
    %45 = vector.load %arg5[%c0_37, %c0_38] : memref<1x128xf32, #tpu.memory_space<vmem>>, vector<1x128xf32>
    %46 = vector.broadcast %45 : vector<1x128xf32> to vector<32x128xf32>
    %47 = arith.addf %44, %46 : vector<32x128xf32>
    %cst_39 = arith.constant 0.000000e+00 : f32
    %48 = vector.broadcast %cst_39 : f32 to vector<32x128xf32>
    %49 = arith.maximumf %47, %48 : vector<32x128xf32>
    %c0_i32_40 = arith.constant 0 : i32
    %50 = arith.cmpi sgt, %arg1, %c0_i32_40 : i32
    %51 = arith.extui %50 : i1 to i32
    %52 = arith.sitofp %51 : i32 to f32
    %c1_i32_41 = arith.constant 1 : i32
    %53 = arith.cmpi slt, %arg1, %c1_i32_41 : i32
    %54 = arith.extui %53 : i1 to i32
    %55 = arith.sitofp %54 : i32 to f32
    %56 = vector.extract_strided_slice %49 {offsets = [0, 0], sizes = [16, 128], strides = [1, 1]} : vector<32x128xf32> to vector<16x128xf32>
    %57 = vector.broadcast %52 : f32 to vector<16x128xf32>
    %58 = arith.mulf %56, %57 : vector<16x128xf32>
    %59 = arith.truncf %58 : vector<16x128xf32> to vector<16x128xbf16>
    %60 = vector.shape_cast %59 : vector<16x128xbf16> to vector<1x16x128xbf16>
    %c0_42 = arith.constant 0 : index
    %c1_43 = arith.constant 1 : index
    %c0_44 = arith.constant 0 : index
    %61 = vector.load %arg14[%c0_42, %c1_43, %c0_44] : memref<10x18x128xbf16, #tpu.memory_space<vmem>>, vector<1x16x128xbf16>
    tpu.vector_store %arg14[%c0_42, %c1_43, %c0_44], %60 {strides = array<i32>} : memref<10x18x128xbf16, #tpu.memory_space<vmem>>, vector<1x16x128xbf16>,
    %62 = vector.extract_strided_slice %49 {offsets = [16, 0], sizes = [16, 128], strides = [1, 1]} : vector<32x128xf32> to vector<16x128xf32>
    %63 = vector.broadcast %55 : f32 to vector<16x128xf32>
    %64 = arith.mulf %62, %63 : vector<16x128xf32>
    %65 = arith.truncf %64 : vector<16x128xf32> to vector<16x128xbf16>
    %66 = vector.shape_cast %65 : vector<16x128xbf16> to vector<1x16x128xbf16>
    %c9 = arith.constant 9 : index
    %c1_45 = arith.constant 1 : index
    %c0_46 = arith.constant 0 : index
    %67 = vector.load %arg14[%c9, %c1_45, %c0_46] : memref<10x18x128xbf16, #tpu.memory_space<vmem>>, vector<1x16x128xbf16>
    tpu.vector_store %arg14[%c9, %c1_45, %c0_46], %66 {strides = array<i32>} : memref<10x18x128xbf16, #tpu.memory_space<vmem>>, vector<1x16x128xbf16>,
    %c0_47 = arith.constant 0 : index
    %c0_48 = arith.constant 0 : index
    %c0_49 = arith.constant 0 : index
    %68 = vector.load %arg14[%c0_47, %c0_48, %c0_49] : memref<10x18x128xbf16, #tpu.memory_space<vmem>>, vector<8x16x128xbf16>
    %69 = vector.shape_cast %68 : vector<8x16x128xbf16> to vector<128x128xbf16>
    %c0_50 = arith.constant 0 : index
    %c1_51 = arith.constant 1 : index
    %c0_52 = arith.constant 0 : index
    %70 = vector.load %arg14[%c0_50, %c1_51, %c0_52] : memref<10x18x128xbf16, #tpu.memory_space<vmem>>, vector<8x16x128xbf16>
    %71 = vector.shape_cast %70 : vector<8x16x128xbf16> to vector<128x128xbf16>
    %c0_53 = arith.constant 0 : index
    %c2 = arith.constant 2 : index
    %c0_54 = arith.constant 0 : index
    %72 = vector.load %arg14[%c0_53, %c2, %c0_54] : memref<10x18x128xbf16, #tpu.memory_space<vmem>>, vector<8x16x128xbf16>
    %73 = vector.shape_cast %72 : vector<8x16x128xbf16> to vector<128x128xbf16>
    %c1_55 = arith.constant 1 : index
    %c0_56 = arith.constant 0 : index
    %c0_57 = arith.constant 0 : index
    %74 = vector.load %arg14[%c1_55, %c0_56, %c0_57] : memref<10x18x128xbf16, #tpu.memory_space<vmem>>, vector<8x16x128xbf16>
    %75 = vector.shape_cast %74 : vector<8x16x128xbf16> to vector<128x128xbf16>
    %c1_58 = arith.constant 1 : index
    %c1_59 = arith.constant 1 : index
    %c0_60 = arith.constant 0 : index
    %76 = vector.load %arg14[%c1_58, %c1_59, %c0_60] : memref<10x18x128xbf16, #tpu.memory_space<vmem>>, vector<8x16x128xbf16>
    %77 = vector.shape_cast %76 : vector<8x16x128xbf16> to vector<128x128xbf16>
    %c1_61 = arith.constant 1 : index
    %c2_62 = arith.constant 2 : index
    %c0_63 = arith.constant 0 : index
    %78 = vector.load %arg14[%c1_61, %c2_62, %c0_63] : memref<10x18x128xbf16, #tpu.memory_space<vmem>>, vector<8x16x128xbf16>
    %79 = vector.shape_cast %78 : vector<8x16x128xbf16> to vector<128x128xbf16>
    %c2_64 = arith.constant 2 : index
    %c0_65 = arith.constant 0 : index
    %c0_66 = arith.constant 0 : index
    %80 = vector.load %arg14[%c2_64, %c0_65, %c0_66] : memref<10x18x128xbf16, #tpu.memory_space<vmem>>, vector<8x16x128xbf16>
    %81 = vector.shape_cast %80 : vector<8x16x128xbf16> to vector<128x128xbf16>
    %c2_67 = arith.constant 2 : index
    %c1_68 = arith.constant 1 : index
    %c0_69 = arith.constant 0 : index
    %82 = vector.load %arg14[%c2_67, %c1_68, %c0_69] : memref<10x18x128xbf16, #tpu.memory_space<vmem>>, vector<8x16x128xbf16>
    %83 = vector.shape_cast %82 : vector<8x16x128xbf16> to vector<128x128xbf16>
    %c2_70 = arith.constant 2 : index
    %c2_71 = arith.constant 2 : index
    %c0_72 = arith.constant 0 : index
    %84 = vector.load %arg14[%c2_70, %c2_71, %c0_72] : memref<10x18x128xbf16, #tpu.memory_space<vmem>>, vector<8x16x128xbf16>
    %85 = vector.shape_cast %84 : vector<8x16x128xbf16> to vector<128x128xbf16>
    %86 = tpu.concatenate %69, %71, %73, %75, %77, %79, %81, %83, %85 in 1 : vector<128x128xbf16>, vector<128x128xbf16>, vector<128x128xbf16>, vector<128x128xbf16>, vector<128x128xbf16>, vector<128x128xbf16>, vector<128x128xbf16>, vector<128x128xbf16>, vector<128x128xbf16> -> vector<128x1152xbf16>
    %c0_73 = arith.constant 0 : index
    %c0_74 = arith.constant 0 : index
    %87 = vector.load %arg6[%c0_73, %c0_74] : memref<1152x128xbf16, #tpu.memory_space<vmem>>, vector<1152x128xbf16>
    %cst_75 = arith.constant dense<0.000000e+00> : vector<128x128xf32>
    %88 = tpu.matmul %86, %87, %cst_75 {dimension_numbers = #tpu.dot_dimension_numbers<[1], [0], [0], [1], [0, 0, 1, 1], [], []>} : vector<128x1152xbf16>, vector<1152x128xbf16>, vector<128x128xf32> -> vector<128x128xf32>
    %c0_76 = arith.constant 0 : index
    %c0_77 = arith.constant 0 : index
    %89 = vector.load %arg7[%c0_76, %c0_77] : memref<1x128xf32, #tpu.memory_space<vmem>>, vector<1x128xf32>
    %90 = vector.broadcast %89 : vector<1x128xf32> to vector<128x128xf32>
    %91 = arith.addf %88, %90 : vector<128x128xf32>
    %cst_78 = arith.constant 0.000000e+00 : f32
    %92 = vector.broadcast %cst_78 : f32 to vector<128x128xf32>
    %93 = arith.maximumf %91, %92 : vector<128x128xf32>
    %94 = arith.truncf %93 : vector<128x128xf32> to vector<128x128xbf16>
    %c0_79 = arith.constant 0 : index
    %c0_80 = arith.constant 0 : index
    %95 = vector.load %arg8[%c0_79, %c0_80] : memref<128x128xbf16, #tpu.memory_space<vmem>>, vector<128x128xbf16>
    %cst_81 = arith.constant dense<0.000000e+00> : vector<128x128xf32>
    %96 = tpu.matmul %94, %95, %cst_81 {dimension_numbers = #tpu.dot_dimension_numbers<[1], [0], [0], [1], [0, 0, 1, 1], [], []>} : vector<128x128xbf16>, vector<128x128xbf16>, vector<128x128xf32> -> vector<128x128xf32>
    %c0_82 = arith.constant 0 : index
    %c0_83 = arith.constant 0 : index
    %97 = vector.load %arg9[%c0_82, %c0_83] : memref<1x128xf32, #tpu.memory_space<vmem>>, vector<1x128xf32>
    %98 = vector.broadcast %97 : vector<1x128xf32> to vector<128x128xf32>
    %99 = arith.addf %96, %98 : vector<128x128xf32>
    %100 = arith.addf %99, %15 : vector<128x128xf32>
    %101 = vector.shape_cast %100 : vector<128x128xf32> to vector<8x16x128xf32>
    %c0_84 = arith.constant 0 : index
    %c0_85 = arith.constant 0 : index
    %c0_86 = arith.constant 0 : index
    %c0_87 = arith.constant 0 : index
    %102 = vector.load %arg10[%c0_84, %c0_85, %c0_86, %c0_87] : memref<1x8x16x128xf32, #tpu.memory_space<vmem>>, vector<1x8x16x128xf32>
    %103 = vector.shape_cast %102 : vector<1x8x16x128xf32> to vector<8x16x128xf32>
    %104 = vector.shape_cast %101 : vector<8x16x128xf32> to vector<1x8x16x128xf32>
    tpu.vector_store %arg10[%c0_84, %c0_85, %c0_86, %c0_87], %104 {strides = array<i32>} : memref<1x8x16x128xf32, #tpu.memory_space<vmem>>, vector<1x8x16x128xf32>,
    return
  }
  func.func @transform_0(%arg0: i32, %arg1: i32) -> (i32, i32, i32, i32) {
    %c0_i32 = arith.constant 0 : i32
    %c0_i32_0 = arith.constant 0 : i32
    %c0_i32_1 = arith.constant 0 : i32
    return %arg0, %arg1, %c0_i32, %c0_i32_0 : i32, i32, i32, i32
  }
  func.func @transform_2(%arg0: i32, %arg1: i32) -> (i32, i32) {
    %c0_i32 = arith.constant 0 : i32
    %c0_i32_0 = arith.constant 0 : i32
    %c0_i32_1 = arith.constant 0 : i32
    return %c0_i32, %c0_i32_0 : i32, i32
  }
  func.func @transform_3(%arg0: i32, %arg1: i32) -> (i32, i32) {
    %c0_i32 = arith.constant 0 : i32
    %c0_i32_0 = arith.constant 0 : i32
    %c0_i32_1 = arith.constant 0 : i32
    return %c0_i32, %c0_i32_0 : i32, i32
  }
  func.func @transform_4(%arg0: i32, %arg1: i32) -> (i32, i32) {
    %c0_i32 = arith.constant 0 : i32
    %c0_i32_0 = arith.constant 0 : i32
    %c0_i32_1 = arith.constant 0 : i32
    return %c0_i32, %c0_i32_0 : i32, i32
  }
  func.func @transform_5(%arg0: i32, %arg1: i32) -> (i32, i32) {
    %c0_i32 = arith.constant 0 : i32
    %c0_i32_0 = arith.constant 0 : i32
    %c0_i32_1 = arith.constant 0 : i32
    return %c0_i32, %c0_i32_0 : i32, i32
  }
  func.func @transform_6(%arg0: i32, %arg1: i32) -> (i32, i32) {
    %c0_i32 = arith.constant 0 : i32
    %c0_i32_0 = arith.constant 0 : i32
    %c0_i32_1 = arith.constant 0 : i32
    return %c0_i32, %c0_i32_0 : i32, i32
  }
  func.func @transform_7(%arg0: i32, %arg1: i32) -> (i32, i32) {
    %c0_i32 = arith.constant 0 : i32
    %c0_i32_0 = arith.constant 0 : i32
    %c0_i32_1 = arith.constant 0 : i32
    return %c0_i32, %c0_i32_0 : i32, i32
  }
  func.func @transform_8(%arg0: i32, %arg1: i32) -> (i32, i32, i32, i32) {
    %c0_i32 = arith.constant 0 : i32
    %c0_i32_0 = arith.constant 0 : i32
    %c0_i32_1 = arith.constant 0 : i32
    return %arg0, %arg1, %c0_i32, %c0_i32_0 : i32, i32, i32, i32
  }
}

</mosaic_0001>

<llo_original>
// kernel: tpu_custom_call.1
$region0: #{tpu_custom_call.1}
  #allocation0 [shape = 'u32[]', space=smem, size = 0x4, offset = 0x4, fixed_abs, tag = 'smem constant byte address 0x4 - core index']
  #allocation1 [shape = 'u32[144,128]{1,0:T(1,128)}', space=vmem, size = 0x12000, scoped, tag = 'internal scratch']
  #allocation2 [shape = 'f32[16,128]{1,0:T(8,128)}', space=vmem, size = 0x2000, scoped, tag = 'scratch operand']
  #allocation3 [shape = 'f32[16,128]{1,0:T(8,128)}', space=vmem, size = 0x2000, scoped, tag = 'scratch operand']
  #allocation4 [shape = 's32[2]{0}', space=sflag, size = 0x8, scoped, tag = 'scratch operand']
  #allocation5 [shape = 'bf16[10,18,128]{2,1,0:T(8,128)(2,1)}', space=vmem, size = 0xf000, scoped, tag = 'scratch operand']
  #allocation15 [shape = 's32[]', space=sflag, size = 0x4, offset = 0, fixed_abs, tag = 'sflag constant byte address 0x0 - dummy sync flag']
  #allocation16 [shape = 's32[]', space=sflag, size = 0x4, offset = 0, fixed_abs, tag = 'sflag constant byte address 0x0 - dummy sync flag']
  #allocation17 [shape = 'u32[]', space=smem, size = 0x4, offset = 0x44, fixed_abs, tag = 'smem constant byte address 0x44 - assertion arg 0']
  #allocation18 [shape = 'u32[]', space=smem, size = 0x4, offset = 0x48, fixed_abs, tag = 'smem constant byte address 0x48 - assertion arg 1']
  #allocation19 [shape = 's32[]', space=sflag, size = 0x4, offset = 0, fixed_abs, tag = 'sflag constant byte address 0x0 - dummy sync flag']
  #allocation20 [shape = 's32[]', space=sflag, size = 0x4, offset = 0, fixed_abs, tag = 'sflag constant byte address 0x0 - dummy sync flag']
  %s0 = inlined_call_operand.hbm [shape: f32[2,16,16,128], index: 0, kind: input, shape index: {}]
  %s1 = inlined_call_operand.hbm [shape: f32[2,16,16,128], index: 1, kind: input, shape index: {}]
  %s2 = inlined_call_operand.hbm [shape: bf16[128,128], index: 2, kind: input, shape index: {}]
  %s3 = inlined_call_operand.vmem [shape: f32[1,128], index: 3, kind: input, shape index: {}]
  %s4 = inlined_call_operand.hbm [shape: bf16[1152,128], index: 4, kind: input, shape index: {}]
  %s5 = inlined_call_operand.vmem [shape: f32[1,128], index: 5, kind: input, shape index: {}]
  %s6 = inlined_call_operand.hbm [shape: bf16[128,128], index: 6, kind: input, shape index: {}]
  %s7 = inlined_call_operand.vmem [shape: f32[1,128], index: 7, kind: input, shape index: {}]
  %s8 = inlined_call_operand.hbm [shape: f32[2,16,16,128], index: 8, kind: output, shape index: {}]
  %s9 = sld [smem:[#allocation0]]
  $region85: #{tpu_custom_call.1} parent=0
    _
  %s11 = ssub.s32 1, %s9
  %s12 = scalar_select 0, %s11, %s9
  $region1: #{tpu_custom_call.1} parent=0
    #allocation6 [shape = 'u8[131072]{0}', space=vmem, size = 0x20000, scoped, tag = 'input window, operand 0']
    #allocation7 [shape = 's32[2]{0}', space=sflag, size = 0x8, scoped, tag = 'scoped memory for tpu_custom_call.1']
    #allocation8 [shape = 's32[2]{0}', space=sflag, size = 0x8, scoped, tag = 'scoped memory for tpu_custom_call.1']
    #allocation9 [shape = 'u8[32768]{0}', space=vmem, size = 0x8000, scoped, tag = 'input window, operand 2, single buffered']
    #allocation10 [shape = 's32[1]{0}', space=sflag, size = 0x4, scoped, tag = 'scoped memory for tpu_custom_call.1']
    #allocation11 [shape = 'u8[294912]{0}', space=vmem, size = 0x48000, scoped, tag = 'input window, operand 4, single buffered']
    #allocation12 [shape = 'u8[32768]{0}', space=vmem, size = 0x8000, scoped, tag = 'input window, operand 6, single buffered']
    #allocation13 [shape = 's32[1]{0}', space=sflag, size = 0x4, scoped, tag = 'scoped memory for tpu_custom_call.1']
    #allocation14 [shape = 'u8[131072]{0}', space=vmem, size = 0x20000, scoped, tag = 'output window, operand 0']
    %13 = vsyncpa [#allocation7], 0
    %s14 = scalar_lea.sflag [#allocation7], 1
    %15 = vsyncpa %s14, 0
    %16 = vsyncpa [#allocation10], 0
    %17 = vsyncpa [#allocation13], 0
    %18 = vsyncpa [#allocation8], 0
    %s19 = scalar_lea.sflag [#allocation8], 1
    %20 = vsyncpa %s19, 0
    loop: start=0, step=1, limit=6
    $region2: #{tpu_custom_call.1} parent=1 // loop_pre_header
      _
    $region3: #{tpu_custom_call.1} parent=1 // loop_header
      %s22 = sphi 0, %s26
      %p23 = scmp.ge.s32.totalorder %s22, 6
      %s29 = sphi 0, %s41
      %s30 = sphi 0, %s37
      %s31 = sphi 0, %s29
      %s32 = sphi 0, %s30
      %s33 = sphi 0, %s31
      %s34 = sphi 0, %s32
      %s46 = sphi 0, %s48
      %s49 = sphi 0, %s46
      %s50 = sphi 0, %s49
      %s66 = sphi 0, %s50
      %s70 = sphi 0, %s70
      %s72 = sphi 0, %s70
      %s73 = sphi 0, %s72
      %s87 = sphi 0, %s73
      %s91 = sphi 0, %s91
      %s93 = sphi 0, %s91
      %s94 = sphi 0, %s93
      %s108 = sphi 0, %s94
      %s112 = sphi 0, %s112
      %s114 = sphi 0, %s112
      %s115 = sphi 0, %s114
      %s129 = sphi 0, %s115
      %s133 = sphi 0, %s133
      %s135 = sphi 0, %s133
      %s136 = sphi 0, %s135
      %s150 = sphi 0, %s136
      %s154 = sphi 0, %s154
      %s156 = sphi 0, %s154
      %s157 = sphi 0, %s156
      %s171 = sphi 0, %s157
      %s175 = sphi 0, %s175
      %s177 = sphi 0, %s175
      %s178 = sphi 0, %s177
      %s192 = sphi 0, %s178
      %s200 = sphi 0, %s202
      %s203 = sphi 0, %s200
      %s204 = sphi 0, %s203
      %s220 = sphi 0, %s204
    $region4: #{tpu_custom_call.1} parent=1 // loop_header_branch
      %25 = sbr.rel (%p23) target = $region8
    $region5: #{tpu_custom_call.1} parent=1 // loop_body
      %s27 = ssub.s32 %s22, 1
      %s28 = ssub.s32 %s22, 2
      %s35 = sadd.s32 1, %s30
      %p36 = scmp.ge.s32.totalorder %s35, 2
      %s37 = scalar_select %p36, 0, %s35
      %s38 = sadd.s32 1, %s29
      %s39 = scalar_select %p36, %s38, %s29
      %p40 = scmp.ge.s32.totalorder %s39, 2
      %s41 = scalar_select %p40, 0, %s39
      %s42 = ssub.s32 %s29, %s41
      %s43 = ssub.s32 %s30, %s37
      %s44 = sor.u32 %s42, %s43
      %p45 = scmp.eq.s32.totalorder %s44, 0
      %s47 = sadd.s32 %s46, 1
      %s48 = scalar_select %p45, %s46, %s47
      %p51 = pneg %p45
      %p52 = scmp.eq.s32.totalorder %s22, 3
      %p53 = por %p51, %p52
      %p54 = scmp.ne.s32.totalorder %s46, %s49
      %p55 = scmp.eq.s32.totalorder %s22, 0
      %p56 = por %p54, %p55
      %p57 = scmp.ne.s32.totalorder %s46, %s49
      %p58 = scmp.eq.s32.totalorder %s27, 3
      %p59 = por %p57, %p58
      %p60 = scmp.ne.s32.totalorder %s49, %s50
      %p61 = scmp.eq.s32.totalorder %s27, 0
      %p62 = por %p60, %p61
      %p63 = scmp.ne.s32.totalorder %s49, %s50
      %p64 = scmp.eq.s32.totalorder %s28, 3
      %p65 = por %p63, %p64
      %p67 = scmp.ne.s32.totalorder %s50, %s66
      %p68 = scmp.eq.s32.totalorder %s28, 0
      %p69 = por %p67, %p68
      %s71 = sadd.s32 %s70, 1
      %p74 = scmp.eq.s32.totalorder %s22, 3
      %p75 = scmp.ne.s32.totalorder %s70, %s72
      %p76 = scmp.eq.s32.totalorder %s22, 0
      %p77 = por %p75, %p76
      %p78 = scmp.ne.s32.totalorder %s70, %s72
      %p79 = scmp.eq.s32.totalorder %s27, 3
      %p80 = por %p78, %p79
      %p81 = scmp.ne.s32.totalorder %s72, %s73
      %p82 = scmp.eq.s32.totalorder %s27, 0
      %p83 = por %p81, %p82
      %p84 = scmp.ne.s32.totalorder %s72, %s73
      %p85 = scmp.eq.s32.totalorder %s28, 3
      %p86 = por %p84, %p85
      %p88 = scmp.ne.s32.totalorder %s73, %s87
      %p89 = scmp.eq.s32.totalorder %s28, 0
      %p90 = por %p88, %p89
      %s92 = sadd.s32 %s91, 1
      %p95 = scmp.eq.s32.totalorder %s22, 3
      %p96 = scmp.ne.s32.totalorder %s91, %s93
      %p97 = scmp.eq.s32.totalorder %s22, 0
      %p98 = por %p96, %p97
      %p99 = scmp.ne.s32.totalorder %s91, %s93
      %p100 = scmp.eq.s32.totalorder %s27, 3
      %p101 = por %p99, %p100
      %p102 = scmp.ne.s32.totalorder %s93, %s94
      %p103 = scmp.eq.s32.totalorder %s27, 0
      %p104 = por %p102, %p103
      %p105 = scmp.ne.s32.totalorder %s93, %s94
      %p106 = scmp.eq.s32.totalorder %s28, 3
      %p107 = por %p105, %p106
      %p109 = scmp.ne.s32.totalorder %s94, %s108
      %p110 = scmp.eq.s32.totalorder %s28, 0
      %p111 = por %p109, %p110
      %s113 = sadd.s32 %s112, 1
      %p116 = scmp.eq.s32.totalorder %s22, 3
      %p117 = scmp.ne.s32.totalorder %s112, %s114
      %p118 = scmp.eq.s32.totalorder %s22, 0
      %p119 = por %p117, %p118
      %p120 = scmp.ne.s32.totalorder %s112, %s114
      %p121 = scmp.eq.s32.totalorder %s27, 3
      %p122 = por %p120, %p121
      %p123 = scmp.ne.s32.totalorder %s114, %s115
      %p124 = scmp.eq.s32.totalorder %s27, 0
      %p125 = por %p123, %p124
      %p126 = scmp.ne.s32.totalorder %s114, %s115
      %p127 = scmp.eq.s32.totalorder %s28, 3
      %p128 = por %p126, %p127
      %p130 = scmp.ne.s32.totalorder %s115, %s129
      %p131 = scmp.eq.s32.totalorder %s28, 0
      %p132 = por %p130, %p131
      %s134 = sadd.s32 %s133, 1
      %p137 = scmp.eq.s32.totalorder %s22, 3
      %p138 = scmp.ne.s32.totalorder %s133, %s135
      %p139 = scmp.eq.s32.totalorder %s22, 0
      %p140 = por %p138, %p139
      %p141 = scmp.ne.s32.totalorder %s133, %s135
      %p142 = scmp.eq.s32.totalorder %s27, 3
      %p143 = por %p141, %p142
      %p144 = scmp.ne.s32.totalorder %s135, %s136
      %p145 = scmp.eq.s32.totalorder %s27, 0
      %p146 = por %p144, %p145
      %p147 = scmp.ne.s32.totalorder %s135, %s136
      %p148 = scmp.eq.s32.totalorder %s28, 3
      %p149 = por %p147, %p148
      %p151 = scmp.ne.s32.totalorder %s136, %s150
      %p152 = scmp.eq.s32.totalorder %s28, 0
      %p153 = por %p151, %p152
      %s155 = sadd.s32 %s154, 1
      %p158 = scmp.eq.s32.totalorder %s22, 3
      %p159 = scmp.ne.s32.totalorder %s154, %s156
      %p160 = scmp.eq.s32.totalorder %s22, 0
      %p161 = por %p159, %p160
      %p162 = scmp.ne.s32.totalorder %s154, %s156
      %p163 = scmp.eq.s32.totalorder %s27, 3
      %p164 = por %p162, %p163
      %p165 = scmp.ne.s32.totalorder %s156, %s157
      %p166 = scmp.eq.s32.totalorder %s27, 0
      %p167 = por %p165, %p166
      %p168 = scmp.ne.s32.totalorder %s156, %s157
      %p169 = scmp.eq.s32.totalorder %s28, 3
      %p170 = por %p168, %p169
      %p172 = scmp.ne.s32.totalorder %s157, %s171
      %p173 = scmp.eq.s32.totalorder %s28, 0
      %p174 = por %p172, %p173
      %s176 = sadd.s32 %s175, 1
      %p179 = scmp.eq.s32.totalorder %s22, 3
      %p180 = scmp.ne.s32.totalorder %s175, %s177
      %p181 = scmp.eq.s32.totalorder %s22, 0
      %p182 = por %p180, %p181
      %p183 = scmp.ne.s32.totalorder %s175, %s177
      %p184 = scmp.eq.s32.totalorder %s27, 3
      %p185 = por %p183, %p184
      %p186 = scmp.ne.s32.totalorder %s177, %s178
      %p187 = scmp.eq.s32.totalorder %s27, 0
      %p188 = por %p186, %p187
      %p189 = scmp.ne.s32.totalorder %s177, %s178
      %p190 = scmp.eq.s32.totalorder %s28, 3
      %p191 = por %p189, %p190
      %p193 = scmp.ne.s32.totalorder %s178, %s192
      %p194 = scmp.eq.s32.totalorder %s28, 0
      %p195 = por %p193, %p194
      %s196 = ssub.s32 %s29, %s41
      %s197 = ssub.s32 %s30, %s37
      %s198 = sor.u32 %s196, %s197
      %p199 = scmp.eq.s32.totalorder %s198, 0
      %s201 = sadd.s32 %s200, 1
      %s202 = scalar_select %p199, %s200, %s201
      %p205 = pneg %p199
      %p206 = scmp.eq.s32.totalorder %s22, 3
      %p207 = por %p205, %p206
      %p208 = scmp.ne.s32.totalorder %s200, %s203
      %p209 = scmp.eq.s32.totalorder %s22, 0
      %p210 = por %p208, %p209
      %p211 = scmp.ne.s32.totalorder %s200, %s203
      %p212 = scmp.eq.s32.totalorder %s27, 3
      %p213 = por %p211, %p212
      %p214 = scmp.ne.s32.totalorder %s203, %s204
      %p215 = scmp.eq.s32.totalorder %s27, 0
      %p216 = por %p214, %p215
      %p217 = scmp.ne.s32.totalorder %s203, %s204
      %p218 = scmp.eq.s32.totalorder %s28, 3
      %p219 = por %p217, %p218
      %p221 = scmp.ne.s32.totalorder %s204, %s220
      %p222 = scmp.eq.s32.totalorder %s28, 0
      %p223 = por %p221, %p222
      %p224 = scmp.le.s32.totalorder 1, %s22
      %p225 = scmp.lt.s32.totalorder %s22, 5
      %p226 = pnand %p224, %p225
      %p227 = pneg %p226
      // Predicated region
      $region9: #{tpu_custom_call.1} parent=5 // pred_check
        _
      $region10: #{tpu_custom_call.1} parent=5 // pred_check_branch
        %229 = sbr.rel (%p226) target = $region12
      $region11: #{tpu_custom_call.1} parent=5 // pred_region
        %s230 = ssub.s32 %s22, 1
        // Predicated region
        $region13: #{tpu_custom_call.1} parent=11 // pred_check
          %p231 = pneg %p83
        $region14: #{tpu_custom_call.1} parent=11 // pred_check_branch
          %233 = sbr.rel (%p231) target = $region16
        $region15: #{tpu_custom_call.1} parent=11 // pred_region
          %s235 = ssub.s32 1024, 1024
          %236 = vsyncadd [#allocation10], %s235
          %s237 = sshll.u32 [#allocation9], 4
          %s238 = int_to_ptr.vmem [resolvable:$true] %s237
          %243 = dma.hbm_to_vmem [thread:$0]  %s2, 1024, %s238, [#allocation10], 64, 64, 4
        $region16: #{tpu_custom_call.1} parent=11 // pred_fallthru
          _
        // Predicated region
        $region17: #{tpu_custom_call.1} parent=11 // pred_check
          %p244 = pneg %p104
        $region18: #{tpu_custom_call.1} parent=11 // pred_check_branch
          %246 = sbr.rel (%p244) target = $region20
        $region19: #{tpu_custom_call.1} parent=11 // pred_region
          _
        $region20: #{tpu_custom_call.1} parent=11 // pred_fallthru
          _
        // Predicated region
        $region21: #{tpu_custom_call.1} parent=11 // pred_check
          %p247 = pneg %p125
        $region22: #{tpu_custom_call.1} parent=11 // pred_check_branch
          %249 = sbr.rel (%p247) target = $region24
        $region23: #{tpu_custom_call.1} parent=11 // pred_region
          %s251 = ssub.s32 9216, 9216
          %252 = vsyncadd [#allocation10], %s251
          %s253 = sshll.u32 [#allocation11], 4
          %s254 = int_to_ptr.vmem [resolvable:$true] %s253
          %259 = dma.hbm_to_vmem [thread:$0]  %s4, 9216, %s254, [#allocation10], 64, 64, 4
        $region24: #{tpu_custom_call.1} parent=11 // pred_fallthru
          _
        // Predicated region
        $region25: #{tpu_custom_call.1} parent=11 // pred_check
          %p260 = pneg %p146
        $region26: #{tpu_custom_call.1} parent=11 // pred_check_branch
          %262 = sbr.rel (%p260) target = $region28
        $region27: #{tpu_custom_call.1} parent=11 // pred_region
          _
        $region28: #{tpu_custom_call.1} parent=11 // pred_fallthru
          _
        // Predicated region
        $region29: #{tpu_custom_call.1} parent=11 // pred_check
          %p263 = pneg %p167
        $region30: #{tpu_custom_call.1} parent=11 // pred_check_branch
          %265 = sbr.rel (%p263) target = $region32
        $region31: #{tpu_custom_call.1} parent=11 // pred_region
          %s267 = ssub.s32 1024, 1024
          %268 = vsyncadd [#allocation13], %s267
          %s269 = sshll.u32 [#allocation12], 4
          %s270 = int_to_ptr.vmem [resolvable:$true] %s269
          %275 = dma.hbm_to_vmem [thread:$0]  %s6, 1024, %s270, [#allocation13], 64, 64, 4
        $region32: #{tpu_custom_call.1} parent=11 // pred_fallthru
          _
        // Predicated region
        $region33: #{tpu_custom_call.1} parent=11 // pred_check
          %p276 = pneg %p188
        $region34: #{tpu_custom_call.1} parent=11 // pred_check_branch
          %278 = sbr.rel (%p276) target = $region36
        $region35: #{tpu_custom_call.1} parent=11 // pred_region
          _
        $region36: #{tpu_custom_call.1} parent=11 // pred_fallthru
          _
      $region12: #{tpu_custom_call.1} parent=5 // pred_fallthru
        _
      %p279 = scmp.lt.s32.totalorder %s22, 4
      // Predicated region
      $region37: #{tpu_custom_call.1} parent=5 // pred_check
        %p280 = pneg %p279
      $region38: #{tpu_custom_call.1} parent=5 // pred_check_branch
        %282 = sbr.rel (%p280) target = $region40
      $region39: #{tpu_custom_call.1} parent=5 // pred_region
        // Predicated region
        $region41: #{tpu_custom_call.1} parent=39 // pred_check
          %p283 = pneg %p56
        $region42: #{tpu_custom_call.1} parent=39 // pred_check_branch
          %285 = sbr.rel (%p283) target = $region44
        $region43: #{tpu_custom_call.1} parent=39 // pred_region
          %s286 = sand.u32 %s46, 1
          %s287 = scalar_lea.sflag [#allocation7], %s286
          %s288 = sand.u32 %s46, 1
          %s289 = smul.addr %s288, 128
          %s290 = scalar_lea.vmem [#allocation6], %s289
          %s291 = smul.u32 8, %s30
          %s293 = ssub.s32 2048, 2048
          %294 = vsyncadd %s287, %s293
          %s295 = smul.addr %s291, 2
          %s296 = smul.addr %s29, 32
          %s297 = sadd.s32 %s295, %s296
          %s298 = smul.addr %s297, 128
          %s299 = scalar_lea.hbm %s0, %s298
          %s300 = sshll.u32 %s290, 4
          %s301 = int_to_ptr.vmem [resolvable:$true] %s300
          %306 = dma.hbm_to_vmem [thread:$0]  %s299, 2048, %s301, %s287, 128, 128, 8
        $region44: #{tpu_custom_call.1} parent=39 // pred_fallthru
          _
      $region40: #{tpu_custom_call.1} parent=5 // pred_fallthru
        _
      %p307 = scmp.le.s32.totalorder 1, %s22
      %p308 = scmp.lt.s32.totalorder %s22, 5
      %p309 = pnand %p307, %p308
      %p310 = pneg %p309
      // Predicated region
      $region45: #{tpu_custom_call.1} parent=5 // pred_check
        _
      $region46: #{tpu_custom_call.1} parent=5 // pred_check_branch
        %312 = sbr.rel (%p309) target = $region48
      $region47: #{tpu_custom_call.1} parent=5 // pred_region
        %s313 = ssub.s32 %s22, 1
        %s314 = sand.u32 %s49, 1
        %s315 = scalar_lea.sflag [#allocation7], %s314
        %s316 = sand.u32 %s49, 1
        %s317 = smul.addr %s316, 128
        %s318 = scalar_lea.vmem [#allocation6], %s317
        // Predicated region
        $region49: #{tpu_custom_call.1} parent=47 // pred_check
          %p319 = pneg %p62
        $region50: #{tpu_custom_call.1} parent=47 // pred_check_branch
          %321 = sbr.rel (%p319) target = $region52
        $region51: #{tpu_custom_call.1} parent=47 // pred_region
          %322 = dma.done %s315, 2048
        $region52: #{tpu_custom_call.1} parent=47 // pred_fallthru
          _
        // Predicated region
        $region53: #{tpu_custom_call.1} parent=47 // pred_check
          %p323 = pneg %p83
        $region54: #{tpu_custom_call.1} parent=47 // pred_check_branch
          %325 = sbr.rel (%p323) target = $region56
        $region55: #{tpu_custom_call.1} parent=47 // pred_region
          %326 = dma.done [#allocation10], 1024
        $region56: #{tpu_custom_call.1} parent=47 // pred_fallthru
          _
        // Predicated region
        $region57: #{tpu_custom_call.1} parent=47 // pred_check
          %p327 = pneg %p125
        $region58: #{tpu_custom_call.1} parent=47 // pred_check_branch
          %329 = sbr.rel (%p327) target = $region60
        $region59: #{tpu_custom_call.1} parent=47 // pred_region
          %330 = dma.done [#allocation10], 9216
        $region60: #{tpu_custom_call.1} parent=47 // pred_fallthru
          _
        // Predicated region
        $region61: #{tpu_custom_call.1} parent=47 // pred_check
          %p331 = pneg %p167
        $region62: #{tpu_custom_call.1} parent=47 // pred_check_branch
          %333 = sbr.rel (%p331) target = $region64
        $region63: #{tpu_custom_call.1} parent=47 // pred_region
          %334 = dma.done [#allocation13], 1024
        $region64: #{tpu_custom_call.1} parent=47 // pred_fallthru
          _
        %s335 = sand.u32 %s49, 1
        %s336 = scalar_lea.sflag [#allocation7], %s335
        %s337 = sand.u32 %s49, 1
        %s338 = smul.addr %s337, 128
        %s339 = scalar_lea.vmem [#allocation6], %s338
        %p340 = pneg %p62
        %p341 = pneg %p59
        %p342 = pneg %p83
        %p343 = pneg %p80
        %p344 = pneg %p104
        %p345 = pneg %p101
        %p346 = pneg %p125
        %p347 = pneg %p122
        %p348 = pneg %p146
        %p349 = pneg %p143
        %p350 = pneg %p167
        %p351 = pneg %p164
        %p352 = pneg %p188
        %p353 = pneg %p185
        %p354 = pneg %p216
        %p355 = pneg %p213
        %s356 = sand.u32 %s203, 1
        %s357 = scalar_lea.sflag [#allocation8], %s356
        %s358 = sand.u32 %s203, 1
        %s359 = smul.addr %s358, 128
        %s360 = scalar_lea.vmem [#allocation14], %s359
        %s361 = smul.u32 8, %s32
        %s362 = smul.u32 8, %s32
        %s364 = smul.u32 %s32, 8
        %s365 = ssub.s32 %s364, 1
        %p366 = scmp.gt.s32.totalorder %s365, 0
        %s367 = scalar_select %p366, %s365, 0
        %s368 = sadd.s32 %s364, 8
        %p369 = scmp.lt.s32.totalorder %s368, 15
        %s370 = scalar_select %p369, %s368, 15
        %s371 = smul.u32 %s367, 16
        %s372 = smul.u32 %s31, 256
        %s373 = sadd.s32 %s371, %s372
        %s374 = smul.addr %s373, 16
        %s375 = scalar_lea.hbm %s1, %s374
        // Predicated region
        $region65: #{tpu_custom_call.1} parent=47 // pred_check
          _
        $region66: #{tpu_custom_call.1} parent=47 // pred_check_branch
          %377 = sbr.rel target = $region68
        $region67: #{tpu_custom_call.1} parent=47 // pred_region
          %378 = sst [smem:[#allocation17]] [#allocation16]
          %379 = sst [smem:[#allocation18]] [#allocation15]
        $region68: #{tpu_custom_call.1} parent=47 // pred_fallthru
          _
        %381 = shalt.err (0)
        %s383 = sshll.u32 [#allocation2], 4
        %s384 = int_to_ptr.vmem [resolvable:$true] %s383
        %386 = dma.hbm_to_vmem [thread:$0]  %s375, 256, %s384, [#allocation4]
        %s387 = smul.u32 %s370, 16
        %s388 = sadd.s32 %s387, %s372
        %s389 = smul.addr %s388, 16
        %s390 = scalar_lea.hbm %s1, %s389
        %s391 = scalar_lea.sflag [#allocation4], 1
        // Predicated region
        $region69: #{tpu_custom_call.1} parent=47 // pred_check
          _
        $region70: #{tpu_custom_call.1} parent=47 // pred_check_branch
          %393 = sbr.rel target = $region72
        $region71: #{tpu_custom_call.1} parent=47 // pred_region
          %394 = sst [smem:[#allocation17]] [#allocation20]
          %395 = sst [smem:[#allocation18]] [#allocation19]
        $region72: #{tpu_custom_call.1} parent=47 // pred_fallthru
          _
        %397 = shalt.err (0)
        %s399 = sshll.u32 [#allocation3], 4
        %s400 = int_to_ptr.vmem [resolvable:$true] %s399
        %402 = dma.hbm_to_vmem [thread:$0]  %s390, 256, %s400, %s391
        %v403 = vld [vmem:[%s318] sm:$0xff]
        %v404 = vld [vmem:[%s318 + $0x8] sm:$0xff]
        %v405 = vld [vmem:[%s318 + $0x10] sm:$0xff]
        %v406 = vld [vmem:[%s318 + $0x18] sm:$0xff]
        %v407 = vld [vmem:[%s318 + $0x20] sm:$0xff]
        %v408 = vld [vmem:[%s318 + $0x28] sm:$0xff]
        %v409 = vld [vmem:[%s318 + $0x30] sm:$0xff]
        %v410 = vld [vmem:[%s318 + $0x38] sm:$0xff]
        %v411 = vld [vmem:[%s318 + $0x40] sm:$0xff]
        %v412 = vld [vmem:[%s318 + $0x48] sm:$0xff]
        %v413 = vld [vmem:[%s318 + $0x50] sm:$0xff]
        %v414 = vld [vmem:[%s318 + $0x58] sm:$0xff]
        %v415 = vld [vmem:[%s318 + $0x60] sm:$0xff]
        %v416 = vld [vmem:[%s318 + $0x68] sm:$0xff]
        %v417 = vld [vmem:[%s318 + $0x70] sm:$0xff]
        %v418 = vld [vmem:[%s318 + $0x78] sm:$0xff]
        %v419 = vpack.c.bf16 %v404, %v403
        %v420 = vpack.c.bf16 %v406, %v405
        %v421 = vpack.c.bf16 %v408, %v407
        %v422 = vpack.c.bf16 %v410, %v409
        %v423 = vpack.c.bf16 %v412, %v411
        %v424 = vpack.c.bf16 %v414, %v413
        %v425 = vpack.c.bf16 %v416, %v415
        %v426 = vpack.c.bf16 %v418, %v417
        %v427 = vld [vmem:[#allocation9] sm:$0xf]
        %v428 = vld [vmem:[#allocation9 + $0x4] sm:$0xf]
        %v429 = vld [vmem:[#allocation9 + $0x8] sm:$0xf]
        %v430 = vld [vmem:[#allocation9 + $0xc] sm:$0xf]
        %v431 = vld [vmem:[#allocation9 + $0x10] sm:$0xf]
        %v432 = vld [vmem:[#allocation9 + $0x14] sm:$0xf]
        %v433 = vld [vmem:[#allocation9 + $0x18] sm:$0xf]
        %v434 = vld [vmem:[#allocation9 + $0x1c] sm:$0xf]
        %v435 = vld [vmem:[#allocation9 + $0x20] sm:$0xf]
        %v436 = vld [vmem:[#allocation9 + $0x24] sm:$0xf]
        %v437 = vld [vmem:[#allocation9 + $0x28] sm:$0xf]
        %v438 = vld [vmem:[#allocation9 + $0x2c] sm:$0xf]
        %v439 = vld [vmem:[#allocation9 + $0x30] sm:$0xf]
        %v440 = vld [vmem:[#allocation9 + $0x34] sm:$0xf]
        %v441 = vld [vmem:[#allocation9 + $0x38] sm:$0xf]
        %v442 = vld [vmem:[#allocation9 + $0x3c] sm:$0xf]
        %v443 = vld [vmem:[%s3] sm:$0x1]
        %v445 = vlaneseq
        %v446 = vshrl.u32 %v445, 7
        %v447 = vsub.s32 0, %v446
        %v448 = vrot.slane %v443, %v447
        %v466 = vunpack.c.l.b16 %v427
        %v467 = vunpack.c.l.b16 %v428
        %v468 = vunpack.c.l.b16 %v429
        %v469 = vunpack.c.l.b16 %v430
        %v470 = vunpack.c.l.b16 %v431
        %v471 = vunpack.c.l.b16 %v432
        %v472 = vunpack.c.l.b16 %v433
        %v473 = vunpack.c.l.b16 %v434
        %v474 = vunpack.c.l.b16 %v435
        %v475 = vunpack.c.l.b16 %v436
        %v476 = vunpack.c.l.b16 %v437
        %v477 = vunpack.c.l.b16 %v438
        %v478 = vunpack.c.l.b16 %v439
        %v479 = vunpack.c.l.b16 %v440
        %v480 = vunpack.c.l.b16 %v441
        %v481 = vunpack.c.l.b16 %v442
        %v482 = vpack.c.b16 %v467, %v466
        %v483 = vpack.c.b16 %v469, %v468
        %v484 = vpack.c.b16 %v471, %v470
        %v485 = vpack.c.b16 %v473, %v472
        %v486 = vpack.c.b16 %v475, %v474
        %v487 = vpack.c.b16 %v477, %v476
        %v488 = vpack.c.b16 %v479, %v478
        %v489 = vpack.c.b16 %v481, %v480
        %498 = vmatprep.subr.bf16.mxu0 0
        %499 = vmatpush1.bf16.msra.mxu0 %v489
        %500 = vmatprep.subr.bf16.mxu0 0
        %501 = vmatpush1.bf16.msra.mxu0 %v488
        %502 = vmatprep.subr.bf16.mxu0 0
        %503 = vmatpush1.bf16.msra.mxu0 %v487
        %504 = vmatprep.subr.bf16.mxu0 0
        %505 = vmatpush1.bf16.msra.mxu0 %v486
        %506 = vmatprep.subr.bf16.mxu0 0
        %507 = vmatpush1.bf16.msra.mxu0 %v485
        %508 = vmatprep.subr.bf16.mxu0 0
        %509 = vmatpush1.bf16.msra.mxu0 %v484
        %510 = vmatprep.subr.bf16.mxu0 0
        %511 = vmatpush1.bf16.msra.mxu0 %v483
        %512 = vmatprep.subr.bf16.mxu0 0
        %513 = vmatpush1.bf16.msra.mxu0 %v482
        %514 = vmatprep.subr.bf16.mxu0 0
        %515 = vmatpush2.bf16.msra.mxu0 0
        %516 = vmatprep.subr.bf16.mxu0 0
        %517 = vmatpush2.bf16.msra.mxu0 0
        %518 = vmatprep.subr.bf16.mxu0 0
        %519 = vmatpush2.bf16.msra.mxu0 0
        %520 = vmatprep.subr.bf16.mxu0 0
        %521 = vmatpush2.bf16.msra.mxu0 0
        %522 = vmatprep.subr.bf16.mxu0 0
        %523 = vmatpush2.bf16.msra.mxu0 0
        %524 = vmatprep.subr.bf16.mxu0 0
        %525 = vmatpush2.bf16.msra.mxu0 0
        %526 = vmatprep.subr.bf16.mxu0 0
        %527 = vmatpush2.bf16.msra.mxu0 0
        %528 = vmatprep.subr.bf16.mxu0 0
        %529 = vmatpush2.bf16.msra.mxu0 0
        %530 = vmatprep.mubr.bf16.mxu0 0
        %531 = vmatmul.mubr.bf16.gmra.mxu0 %v419
        %v532 = vpop.f32.mrf.mxu0
        %v533 = vadd.f32 %v448, %v532
        %v534 = vpop.f32.mrf.mxu0
        %v535 = vpop.f32.mrf.mxu0
        %v536 = vadd.f32 %v448, %v535
        %v537 = vpop.f32.mrf.mxu0
        %538 = vmatprep.mubr.bf16.mxu0 0
        %539 = vmatmul.mubr.bf16.gmra.mxu0 %v420
        %v540 = vpop.f32.mrf.mxu0
        %v541 = vadd.f32 %v448, %v540
        %v542 = vpop.f32.mrf.mxu0
        %v543 = vpop.f32.mrf.mxu0
        %v544 = vadd.f32 %v448, %v543
        %v545 = vpop.f32.mrf.mxu0
        %546 = vmatprep.mubr.bf16.mxu0 0
        %547 = vmatmul.mubr.bf16.gmra.mxu0 %v421
        %v548 = vpop.f32.mrf.mxu0
        %v549 = vadd.f32 %v448, %v548
        %v550 = vpop.f32.mrf.mxu0
        %v551 = vpop.f32.mrf.mxu0
        %v552 = vadd.f32 %v448, %v551
        %v553 = vpop.f32.mrf.mxu0
        %554 = vmatprep.mubr.bf16.mxu0 0
        %555 = vmatmul.mubr.bf16.gmra.mxu0 %v422
        %v556 = vpop.f32.mrf.mxu0
        %v557 = vadd.f32 %v448, %v556
        %v558 = vpop.f32.mrf.mxu0
        %v559 = vpop.f32.mrf.mxu0
        %v560 = vadd.f32 %v448, %v559
        %v561 = vpop.f32.mrf.mxu0
        %562 = vmatprep.mubr.bf16.mxu0 0
        %563 = vmatmul.mubr.bf16.gmra.mxu0 %v423
        %v564 = vpop.f32.mrf.mxu0
        %v565 = vadd.f32 %v448, %v564
        %v566 = vpop.f32.mrf.mxu0
        %v567 = vpop.f32.mrf.mxu0
        %v568 = vadd.f32 %v448, %v567
        %v569 = vpop.f32.mrf.mxu0
        %570 = vmatprep.mubr.bf16.mxu0 0
        %571 = vmatmul.mubr.bf16.gmra.mxu0 %v424
        %v572 = vpop.f32.mrf.mxu0
        %v573 = vadd.f32 %v448, %v572
        %v574 = vpop.f32.mrf.mxu0
        %v575 = vpop.f32.mrf.mxu0
        %v576 = vadd.f32 %v448, %v575
        %v577 = vpop.f32.mrf.mxu0
        %578 = vmatprep.mubr.bf16.mxu0 0
        %579 = vmatmul.mubr.bf16.gmra.mxu0 %v425
        %v580 = vpop.f32.mrf.mxu0
        %v581 = vadd.f32 %v448, %v580
        %v582 = vpop.f32.mrf.mxu0
        %v583 = vpop.f32.mrf.mxu0
        %v584 = vadd.f32 %v448, %v583
        %v585 = vpop.f32.mrf.mxu0
        %586 = vmatprep.mubr.bf16.mxu0 0
        %587 = vmatmul.mubr.bf16.gmra.mxu0 %v426
        %v588 = vpop.f32.mrf.mxu0
        %v589 = vadd.f32 %v448, %v588
        %v590 = vpop.f32.mrf.mxu0
        %v591 = vpop.f32.mrf.mxu0
        %v592 = vadd.f32 %v448, %v591
        %v593 = vpop.f32.mrf.mxu0
        %594 = vdwg.mxu0
        %v595 = vmax.f32 %v533, 0.0
        %v596 = vmax.f32 %v536, 0.0
        %v597 = vmax.f32 %v541, 0.0
        %v598 = vmax.f32 %v544, 0.0
        %v599 = vmax.f32 %v549, 0.0
        %v600 = vmax.f32 %v552, 0.0
        %v601 = vmax.f32 %v557, 0.0
        %v602 = vmax.f32 %v560, 0.0
        %v603 = vmax.f32 %v565, 0.0
        %v604 = vmax.f32 %v568, 0.0
        %v605 = vmax.f32 %v573, 0.0
        %v606 = vmax.f32 %v576, 0.0
        %v607 = vmax.f32 %v581, 0.0
        %v608 = vmax.f32 %v584, 0.0
        %v609 = vmax.f32 %v589, 0.0
        %v610 = vmax.f32 %v592, 0.0
        %vm611 = vcmask 1040384
        %vm612 = vsmask.f32 256
        %vm613 = vmand %vm611, %vm612
        %v614 = vld [vmem:[#allocation5] sm:$0x1]
        %v615 = vsel %vm613, 0, %v614
        %616 = vst [vmem:[#allocation5] sm:$0x1] %v615
        %v617 = vld [vmem:[#allocation5 + $0xc] sm:$0x1]
        %v618 = vsel %vm613, 0, %v617
        %619 = vst [vmem:[#allocation5 + $0xc] sm:$0x1] %v618
        %v620 = vld [vmem:[#allocation5 + $0x18] sm:$0x1]
        %v621 = vsel %vm613, 0, %v620
        %622 = vst [vmem:[#allocation5 + $0x18] sm:$0x1] %v621
        %v623 = vld [vmem:[#allocation5 + $0x24] sm:$0x1]
        %v624 = vsel %vm613, 0, %v623
        %625 = vst [vmem:[#allocation5 + $0x24] sm:$0x1] %v624
        %v626 = vld [vmem:[#allocation5 + $0x30] sm:$0x1]
        %v627 = vsel %vm613, 0, %v626
        %628 = vst [vmem:[#allocation5 + $0x30] sm:$0x1] %v627
        %v629 = vld [vmem:[#allocation5 + $0x3c] sm:$0x1]
        %v630 = vsel %vm613, 0, %v629
        %631 = vst [vmem:[#allocation5 + $0x3c] sm:$0x1] %v630
        %v632 = vld [vmem:[#allocation5 + $0x48] sm:$0x1]
        %v633 = vsel %vm613, 0, %v632
        %634 = vst [vmem:[#allocation5 + $0x48] sm:$0x1] %v633
        %v635 = vld [vmem:[#allocation5 + $0x54] sm:$0x1]
        %v636 = vsel %vm613, 0, %v635
        %637 = vst [vmem:[#allocation5 + $0x54] sm:$0x1] %v636
        %v638 = vld [vmem:[#allocation5 + $0x60] sm:$0x1]
        %v639 = vsel %vm613, 0, %v638
        %640 = vst [vmem:[#allocation5 + $0x60] sm:$0x1] %v639
        %v641 = vld [vmem:[#allocation5 + $0x6c] sm:$0x1]
        %v642 = vsel %vm613, 0, %v641
        %643 = vst [vmem:[#allocation5 + $0x6c] sm:$0x1] %v642
        %vm644 = vsmask.f32 7938
        %vm645 = vmand %vm611, %vm644
        %v646 = vld [vmem:[#allocation5 + $0x8] sm:$0x1]
        %v647 = vsel %vm645, 0, %v646
        %648 = vst [vmem:[#allocation5 + $0x8] sm:$0x1] %v647
        %v649 = vld [vmem:[#allocation5 + $0x14] sm:$0x1]
        %v650 = vsel %vm645, 0, %v649
        %651 = vst [vmem:[#allocation5 + $0x14] sm:$0x1] %v650
        %v652 = vld [vmem:[#allocation5 + $0x20] sm:$0x1]
        %v653 = vsel %vm645, 0, %v652
        %654 = vst [vmem:[#allocation5 + $0x20] sm:$0x1] %v653
        %v655 = vld [vmem:[#allocation5 + $0x2c] sm:$0x1]
        %v656 = vsel %vm645, 0, %v655
        %657 = vst [vmem:[#allocation5 + $0x2c] sm:$0x1] %v656
        %v658 = vld [vmem:[#allocation5 + $0x38] sm:$0x1]
        %v659 = vsel %vm645, 0, %v658
        %660 = vst [vmem:[#allocation5 + $0x38] sm:$0x1] %v659
        %v661 = vld [vmem:[#allocation5 + $0x44] sm:$0x1]
        %v662 = vsel %vm645, 0, %v661
        %663 = vst [vmem:[#allocation5 + $0x44] sm:$0x1] %v662
        %v664 = vld [vmem:[#allocation5 + $0x50] sm:$0x1]
        %v665 = vsel %vm645, 0, %v664
        %666 = vst [vmem:[#allocation5 + $0x50] sm:$0x1] %v665
        %v667 = vld [vmem:[#allocation5 + $0x5c] sm:$0x1]
        %v668 = vsel %vm645, 0, %v667
        %669 = vst [vmem:[#allocation5 + $0x5c] sm:$0x1] %v668
        %v670 = vld [vmem:[#allocation5 + $0x68] sm:$0x1]
        %v671 = vsel %vm645, 0, %v670
        %672 = vst [vmem:[#allocation5 + $0x68] sm:$0x1] %v671
        %v673 = vld [vmem:[#allocation5 + $0x74] sm:$0x1]
        %v674 = vsel %vm645, 0, %v673
        %675 = vst [vmem:[#allocation5 + $0x74] sm:$0x1] %v674
        %v676 = vpack.c.bf16 %v596, %v595
        %v677 = vpack.c.bf16 %v598, %v597
        %v678 = vpack.c.bf16 %v600, %v599
        %v679 = vpack.c.bf16 %v602, %v601
        %v680 = vpack.c.bf16 %v604, %v603
        %v681 = vpack.c.bf16 %v606, %v605
        %v682 = vpack.c.bf16 %v608, %v607
        %v683 = vpack.c.bf16 %v610, %v609
        %v692 = vunpack.c.l.b16 %v676
        %v693 = vunpack.c.h.b16 %v676
        %v694 = vunpack.c.l.b16 %v677
        %v695 = vunpack.c.h.b16 %v677
        %v696 = vunpack.c.l.b16 %v678
        %v697 = vunpack.c.h.b16 %v678
        %v698 = vunpack.c.l.b16 %v679
        %v699 = vunpack.c.h.b16 %v679
        %v700 = vunpack.c.l.b16 %v680
        %v701 = vunpack.c.h.b16 %v680
        %v702 = vunpack.c.l.b16 %v681
        %v703 = vunpack.c.h.b16 %v681
        %v704 = vunpack.c.l.b16 %v682
        %v705 = vunpack.c.h.b16 %v682
        %v706 = vunpack.c.l.b16 %v683
        %v707 = vunpack.c.h.b16 %v683
        %v708 = vpack.c.b16 %v692, %v692
        %v709 = vpack.c.b16 %v693, %v693
        %v710 = vpack.c.b16 %v694, %v694
        %v711 = vpack.c.b16 %v695, %v695
        %v712 = vpack.c.b16 %v696, %v696
        %v713 = vpack.c.b16 %v697, %v697
        %v714 = vpack.c.b16 %v698, %v698
        %v715 = vpack.c.b16 %v699, %v699
        %v716 = vpack.c.b16 %v700, %v700
        %v717 = vpack.c.b16 %v701, %v701
        %v718 = vpack.c.b16 %v702, %v702
        %v719 = vpack.c.b16 %v703, %v703
        %v720 = vpack.c.b16 %v704, %v704
        %v721 = vpack.c.b16 %v705, %v705
        %v722 = vpack.c.b16 %v706, %v706
        %v723 = vpack.c.b16 %v707, %v707
        %vm724 = vsmask.f32 4368
        %vm725 = vmor %vm612, %vm724
        %v727 = vshrl.u32 %v708, 16
        %v729 = vrot.slane %v727, 7
        %v730 = vshll.u32 %v708, 16
        %v732 = vor.u32 %v729, %v730
        %v733 = vrot.slane %v729, 4
        %v735 = vshrl.u32 %v709, 16
        %v737 = vrot.slane %v735, 7
        %v738 = vshll.u32 %v709, 16
        %v740 = vor.u32 %v737, %v738
        %v741 = vsel %vm725, %v733, %v740
        %v742 = vrot.slane %v737, 4
        %v744 = vshrl.u32 %v710, 16
        %v746 = vrot.slane %v744, 7
        %v747 = vshll.u32 %v710, 16
        %v749 = vor.u32 %v746, %v747
        %v750 = vrot.slane %v746, 4
        %v752 = vshrl.u32 %v711, 16
        %v754 = vrot.slane %v752, 7
        %v755 = vshll.u32 %v711, 16
        %v757 = vor.u32 %v754, %v755
        %v758 = vsel %vm725, %v750, %v757
        %v759 = vrot.slane %v754, 4
        %v761 = vshrl.u32 %v712, 16
        %v763 = vrot.slane %v761, 7
        %v764 = vshll.u32 %v712, 16
        %v766 = vor.u32 %v763, %v764
        %v767 = vrot.slane %v763, 4
        %v769 = vshrl.u32 %v713, 16
        %v771 = vrot.slane %v769, 7
        %v772 = vshll.u32 %v713, 16
        %v774 = vor.u32 %v771, %v772
        %v775 = vsel %vm725, %v767, %v774
        %v776 = vrot.slane %v771, 4
        %v778 = vshrl.u32 %v714, 16
        %v780 = vrot.slane %v778, 7
        %v781 = vshll.u32 %v714, 16
        %v783 = vor.u32 %v780, %v781
        %v784 = vrot.slane %v780, 4
        %v786 = vshrl.u32 %v715, 16
        %v788 = vrot.slane %v786, 7
        %v789 = vshll.u32 %v715, 16
        %v791 = vor.u32 %v788, %v789
        %v792 = vsel %vm725, %v784, %v791
        %v793 = vrot.slane %v788, 4
        %v795 = vshrl.u32 %v716, 16
        %v797 = vrot.slane %v795, 7
        %v798 = vshll.u32 %v716, 16
        %v800 = vor.u32 %v797, %v798
        %v801 = vrot.slane %v797, 4
        %v803 = vshrl.u32 %v717, 16
        %v805 = vrot.slane %v803, 7
        %v806 = vshll.u32 %v717, 16
        %v808 = vor.u32 %v805, %v806
        %v809 = vsel %vm725, %v801, %v808
        %v810 = vrot.slane %v805, 4
        %v812 = vshrl.u32 %v718, 16
        %v814 = vrot.slane %v812, 7
        %v815 = vshll.u32 %v718, 16
        %v817 = vor.u32 %v814, %v815
        %v818 = vrot.slane %v814, 4
        %v820 = vshrl.u32 %v719, 16
        %v822 = vrot.slane %v820, 7
        %v823 = vshll.u32 %v719, 16
        %v825 = vor.u32 %v822, %v823
        %v826 = vsel %vm725, %v818, %v825
        %v827 = vrot.slane %v822, 4
        %v829 = vshrl.u32 %v720, 16
        %v831 = vrot.slane %v829, 7
        %v832 = vshll.u32 %v720, 16
        %v834 = vor.u32 %v831, %v832
        %v835 = vrot.slane %v831, 4
        %v837 = vshrl.u32 %v721, 16
        %v839 = vrot.slane %v837, 7
        %v840 = vshll.u32 %v721, 16
        %v842 = vor.u32 %v839, %v840
        %v843 = vsel %vm725, %v835, %v842
        %v844 = vrot.slane %v839, 4
        %v846 = vshrl.u32 %v722, 16
        %v848 = vrot.slane %v846, 7
        %v849 = vshll.u32 %v722, 16
        %v851 = vor.u32 %v848, %v849
        %v852 = vrot.slane %v848, 4
        %v854 = vshrl.u32 %v723, 16
        %v856 = vrot.slane %v854, 7
        %v857 = vshll.u32 %v723, 16
        %v859 = vor.u32 %v856, %v857
        %v860 = vsel %vm725, %v852, %v859
        %v861 = vrot.slane %v856, 4
        %s886 = scalar_lea.vmem [#allocation5], 12
        %vm887 = vcmask 1043456
        %vm888 = vmand %vm887, %vm644
        %v889 = vld [vmem:[%s886] sm:$0xf]
        %v890 = vsel %vm888, %v732, %v889
        %891 = vst [vmem:[%s886] sm:$0xf] %v890
        %892 = vst [vmem:[%s886 + $0x4] sm:$0xf] %v741
        %v893 = vld [vmem:[%s886 + $0x8] sm:$0x1]
        %v894 = vsel %vm613, %v742, %v893
        %895 = vst [vmem:[%s886 + $0x8] sm:$0x1] %v894
        %v896 = vld [vmem:[%s886 + $0xc] sm:$0xf]
        %v897 = vsel %vm888, %v749, %v896
        %898 = vst [vmem:[%s886 + $0xc] sm:$0xf] %v897
        %899 = vst [vmem:[%s886 + $0x10] sm:$0xf] %v758
        %v900 = vld [vmem:[%s886 + $0x14] sm:$0x1]
        %v901 = vsel %vm613, %v759, %v900
        %902 = vst [vmem:[%s886 + $0x14] sm:$0x1] %v901
        %v903 = vld [vmem:[%s886 + $0x18] sm:$0xf]
        %v904 = vsel %vm888, %v766, %v903
        %905 = vst [vmem:[%s886 + $0x18] sm:$0xf] %v904
        %906 = vst [vmem:[%s886 + $0x1c] sm:$0xf] %v775
        %v907 = vld [vmem:[%s886 + $0x20] sm:$0x1]
        %v908 = vsel %vm613, %v776, %v907
        %909 = vst [vmem:[%s886 + $0x20] sm:$0x1] %v908
        %v910 = vld [vmem:[%s886 + $0x24] sm:$0xf]
        %v911 = vsel %vm888, %v783, %v910
        %912 = vst [vmem:[%s886 + $0x24] sm:$0xf] %v911
        %913 = vst [vmem:[%s886 + $0x28] sm:$0xf] %v792
        %v914 = vld [vmem:[%s886 + $0x2c] sm:$0x1]
        %v915 = vsel %vm613, %v793, %v914
        %916 = vst [vmem:[%s886 + $0x2c] sm:$0x1] %v915
        %v917 = vld [vmem:[%s886 + $0x30] sm:$0xf]
        %v918 = vsel %vm888, %v800, %v917
        %919 = vst [vmem:[%s886 + $0x30] sm:$0xf] %v918
        %920 = vst [vmem:[%s886 + $0x34] sm:$0xf] %v809
        %v921 = vld [vmem:[%s886 + $0x38] sm:$0x1]
        %v922 = vsel %vm613, %v810, %v921
        %923 = vst [vmem:[%s886 + $0x38] sm:$0x1] %v922
        %v924 = vld [vmem:[%s886 + $0x3c] sm:$0xf]
        %v925 = vsel %vm888, %v817, %v924
        %926 = vst [vmem:[%s886 + $0x3c] sm:$0xf] %v925
        %927 = vst [vmem:[%s886 + $0x40] sm:$0xf] %v826
        %v928 = vld [vmem:[%s886 + $0x44] sm:$0x1]
        %v929 = vsel %vm613, %v827, %v928
        %930 = vst [vmem:[%s886 + $0x44] sm:$0x1] %v929
        %v931 = vld [vmem:[%s886 + $0x48] sm:$0xf]
        %v932 = vsel %vm888, %v834, %v931
        %933 = vst [vmem:[%s886 + $0x48] sm:$0xf] %v932
        %934 = vst [vmem:[%s886 + $0x4c] sm:$0xf] %v843
        %v935 = vld [vmem:[%s886 + $0x50] sm:$0x1]
        %v936 = vsel %vm613, %v844, %v935
        %937 = vst [vmem:[%s886 + $0x50] sm:$0x1] %v936
        %v938 = vld [vmem:[%s886 + $0x54] sm:$0xf]
        %v939 = vsel %vm888, %v851, %v938
        %940 = vst [vmem:[%s886 + $0x54] sm:$0xf] %v939
        %941 = vst [vmem:[%s886 + $0x58] sm:$0xf] %v860
        %v942 = vld [vmem:[%s886 + $0x5c] sm:$0x1]
        %v943 = vsel %vm613, %v861, %v942
        %944 = vst [vmem:[%s886 + $0x5c] sm:$0x1] %v943
        %s945 = smul.u32 16, 1
        %s946 = sshll.u32 %s945, 4
        %947 = dma.done [#allocation4], %s946
        %s948 = sshll.u32 %s945, 4
        %949 = dma.done %s391, %s948
        %v950 = vld [vmem:[#allocation2] sm:$0xff]
        %v951 = vld [vmem:[#allocation2 + $0x8] sm:$0xff]
        %v952 = vld [vmem:[#allocation3] sm:$0xff]
        %v953 = vld [vmem:[#allocation3 + $0x8] sm:$0xff]
        %v954 = vpack.c.bf16 %v951, %v950
        %v955 = vpack.c.bf16 %v953, %v952
        %v956 = vld [vmem:[#allocation9] sm:$0xf]
        %v957 = vld [vmem:[#allocation9 + $0x4] sm:$0xf]
        %v958 = vld [vmem:[#allocation9 + $0x8] sm:$0xf]
        %v959 = vld [vmem:[#allocation9 + $0xc] sm:$0xf]
        %v960 = vld [vmem:[#allocation9 + $0x10] sm:$0xf]
        %v961 = vld [vmem:[#allocation9 + $0x14] sm:$0xf]
        %v962 = vld [vmem:[#allocation9 + $0x18] sm:$0xf]
        %v963 = vld [vmem:[#allocation9 + $0x1c] sm:$0xf]
        %v964 = vld [vmem:[#allocation9 + $0x20] sm:$0xf]
        %v965 = vld [vmem:[#allocation9 + $0x24] sm:$0xf]
        %v966 = vld [vmem:[#allocation9 + $0x28] sm:$0xf]
        %v967 = vld [vmem:[#allocation9 + $0x2c] sm:$0xf]
        %v968 = vld [vmem:[#allocation9 + $0x30] sm:$0xf]
        %v969 = vld [vmem:[#allocation9 + $0x34] sm:$0xf]
        %v970 = vld [vmem:[#allocation9 + $0x38] sm:$0xf]
        %v971 = vld [vmem:[#allocation9 + $0x3c] sm:$0xf]
        %v972 = vld [vmem:[%s3] sm:$0x1]
        %v974 = vlaneseq
        %v975 = vshrl.u32 %v974, 7
        %v976 = vsub.s32 0, %v975
        %v977 = vrot.slane %v972, %v976
        %v995 = vunpack.c.l.b16 %v956
        %v996 = vunpack.c.l.b16 %v957
        %v997 = vunpack.c.l.b16 %v958
        %v998 = vunpack.c.l.b16 %v959
        %v999 = vunpack.c.l.b16 %v960
        %v1000 = vunpack.c.l.b16 %v961
        %v1001 = vunpack.c.l.b16 %v962
        %v1002 = vunpack.c.l.b16 %v963
        %v1003 = vunpack.c.l.b16 %v964
        %v1004 = vunpack.c.l.b16 %v965
        %v1005 = vunpack.c.l.b16 %v966
        %v1006 = vunpack.c.l.b16 %v967
        %v1007 = vunpack.c.l.b16 %v968
        %v1008 = vunpack.c.l.b16 %v969
        %v1009 = vunpack.c.l.b16 %v970
        %v1010 = vunpack.c.l.b16 %v971
        %v1011 = vpack.c.b16 %v996, %v995
        %v1012 = vpack.c.b16 %v998, %v997
        %v1013 = vpack.c.b16 %v1000, %v999
        %v1014 = vpack.c.b16 %v1002, %v1001
        %v1015 = vpack.c.b16 %v1004, %v1003
        %v1016 = vpack.c.b16 %v1006, %v1005
        %v1017 = vpack.c.b16 %v1008, %v1007
        %v1018 = vpack.c.b16 %v1010, %v1009
        %1027 = vmatprep.subr.bf16.mxu0 0
        %1028 = vmatpush1.bf16.msra.mxu0 %v1018
        %1029 = vmatprep.subr.bf16.mxu0 0
        %1030 = vmatpush1.bf16.msra.mxu0 %v1017
        %1031 = vmatprep.subr.bf16.mxu0 0
        %1032 = vmatpush1.bf16.msra.mxu0 %v1016
        %1033 = vmatprep.subr.bf16.mxu0 0
        %1034 = vmatpush1.bf16.msra.mxu0 %v1015
        %1035 = vmatprep.subr.bf16.mxu0 0
        %1036 = vmatpush1.bf16.msra.mxu0 %v1014
        %1037 = vmatprep.subr.bf16.mxu0 0
        %1038 = vmatpush1.bf16.msra.mxu0 %v1013
        %1039 = vmatprep.subr.bf16.mxu0 0
        %1040 = vmatpush1.bf16.msra.mxu0 %v1012
        %1041 = vmatprep.subr.bf16.mxu0 0
        %1042 = vmatpush1.bf16.msra.mxu0 %v1011
        %1043 = vmatprep.subr.bf16.mxu0 0
        %1044 = vmatpush2.bf16.msra.mxu0 0
        %1045 = vmatprep.subr.bf16.mxu0 0
        %1046 = vmatpush2.bf16.msra.mxu0 0
        %1047 = vmatprep.subr.bf16.mxu0 0
        %1048 = vmatpush2.bf16.msra.mxu0 0
        %1049 = vmatprep.subr.bf16.mxu0 0
        %1050 = vmatpush2.bf16.msra.mxu0 0
        %1051 = vmatprep.subr.bf16.mxu0 0
        %1052 = vmatpush2.bf16.msra.mxu0 0
        %1053 = vmatprep.subr.bf16.mxu0 0
        %1054 = vmatpush2.bf16.msra.mxu0 0
        %1055 = vmatprep.subr.bf16.mxu0 0
        %1056 = vmatpush2.bf16.msra.mxu0 0
        %1057 = vmatprep.subr.bf16.mxu0 0
        %1058 = vmatpush2.bf16.msra.mxu0 0
        %1059 = vmatprep.mubr.bf16.mxu0 0
        %1060 = vmatmul.mubr.bf16.gmra.mxu0 %v954
        %v1061 = vpop.f32.mrf.mxu0
        %v1062 = vadd.f32 %v977, %v1061
        %v1063 = vpop.f32.mrf.mxu0
        %v1064 = vpop.f32.mrf.mxu0
        %v1065 = vadd.f32 %v977, %v1064
        %v1066 = vpop.f32.mrf.mxu0
        %1067 = vmatprep.mubr.bf16.mxu0 0
        %1068 = vmatmul.mubr.bf16.gmra.mxu0 %v955
        %v1069 = vpop.f32.mrf.mxu0
        %v1070 = vadd.f32 %v977, %v1069
        %v1071 = vpop.f32.mrf.mxu0
        %v1072 = vpop.f32.mrf.mxu0
        %v1073 = vadd.f32 %v977, %v1072
        %v1074 = vpop.f32.mrf.mxu0
        %1075 = vdwg.mxu0
        %v1076 = vmax.f32 %v1062, 0.0
        %v1077 = vmax.f32 %v1065, 0.0
        %v1078 = vmax.f32 %v1070, 0.0
        %v1079 = vmax.f32 %v1073, 0.0
        %p1080 = scmp.gt.s32.totalorder %s32, 0
        %s1081 = scalar_select %p1080, 1, 0
        %s1082 = scvt.s32.f32 %s1081
        %p1083 = scmp.lt.s32.totalorder %s32, 1
        %s1084 = scalar_select %p1083, 1, 0
        %s1085 = scvt.s32.f32 %s1084
        %v1086 = vstv %s1082
        %v1087 = vmul.f32 %v1076, %v1086
        %v1088 = vmul.f32 %v1077, %v1086
        %v1089 = vpack.c.bf16 %v1088, %v1087
        %v1091 = vunpack.c.l.b16 %v1089
        %v1092 = vunpack.c.h.b16 %v1089
        %v1093 = vpack.c.b16 %v1091, %v1091
        %v1094 = vpack.c.b16 %v1092, %v1092
        %v1096 = vshrl.u32 %v1093, 16
        %v1098 = vrot.slane %v1096, 7
        %v1099 = vshll.u32 %v1093, 16
        %v1101 = vor.u32 %v1098, %v1099
        %v1102 = vrot.slane %v1098, 4
        %v1104 = vshrl.u32 %v1094, 16
        %v1106 = vrot.slane %v1104, 7
        %v1107 = vshll.u32 %v1094, 16
        %v1109 = vor.u32 %v1106, %v1107
        %v1110 = vsel %vm725, %v1102, %v1109
        %v1111 = vrot.slane %v1106, 4
        %v1115 = vld [vmem:[#allocation5] sm:$0xf]
        %v1116 = vsel %vm888, %v1101, %v1115
        %1117 = vst [vmem:[#allocation5] sm:$0xf] %v1116
        %1118 = vst [vmem:[#allocation5 + $0x4] sm:$0xf] %v1110
        %v1119 = vld [vmem:[#allocation5 + $0x8] sm:$0x1]
        %v1120 = vsel %vm613, %v1111, %v1119
        %1121 = vst [vmem:[#allocation5 + $0x8] sm:$0x1] %v1120
        %v1122 = vstv %s1085
        %v1123 = vmul.f32 %v1078, %v1122
        %v1124 = vmul.f32 %v1079, %v1122
        %v1125 = vpack.c.bf16 %v1124, %v1123
        %v1127 = vunpack.c.l.b16 %v1125
        %v1128 = vunpack.c.h.b16 %v1125
        %v1129 = vpack.c.b16 %v1127, %v1127
        %v1130 = vpack.c.b16 %v1128, %v1128
        %v1132 = vshrl.u32 %v1129, 16
        %v1134 = vrot.slane %v1132, 7
        %v1135 = vshll.u32 %v1129, 16
        %v1137 = vor.u32 %v1134, %v1135
        %v1138 = vrot.slane %v1134, 4
        %v1140 = vshrl.u32 %v1130, 16
        %v1142 = vrot.slane %v1140, 7
        %v1143 = vshll.u32 %v1130, 16
        %v1145 = vor.u32 %v1142, %v1143
        %v1146 = vsel %vm725, %v1138, %v1145
        %v1147 = vrot.slane %v1142, 4
        %s1151 = scalar_lea.vmem [#allocation5], 108
        %v1152 = vld [vmem:[%s1151] sm:$0xf]
        %v1153 = vsel %vm888, %v1137, %v1152
        %1154 = vst [vmem:[%s1151] sm:$0xf] %v1153
        %1155 = vst [vmem:[%s1151 + $0x4] sm:$0xf] %v1146
        %v1156 = vld [vmem:[%s1151 + $0x8] sm:$0x1]
        %v1157 = vsel %vm613, %v1147, %v1156
        %1158 = vst [vmem:[%s1151 + $0x8] sm:$0x1] %v1157
        %v1159 = vld [vmem:[#allocation5] sm:$0xf]
        %v1160 = vld [vmem:[#allocation5 + $0x4] sm:$0xf]
        %v1161 = vld [vmem:[#allocation5 + $0xc] sm:$0xf]
        %v1162 = vld [vmem:[#allocation5 + $0x10] sm:$0xf]
        %v1163 = vld [vmem:[#allocation5 + $0x18] sm:$0xf]
        %v1164 = vld [vmem:[#allocation5 + $0x1c] sm:$0xf]
        %v1165 = vld [vmem:[#allocation5 + $0x24] sm:$0xf]
        %v1166 = vld [vmem:[#allocation5 + $0x28] sm:$0xf]
        %v1167 = vld [vmem:[#allocation5 + $0x30] sm:$0xf]
        %v1168 = vld [vmem:[#allocation5 + $0x34] sm:$0xf]
        %v1169 = vld [vmem:[#allocation5 + $0x3c] sm:$0xf]
        %v1170 = vld [vmem:[#allocation5 + $0x40] sm:$0xf]
        %v1171 = vld [vmem:[#allocation5 + $0x48] sm:$0xf]
        %v1172 = vld [vmem:[#allocation5 + $0x4c] sm:$0xf]
        %v1173 = vld [vmem:[#allocation5 + $0x54] sm:$0xf]
        %v1174 = vld [vmem:[#allocation5 + $0x58] sm:$0xf]
        %v1175 = vld [vmem:[#allocation5 + $0x8] sm:$0x1]
        %v1176 = vld [vmem:[#allocation5 + $0x14] sm:$0x1]
        %v1177 = vld [vmem:[#allocation5 + $0x20] sm:$0x1]
        %v1178 = vld [vmem:[#allocation5 + $0x2c] sm:$0x1]
        %v1179 = vld [vmem:[#allocation5 + $0x38] sm:$0x1]
        %v1180 = vld [vmem:[#allocation5 + $0x44] sm:$0x1]
        %v1181 = vld [vmem:[#allocation5 + $0x50] sm:$0x1]
        %v1182 = vld [vmem:[#allocation5 + $0x5c] sm:$0x1]
        %vm1183 = vsmask.f32 3328
        %vm1184 = vsmask.f32 7440
        %vm1185 = vmor %vm1183, %vm1184
        %v1187 = vshrl.u32 %v1159, 16
        %v1189 = vrot.slane %v1187, 4
        %v1190 = vshll.u32 %v1159, 16
        %v1192 = vrot.slane %v1190, 5
        %v1193 = vor.u32 %v1189, %v1192
        %v1194 = vrot.slane %v1193, 4
        %v1196 = vshll.u32 %v1160, 16
        %v1198 = vrot.slane %v1196, 5
        %v1199 = vsel %vm1185, %v1194, %v1198
        %v1200 = vshrl.u32 %v1160, 16
        %v1202 = vrot.slane %v1200, 4
        %v1203 = vor.u32 %v1202, %v1198
        %v1204 = vrot.slane %v1203, 4
        %v1206 = vshll.u32 %v1175, 16
        %v1208 = vrot.slane %v1206, 5
        %v1209 = vsel %vm1185, %v1204, %v1208
        %v1211 = vshrl.u32 %v1161, 16
        %v1213 = vrot.slane %v1211, 4
        %v1214 = vshll.u32 %v1161, 16
        %v1216 = vrot.slane %v1214, 5
        %v1217 = vor.u32 %v1213, %v1216
        %v1218 = vrot.slane %v1217, 4
        %v1220 = vshll.u32 %v1162, 16
        %v1222 = vrot.slane %v1220, 5
        %v1223 = vsel %vm1185, %v1218, %v1222
        %v1224 = vshrl.u32 %v1162, 16
        %v1226 = vrot.slane %v1224, 4
        %v1227 = vor.u32 %v1226, %v1222
        %v1228 = vrot.slane %v1227, 4
        %v1230 = vshll.u32 %v1176, 16
        %v1232 = vrot.slane %v1230, 5
        %v1233 = vsel %vm1185, %v1228, %v1232
        %v1235 = vshrl.u32 %v1163, 16
        %v1237 = vrot.slane %v1235, 4
        %v1238 = vshll.u32 %v1163, 16
        %v1240 = vrot.slane %v1238, 5
        %v1241 = vor.u32 %v1237, %v1240
        %v1242 = vrot.slane %v1241, 4
        %v1244 = vshll.u32 %v1164, 16
        %v1246 = vrot.slane %v1244, 5
        %v1247 = vsel %vm1185, %v1242, %v1246
        %v1248 = vshrl.u32 %v1164, 16
        %v1250 = vrot.slane %v1248, 4
        %v1251 = vor.u32 %v1250, %v1246
        %v1252 = vrot.slane %v1251, 4
        %v1254 = vshll.u32 %v1177, 16
        %v1256 = vrot.slane %v1254, 5
        %v1257 = vsel %vm1185, %v1252, %v1256
        %v1259 = vshrl.u32 %v1165, 16
        %v1261 = vrot.slane %v1259, 4
        %v1262 = vshll.u32 %v1165, 16
        %v1264 = vrot.slane %v1262, 5
        %v1265 = vor.u32 %v1261, %v1264
        %v1266 = vrot.slane %v1265, 4
        %v1268 = vshll.u32 %v1166, 16
        %v1270 = vrot.slane %v1268, 5
        %v1271 = vsel %vm1185, %v1266, %v1270
        %v1272 = vshrl.u32 %v1166, 16
        %v1274 = vrot.slane %v1272, 4
        %v1275 = vor.u32 %v1274, %v1270
        %v1276 = vrot.slane %v1275, 4
        %v1278 = vshll.u32 %v1178, 16
        %v1280 = vrot.slane %v1278, 5
        %v1281 = vsel %vm1185, %v1276, %v1280
        %v1283 = vshrl.u32 %v1167, 16
        %v1285 = vrot.slane %v1283, 4
        %v1286 = vshll.u32 %v1167, 16
        %v1288 = vrot.slane %v1286, 5
        %v1289 = vor.u32 %v1285, %v1288
        %v1290 = vrot.slane %v1289, 4
        %v1292 = vshll.u32 %v1168, 16
        %v1294 = vrot.slane %v1292, 5
        %v1295 = vsel %vm1185, %v1290, %v1294
        %v1296 = vshrl.u32 %v1168, 16
        %v1298 = vrot.slane %v1296, 4
        %v1299 = vor.u32 %v1298, %v1294
        %v1300 = vrot.slane %v1299, 4
        %v1302 = vshll.u32 %v1179, 16
        %v1304 = vrot.slane %v1302, 5
        %v1305 = vsel %vm1185, %v1300, %v1304
        %v1307 = vshrl.u32 %v1169, 16
        %v1309 = vrot.slane %v1307, 4
        %v1310 = vshll.u32 %v1169, 16
        %v1312 = vrot.slane %v1310, 5
        %v1313 = vor.u32 %v1309, %v1312
        %v1314 = vrot.slane %v1313, 4
        %v1316 = vshll.u32 %v1170, 16
        %v1318 = vrot.slane %v1316, 5
        %v1319 = vsel %vm1185, %v1314, %v1318
        %v1320 = vshrl.u32 %v1170, 16
        %v1322 = vrot.slane %v1320, 4
        %v1323 = vor.u32 %v1322, %v1318
        %v1324 = vrot.slane %v1323, 4
        %v1326 = vshll.u32 %v1180, 16
        %v1328 = vrot.slane %v1326, 5
        %v1329 = vsel %vm1185, %v1324, %v1328
        %v1331 = vshrl.u32 %v1171, 16
        %v1333 = vrot.slane %v1331, 4
        %v1334 = vshll.u32 %v1171, 16
        %v1336 = vrot.slane %v1334, 5
        %v1337 = vor.u32 %v1333, %v1336
        %v1338 = vrot.slane %v1337, 4
        %v1340 = vshll.u32 %v1172, 16
        %v1342 = vrot.slane %v1340, 5
        %v1343 = vsel %vm1185, %v1338, %v1342
        %v1344 = vshrl.u32 %v1172, 16
        %v1346 = vrot.slane %v1344, 4
        %v1347 = vor.u32 %v1346, %v1342
        %v1348 = vrot.slane %v1347, 4
        %v1350 = vshll.u32 %v1181, 16
        %v1352 = vrot.slane %v1350, 5
        %v1353 = vsel %vm1185, %v1348, %v1352
        %v1355 = vshrl.u32 %v1173, 16
        %v1357 = vrot.slane %v1355, 4
        %v1358 = vshll.u32 %v1173, 16
        %v1360 = vrot.slane %v1358, 5
        %v1361 = vor.u32 %v1357, %v1360
        %v1362 = vrot.slane %v1361, 4
        %v1364 = vshll.u32 %v1174, 16
        %v1366 = vrot.slane %v1364, 5
        %v1367 = vsel %vm1185, %v1362, %v1366
        %v1368 = vshrl.u32 %v1174, 16
        %v1370 = vrot.slane %v1368, 4
        %v1371 = vor.u32 %v1370, %v1366
        %v1372 = vrot.slane %v1371, 4
        %v1374 = vshll.u32 %v1182, 16
        %v1376 = vrot.slane %v1374, 5
        %v1377 = vsel %vm1185, %v1372, %v1376
        %v1378 = vld [vmem:[#allocation5] sm:$0xe]
        %v1379 = vld [vmem:[#allocation5 + $0xc] sm:$0xe]
        %v1380 = vld [vmem:[#allocation5 + $0x18] sm:$0xe]
        %v1381 = vld [vmem:[#allocation5 + $0x24] sm:$0xe]
        %v1382 = vld [vmem:[#allocation5 + $0x30] sm:$0xe]
        %v1383 = vld [vmem:[#allocation5 + $0x3c] sm:$0xe]
        %v1384 = vld [vmem:[#allocation5 + $0x48] sm:$0xe]
        %v1385 = vld [vmem:[#allocation5 + $0x54] sm:$0xe]
        %vm1410 = vcmask 1042432
        %vm1411 = vcmask 1046532
        %vm1412 = vmor %vm1410, %vm1411
        %v1413 = vrot.slane %v1378, 5
        %v1414 = vrot.slane %v1413, 4
        %v1415 = vrot.slane %v1160, 5
        %v1416 = vsel %vm1412, %v1414, %v1415
        %v1417 = vrot.slane %v1415, 4
        %v1418 = vrot.slane %v1175, 5
        %v1419 = vsel %vm1412, %v1417, %v1418
        %v1420 = vrot.slane %v1379, 5
        %v1421 = vrot.slane %v1420, 4
        %v1422 = vrot.slane %v1162, 5
        %v1423 = vsel %vm1412, %v1421, %v1422
        %v1424 = vrot.slane %v1422, 4
        %v1425 = vrot.slane %v1176, 5
        %v1426 = vsel %vm1412, %v1424, %v1425
        %v1427 = vrot.slane %v1380, 5
        %v1428 = vrot.slane %v1427, 4
        %v1429 = vrot.slane %v1164, 5
        %v1430 = vsel %vm1412, %v1428, %v1429
        %v1431 = vrot.slane %v1429, 4
        %v1432 = vrot.slane %v1177, 5
        %v1433 = vsel %vm1412, %v1431, %v1432
        %v1434 = vrot.slane %v1381, 5
        %v1435 = vrot.slane %v1434, 4
        %v1436 = vrot.slane %v1166, 5
        %v1437 = vsel %vm1412, %v1435, %v1436
        %v1438 = vrot.slane %v1436, 4
        %v1439 = vrot.slane %v1178, 5
        %v1440 = vsel %vm1412, %v1438, %v1439
        %v1441 = vrot.slane %v1382, 5
        %v1442 = vrot.slane %v1441, 4
        %v1443 = vrot.slane %v1168, 5
        %v1444 = vsel %vm1412, %v1442, %v1443
        %v1445 = vrot.slane %v1443, 4
        %v1446 = vrot.slane %v1179, 5
        %v1447 = vsel %vm1412, %v1445, %v1446
        %v1448 = vrot.slane %v1383, 5
        %v1449 = vrot.slane %v1448, 4
        %v1450 = vrot.slane %v1170, 5
        %v1451 = vsel %vm1412, %v1449, %v1450
        %v1452 = vrot.slane %v1450, 4
        %v1453 = vrot.slane %v1180, 5
        %v1454 = vsel %vm1412, %v1452, %v1453
        %v1455 = vrot.slane %v1384, 5
        %v1456 = vrot.slane %v1455, 4
        %v1457 = vrot.slane %v1172, 5
        %v1458 = vsel %vm1412, %v1456, %v1457
        %v1459 = vrot.slane %v1457, 4
        %v1460 = vrot.slane %v1181, 5
        %v1461 = vsel %vm1412, %v1459, %v1460
        %v1462 = vrot.slane %v1385, 5
        %v1463 = vrot.slane %v1462, 4
        %v1464 = vrot.slane %v1174, 5
        %v1465 = vsel %vm1412, %v1463, %v1464
        %v1466 = vrot.slane %v1464, 4
        %v1467 = vrot.slane %v1182, 5
        %v1468 = vsel %vm1412, %v1466, %v1467
        %v1469 = vld [vmem:[%s886] sm:$0xf]
        %v1470 = vld [vmem:[%s886 + $0x4] sm:$0xf]
        %v1471 = vld [vmem:[%s886 + $0xc] sm:$0xf]
        %v1472 = vld [vmem:[%s886 + $0x10] sm:$0xf]
        %v1473 = vld [vmem:[%s886 + $0x18] sm:$0xf]
        %v1474 = vld [vmem:[%s886 + $0x1c] sm:$0xf]
        %v1475 = vld [vmem:[%s886 + $0x24] sm:$0xf]
        %v1476 = vld [vmem:[%s886 + $0x28] sm:$0xf]
        %v1477 = vld [vmem:[%s886 + $0x30] sm:$0xf]
        %v1478 = vld [vmem:[%s886 + $0x34] sm:$0xf]
        %v1479 = vld [vmem:[%s886 + $0x3c] sm:$0xf]
        %v1480 = vld [vmem:[%s886 + $0x40] sm:$0xf]
        %v1481 = vld [vmem:[%s886 + $0x48] sm:$0xf]
        %v1482 = vld [vmem:[%s886 + $0x4c] sm:$0xf]
        %v1483 = vld [vmem:[%s886 + $0x54] sm:$0xf]
        %v1484 = vld [vmem:[%s886 + $0x58] sm:$0xf]
        %v1485 = vld [vmem:[%s886 + $0x8] sm:$0x1]
        %v1486 = vld [vmem:[%s886 + $0x14] sm:$0x1]
        %v1487 = vld [vmem:[%s886 + $0x20] sm:$0x1]
        %v1488 = vld [vmem:[%s886 + $0x2c] sm:$0x1]
        %v1489 = vld [vmem:[%s886 + $0x38] sm:$0x1]
        %v1490 = vld [vmem:[%s886 + $0x44] sm:$0x1]
        %v1491 = vld [vmem:[%s886 + $0x50] sm:$0x1]
        %v1492 = vld [vmem:[%s886 + $0x5c] sm:$0x1]
        %v1494 = vshrl.u32 %v1469, 16
        %v1496 = vrot.slane %v1494, 4
        %v1497 = vshll.u32 %v1469, 16
        %v1499 = vrot.slane %v1497, 5
        %v1500 = vor.u32 %v1496, %v1499
        %v1501 = vrot.slane %v1500, 4
        %v1503 = vshll.u32 %v1470, 16
        %v1505 = vrot.slane %v1503, 5
        %v1506 = vsel %vm1185, %v1501, %v1505
        %v1507 = vshrl.u32 %v1470, 16
        %v1509 = vrot.slane %v1507, 4
        %v1510 = vor.u32 %v1509, %v1505
        %v1511 = vrot.slane %v1510, 4
        %v1513 = vshll.u32 %v1485, 16
        %v1515 = vrot.slane %v1513, 5
        %v1516 = vsel %vm1185, %v1511, %v1515
        %v1518 = vshrl.u32 %v1471, 16
        %v1520 = vrot.slane %v1518, 4
        %v1521 = vshll.u32 %v1471, 16
        %v1523 = vrot.slane %v1521, 5
        %v1524 = vor.u32 %v1520, %v1523
        %v1525 = vrot.slane %v1524, 4
        %v1527 = vshll.u32 %v1472, 16
        %v1529 = vrot.slane %v1527, 5
        %v1530 = vsel %vm1185, %v1525, %v1529
        %v1531 = vshrl.u32 %v1472, 16
        %v1533 = vrot.slane %v1531, 4
        %v1534 = vor.u32 %v1533, %v1529
        %v1535 = vrot.slane %v1534, 4
        %v1537 = vshll.u32 %v1486, 16
        %v1539 = vrot.slane %v1537, 5
        %v1540 = vsel %vm1185, %v1535, %v1539
        %v1542 = vshrl.u32 %v1473, 16
        %v1544 = vrot.slane %v1542, 4
        %v1545 = vshll.u32 %v1473, 16
        %v1547 = vrot.slane %v1545, 5
        %v1548 = vor.u32 %v1544, %v1547
        %v1549 = vrot.slane %v1548, 4
        %v1551 = vshll.u32 %v1474, 16
        %v1553 = vrot.slane %v1551, 5
        %v1554 = vsel %vm1185, %v1549, %v1553
        %v1555 = vshrl.u32 %v1474, 16
        %v1557 = vrot.slane %v1555, 4
        %v1558 = vor.u32 %v1557, %v1553
        %v1559 = vrot.slane %v1558, 4
        %v1561 = vshll.u32 %v1487, 16
        %v1563 = vrot.slane %v1561, 5
        %v1564 = vsel %vm1185, %v1559, %v1563
        %v1566 = vshrl.u32 %v1475, 16
        %v1568 = vrot.slane %v1566, 4
        %v1569 = vshll.u32 %v1475, 16
        %v1571 = vrot.slane %v1569, 5
        %v1572 = vor.u32 %v1568, %v1571
        %v1573 = vrot.slane %v1572, 4
        %v1575 = vshll.u32 %v1476, 16
        %v1577 = vrot.slane %v1575, 5
        %v1578 = vsel %vm1185, %v1573, %v1577
        %v1579 = vshrl.u32 %v1476, 16
        %v1581 = vrot.slane %v1579, 4
        %v1582 = vor.u32 %v1581, %v1577
        %v1583 = vrot.slane %v1582, 4
        %v1585 = vshll.u32 %v1488, 16
        %v1587 = vrot.slane %v1585, 5
        %v1588 = vsel %vm1185, %v1583, %v1587
        %v1590 = vshrl.u32 %v1477, 16
        %v1592 = vrot.slane %v1590, 4
        %v1593 = vshll.u32 %v1477, 16
        %v1595 = vrot.slane %v1593, 5
        %v1596 = vor.u32 %v1592, %v1595
        %v1597 = vrot.slane %v1596, 4
        %v1599 = vshll.u32 %v1478, 16
        %v1601 = vrot.slane %v1599, 5
        %v1602 = vsel %vm1185, %v1597, %v1601
        %v1603 = vshrl.u32 %v1478, 16
        %v1605 = vrot.slane %v1603, 4
        %v1606 = vor.u32 %v1605, %v1601
        %v1607 = vrot.slane %v1606, 4
        %v1609 = vshll.u32 %v1489, 16
        %v1611 = vrot.slane %v1609, 5
        %v1612 = vsel %vm1185, %v1607, %v1611
        %v1614 = vshrl.u32 %v1479, 16
        %v1616 = vrot.slane %v1614, 4
        %v1617 = vshll.u32 %v1479, 16
        %v1619 = vrot.slane %v1617, 5
        %v1620 = vor.u32 %v1616, %v1619
        %v1621 = vrot.slane %v1620, 4
        %v1623 = vshll.u32 %v1480, 16
        %v1625 = vrot.slane %v1623, 5
        %v1626 = vsel %vm1185, %v1621, %v1625
        %v1627 = vshrl.u32 %v1480, 16
        %v1629 = vrot.slane %v1627, 4
        %v1630 = vor.u32 %v1629, %v1625
        %v1631 = vrot.slane %v1630, 4
        %v1633 = vshll.u32 %v1490, 16
        %v1635 = vrot.slane %v1633, 5
        %v1636 = vsel %vm1185, %v1631, %v1635
        %v1638 = vshrl.u32 %v1481, 16
        %v1640 = vrot.slane %v1638, 4
        %v1641 = vshll.u32 %v1481, 16
        %v1643 = vrot.slane %v1641, 5
        %v1644 = vor.u32 %v1640, %v1643
        %v1645 = vrot.slane %v1644, 4
        %v1647 = vshll.u32 %v1482, 16
        %v1649 = vrot.slane %v1647, 5
        %v1650 = vsel %vm1185, %v1645, %v1649
        %v1651 = vshrl.u32 %v1482, 16
        %v1653 = vrot.slane %v1651, 4
        %v1654 = vor.u32 %v1653, %v1649
        %v1655 = vrot.slane %v1654, 4
        %v1657 = vshll.u32 %v1491, 16
        %v1659 = vrot.slane %v1657, 5
        %v1660 = vsel %vm1185, %v1655, %v1659
        %v1662 = vshrl.u32 %v1483, 16
        %v1664 = vrot.slane %v1662, 4
        %v1665 = vshll.u32 %v1483, 16
        %v1667 = vrot.slane %v1665, 5
        %v1668 = vor.u32 %v1664, %v1667
        %v1669 = vrot.slane %v1668, 4
        %v1671 = vshll.u32 %v1484, 16
        %v1673 = vrot.slane %v1671, 5
        %v1674 = vsel %vm1185, %v1669, %v1673
        %v1675 = vshrl.u32 %v1484, 16
        %v1677 = vrot.slane %v1675, 4
        %v1678 = vor.u32 %v1677, %v1673
        %v1679 = vrot.slane %v1678, 4
        %v1681 = vshll.u32 %v1492, 16
        %v1683 = vrot.slane %v1681, 5
        %v1684 = vsel %vm1185, %v1679, %v1683
        %v1685 = vld [vmem:[%s886] sm:$0xe]
        %v1686 = vld [vmem:[%s886 + $0xc] sm:$0xe]
        %v1687 = vld [vmem:[%s886 + $0x18] sm:$0xe]
        %v1688 = vld [vmem:[%s886 + $0x24] sm:$0xe]
        %v1689 = vld [vmem:[%s886 + $0x30] sm:$0xe]
        %v1690 = vld [vmem:[%s886 + $0x3c] sm:$0xe]
        %v1691 = vld [vmem:[%s886 + $0x48] sm:$0xe]
        %v1692 = vld [vmem:[%s886 + $0x54] sm:$0xe]
        %v1717 = vrot.slane %v1685, 5
        %v1718 = vrot.slane %v1717, 4
        %v1719 = vrot.slane %v1470, 5
        %v1720 = vsel %vm1412, %v1718, %v1719
        %v1721 = vrot.slane %v1719, 4
        %v1722 = vrot.slane %v1485, 5
        %v1723 = vsel %vm1412, %v1721, %v1722
        %v1724 = vrot.slane %v1686, 5
        %v1725 = vrot.slane %v1724, 4
        %v1726 = vrot.slane %v1472, 5
        %v1727 = vsel %vm1412, %v1725, %v1726
        %v1728 = vrot.slane %v1726, 4
        %v1729 = vrot.slane %v1486, 5
        %v1730 = vsel %vm1412, %v1728, %v1729
        %v1731 = vrot.slane %v1687, 5
        %v1732 = vrot.slane %v1731, 4
        %v1733 = vrot.slane %v1474, 5
        %v1734 = vsel %vm1412, %v1732, %v1733
        %v1735 = vrot.slane %v1733, 4
        %v1736 = vrot.slane %v1487, 5
        %v1737 = vsel %vm1412, %v1735, %v1736
        %v1738 = vrot.slane %v1688, 5
        %v1739 = vrot.slane %v1738, 4
        %v1740 = vrot.slane %v1476, 5
        %v1741 = vsel %vm1412, %v1739, %v1740
        %v1742 = vrot.slane %v1740, 4
        %v1743 = vrot.slane %v1488, 5
        %v1744 = vsel %vm1412, %v1742, %v1743
        %v1745 = vrot.slane %v1689, 5
        %v1746 = vrot.slane %v1745, 4
        %v1747 = vrot.slane %v1478, 5
        %v1748 = vsel %vm1412, %v1746, %v1747
        %v1749 = vrot.slane %v1747, 4
        %v1750 = vrot.slane %v1489, 5
        %v1751 = vsel %vm1412, %v1749, %v1750
        %v1752 = vrot.slane %v1690, 5
        %v1753 = vrot.slane %v1752, 4
        %v1754 = vrot.slane %v1480, 5
        %v1755 = vsel %vm1412, %v1753, %v1754
        %v1756 = vrot.slane %v1754, 4
        %v1757 = vrot.slane %v1490, 5
        %v1758 = vsel %vm1412, %v1756, %v1757
        %v1759 = vrot.slane %v1691, 5
        %v1760 = vrot.slane %v1759, 4
        %v1761 = vrot.slane %v1482, 5
        %v1762 = vsel %vm1412, %v1760, %v1761
        %v1763 = vrot.slane %v1761, 4
        %v1764 = vrot.slane %v1491, 5
        %v1765 = vsel %vm1412, %v1763, %v1764
        %v1766 = vrot.slane %v1692, 5
        %v1767 = vrot.slane %v1766, 4
        %v1768 = vrot.slane %v1484, 5
        %v1769 = vsel %vm1412, %v1767, %v1768
        %v1770 = vrot.slane %v1768, 4
        %v1771 = vrot.slane %v1492, 5
        %v1772 = vsel %vm1412, %v1770, %v1771
        %s1773 = scalar_lea.vmem [#allocation5], 24
        %v1774 = vld [vmem:[%s1773] sm:$0xf]
        %v1775 = vld [vmem:[%s1773 + $0x4] sm:$0xf]
        %v1776 = vld [vmem:[%s1773 + $0xc] sm:$0xf]
        %v1777 = vld [vmem:[%s1773 + $0x10] sm:$0xf]
        %v1778 = vld [vmem:[%s1773 + $0x18] sm:$0xf]
        %v1779 = vld [vmem:[%s1773 + $0x1c] sm:$0xf]
        %v1780 = vld [vmem:[%s1773 + $0x24] sm:$0xf]
        %v1781 = vld [vmem:[%s1773 + $0x28] sm:$0xf]
        %v1782 = vld [vmem:[%s1773 + $0x30] sm:$0xf]
        %v1783 = vld [vmem:[%s1773 + $0x34] sm:$0xf]
        %v1784 = vld [vmem:[%s1773 + $0x3c] sm:$0xf]
        %v1785 = vld [vmem:[%s1773 + $0x40] sm:$0xf]
        %v1786 = vld [vmem:[%s1773 + $0x48] sm:$0xf]
        %v1787 = vld [vmem:[%s1773 + $0x4c] sm:$0xf]
        %v1788 = vld [vmem:[%s1773 + $0x54] sm:$0xf]
        %v1789 = vld [vmem:[%s1773 + $0x58] sm:$0xf]
        %v1790 = vld [vmem:[%s1773 + $0x8] sm:$0x1]
        %v1791 = vld [vmem:[%s1773 + $0x14] sm:$0x1]
        %v1792 = vld [vmem:[%s1773 + $0x20] sm:$0x1]
        %v1793 = vld [vmem:[%s1773 + $0x2c] sm:$0x1]
        %v1794 = vld [vmem:[%s1773 + $0x38] sm:$0x1]
        %v1795 = vld [vmem:[%s1773 + $0x44] sm:$0x1]
        %v1796 = vld [vmem:[%s1773 + $0x50] sm:$0x1]
        %v1797 = vld [vmem:[%s1773 + $0x5c] sm:$0x1]
        %v1799 = vshrl.u32 %v1774, 16
        %v1801 = vrot.slane %v1799, 4
        %v1802 = vshll.u32 %v1774, 16
        %v1804 = vrot.slane %v1802, 5
        %v1805 = vor.u32 %v1801, %v1804
        %v1806 = vrot.slane %v1805, 4
        %v1808 = vshll.u32 %v1775, 16
        %v1810 = vrot.slane %v1808, 5
        %v1811 = vsel %vm1185, %v1806, %v1810
        %v1812 = vshrl.u32 %v1775, 16
        %v1814 = vrot.slane %v1812, 4
        %v1815 = vor.u32 %v1814, %v1810
        %v1816 = vrot.slane %v1815, 4
        %v1818 = vshll.u32 %v1790, 16
        %v1820 = vrot.slane %v1818, 5
        %v1821 = vsel %vm1185, %v1816, %v1820
        %v1823 = vshrl.u32 %v1776, 16
        %v1825 = vrot.slane %v1823, 4
        %v1826 = vshll.u32 %v1776, 16
        %v1828 = vrot.slane %v1826, 5
        %v1829 = vor.u32 %v1825, %v1828
        %v1830 = vrot.slane %v1829, 4
        %v1832 = vshll.u32 %v1777, 16
        %v1834 = vrot.slane %v1832, 5
        %v1835 = vsel %vm1185, %v1830, %v1834
        %v1836 = vshrl.u32 %v1777, 16
        %v1838 = vrot.slane %v1836, 4
        %v1839 = vor.u32 %v1838, %v1834
        %v1840 = vrot.slane %v1839, 4
        %v1842 = vshll.u32 %v1791, 16
        %v1844 = vrot.slane %v1842, 5
        %v1845 = vsel %vm1185, %v1840, %v1844
        %v1847 = vshrl.u32 %v1778, 16
        %v1849 = vrot.slane %v1847, 4
        %v1850 = vshll.u32 %v1778, 16
        %v1852 = vrot.slane %v1850, 5
        %v1853 = vor.u32 %v1849, %v1852
        %v1854 = vrot.slane %v1853, 4
        %v1856 = vshll.u32 %v1779, 16
        %v1858 = vrot.slane %v1856, 5
        %v1859 = vsel %vm1185, %v1854, %v1858
        %v1860 = vshrl.u32 %v1779, 16
        %v1862 = vrot.slane %v1860, 4
        %v1863 = vor.u32 %v1862, %v1858
        %v1864 = vrot.slane %v1863, 4
        %v1866 = vshll.u32 %v1792, 16
        %v1868 = vrot.slane %v1866, 5
        %v1869 = vsel %vm1185, %v1864, %v1868
        %v1871 = vshrl.u32 %v1780, 16
        %v1873 = vrot.slane %v1871, 4
        %v1874 = vshll.u32 %v1780, 16
        %v1876 = vrot.slane %v1874, 5
        %v1877 = vor.u32 %v1873, %v1876
        %v1878 = vrot.slane %v1877, 4
        %v1880 = vshll.u32 %v1781, 16
        %v1882 = vrot.slane %v1880, 5
        %v1883 = vsel %vm1185, %v1878, %v1882
        %v1884 = vshrl.u32 %v1781, 16
        %v1886 = vrot.slane %v1884, 4
        %v1887 = vor.u32 %v1886, %v1882
        %v1888 = vrot.slane %v1887, 4
        %v1890 = vshll.u32 %v1793, 16
        %v1892 = vrot.slane %v1890, 5
        %v1893 = vsel %vm1185, %v1888, %v1892
        %v1895 = vshrl.u32 %v1782, 16
        %v1897 = vrot.slane %v1895, 4
        %v1898 = vshll.u32 %v1782, 16
        %v1900 = vrot.slane %v1898, 5
        %v1901 = vor.u32 %v1897, %v1900
        %v1902 = vrot.slane %v1901, 4
        %v1904 = vshll.u32 %v1783, 16
        %v1906 = vrot.slane %v1904, 5
        %v1907 = vsel %vm1185, %v1902, %v1906
        %v1908 = vshrl.u32 %v1783, 16
        %v1910 = vrot.slane %v1908, 4
        %v1911 = vor.u32 %v1910, %v1906
        %v1912 = vrot.slane %v1911, 4
        %v1914 = vshll.u32 %v1794, 16
        %v1916 = vrot.slane %v1914, 5
        %v1917 = vsel %vm1185, %v1912, %v1916
        %v1919 = vshrl.u32 %v1784, 16
        %v1921 = vrot.slane %v1919, 4
        %v1922 = vshll.u32 %v1784, 16
        %v1924 = vrot.slane %v1922, 5
        %v1925 = vor.u32 %v1921, %v1924
        %v1926 = vrot.slane %v1925, 4
        %v1928 = vshll.u32 %v1785, 16
        %v1930 = vrot.slane %v1928, 5
        %v1931 = vsel %vm1185, %v1926, %v1930
        %v1932 = vshrl.u32 %v1785, 16
        %v1934 = vrot.slane %v1932, 4
        %v1935 = vor.u32 %v1934, %v1930
        %v1936 = vrot.slane %v1935, 4
        %v1938 = vshll.u32 %v1795, 16
        %v1940 = vrot.slane %v1938, 5
        %v1941 = vsel %vm1185, %v1936, %v1940
        %v1943 = vshrl.u32 %v1786, 16
        %v1945 = vrot.slane %v1943, 4
        %v1946 = vshll.u32 %v1786, 16
        %v1948 = vrot.slane %v1946, 5
        %v1949 = vor.u32 %v1945, %v1948
        %v1950 = vrot.slane %v1949, 4
        %v1952 = vshll.u32 %v1787, 16
        %v1954 = vrot.slane %v1952, 5
        %v1955 = vsel %vm1185, %v1950, %v1954
        %v1956 = vshrl.u32 %v1787, 16
        %v1958 = vrot.slane %v1956, 4
        %v1959 = vor.u32 %v1958, %v1954
        %v1960 = vrot.slane %v1959, 4
        %v1962 = vshll.u32 %v1796, 16
        %v1964 = vrot.slane %v1962, 5
        %v1965 = vsel %vm1185, %v1960, %v1964
        %v1967 = vshrl.u32 %v1788, 16
        %v1969 = vrot.slane %v1967, 4
        %v1970 = vshll.u32 %v1788, 16
        %v1972 = vrot.slane %v1970, 5
        %v1973 = vor.u32 %v1969, %v1972
        %v1974 = vrot.slane %v1973, 4
        %v1976 = vshll.u32 %v1789, 16
        %v1978 = vrot.slane %v1976, 5
        %v1979 = vsel %vm1185, %v1974, %v1978
        %v1980 = vshrl.u32 %v1789, 16
        %v1982 = vrot.slane %v1980, 4
        %v1983 = vor.u32 %v1982, %v1978
        %v1984 = vrot.slane %v1983, 4
        %v1986 = vshll.u32 %v1797, 16
        %v1988 = vrot.slane %v1986, 5
        %v1989 = vsel %vm1185, %v1984, %v1988
        %v1990 = vld [vmem:[%s1773] sm:$0xe]
        %v1991 = vld [vmem:[%s1773 + $0xc] sm:$0xe]
        %v1992 = vld [vmem:[%s1773 + $0x18] sm:$0xe]
        %v1993 = vld [vmem:[%s1773 + $0x24] sm:$0xe]
        %v1994 = vld [vmem:[%s1773 + $0x30] sm:$0xe]
        %v1995 = vld [vmem:[%s1773 + $0x3c] sm:$0xe]
        %v1996 = vld [vmem:[%s1773 + $0x48] sm:$0xe]
        %v1997 = vld [vmem:[%s1773 + $0x54] sm:$0xe]
        %v2022 = vrot.slane %v1990, 5
        %v2023 = vrot.slane %v2022, 4
        %v2024 = vrot.slane %v1775, 5
        %v2025 = vsel %vm1412, %v2023, %v2024
        %v2026 = vrot.slane %v2024, 4
        %v2027 = vrot.slane %v1790, 5
        %v2028 = vsel %vm1412, %v2026, %v2027
        %v2029 = vrot.slane %v1991, 5
        %v2030 = vrot.slane %v2029, 4
        %v2031 = vrot.slane %v1777, 5
        %v2032 = vsel %vm1412, %v2030, %v2031
        %v2033 = vrot.slane %v2031, 4
        %v2034 = vrot.slane %v1791, 5
        %v2035 = vsel %vm1412, %v2033, %v2034
        %v2036 = vrot.slane %v1992, 5
        %v2037 = vrot.slane %v2036, 4
        %v2038 = vrot.slane %v1779, 5
        %v2039 = vsel %vm1412, %v2037, %v2038
        %v2040 = vrot.slane %v2038, 4
        %v2041 = vrot.slane %v1792, 5
        %v2042 = vsel %vm1412, %v2040, %v2041
        %v2043 = vrot.slane %v1993, 5
        %v2044 = vrot.slane %v2043, 4
        %v2045 = vrot.slane %v1781, 5
        %v2046 = vsel %vm1412, %v2044, %v2045
        %v2047 = vrot.slane %v2045, 4
        %v2048 = vrot.slane %v1793, 5
        %v2049 = vsel %vm1412, %v2047, %v2048
        %v2050 = vrot.slane %v1994, 5
        %v2051 = vrot.slane %v2050, 4
        %v2052 = vrot.slane %v1783, 5
        %v2053 = vsel %vm1412, %v2051, %v2052
        %v2054 = vrot.slane %v2052, 4
        %v2055 = vrot.slane %v1794, 5
        %v2056 = vsel %vm1412, %v2054, %v2055
        %v2057 = vrot.slane %v1995, 5
        %v2058 = vrot.slane %v2057, 4
        %v2059 = vrot.slane %v1785, 5
        %v2060 = vsel %vm1412, %v2058, %v2059
        %v2061 = vrot.slane %v2059, 4
        %v2062 = vrot.slane %v1795, 5
        %v2063 = vsel %vm1412, %v2061, %v2062
        %v2064 = vrot.slane %v1996, 5
        %v2065 = vrot.slane %v2064, 4
        %v2066 = vrot.slane %v1787, 5
        %v2067 = vsel %vm1412, %v2065, %v2066
        %v2068 = vrot.slane %v2066, 4
        %v2069 = vrot.slane %v1796, 5
        %v2070 = vsel %vm1412, %v2068, %v2069
        %v2071 = vrot.slane %v1997, 5
        %v2072 = vrot.slane %v2071, 4
        %v2073 = vrot.slane %v1789, 5
        %v2074 = vsel %vm1412, %v2072, %v2073
        %v2075 = vrot.slane %v2073, 4
        %v2076 = vrot.slane %v1797, 5
        %v2077 = vsel %vm1412, %v2075, %v2076
        %v2086 = vunpack.c.l.b16 %v1159
        %v2087 = vunpack.c.l.b16 %v1160
        %v2088 = vunpack.c.l.b16 %v1161
        %v2089 = vunpack.c.l.b16 %v1162
        %v2090 = vunpack.c.l.b16 %v1163
        %v2091 = vunpack.c.l.b16 %v1164
        %v2092 = vunpack.c.l.b16 %v1165
        %v2093 = vunpack.c.l.b16 %v1166
        %v2094 = vunpack.c.l.b16 %v1167
        %v2095 = vunpack.c.l.b16 %v1168
        %v2096 = vunpack.c.l.b16 %v1169
        %v2097 = vunpack.c.l.b16 %v1170
        %v2098 = vunpack.c.l.b16 %v1171
        %v2099 = vunpack.c.l.b16 %v1172
        %v2100 = vunpack.c.l.b16 %v1173
        %v2101 = vunpack.c.l.b16 %v1174
        %v2102 = vpack.c.b16 %v2087, %v2086
        %v2103 = vpack.c.b16 %v2089, %v2088
        %v2104 = vpack.c.b16 %v2091, %v2090
        %v2105 = vpack.c.b16 %v2093, %v2092
        %v2106 = vpack.c.b16 %v2095, %v2094
        %v2107 = vpack.c.b16 %v2097, %v2096
        %v2108 = vpack.c.b16 %v2099, %v2098
        %v2109 = vpack.c.b16 %v2101, %v2100
        %v2118 = vunpack.c.l.b16 %v1199
        %v2119 = vunpack.c.l.b16 %v1209
        %v2120 = vunpack.c.l.b16 %v1223
        %v2121 = vunpack.c.l.b16 %v1233
        %v2122 = vunpack.c.l.b16 %v1247
        %v2123 = vunpack.c.l.b16 %v1257
        %v2124 = vunpack.c.l.b16 %v1271
        %v2125 = vunpack.c.l.b16 %v1281
        %v2126 = vunpack.c.l.b16 %v1295
        %v2127 = vunpack.c.l.b16 %v1305
        %v2128 = vunpack.c.l.b16 %v1319
        %v2129 = vunpack.c.l.b16 %v1329
        %v2130 = vunpack.c.l.b16 %v1343
        %v2131 = vunpack.c.l.b16 %v1353
        %v2132 = vunpack.c.l.b16 %v1367
        %v2133 = vunpack.c.l.b16 %v1377
        %v2134 = vpack.c.b16 %v2119, %v2118
        %v2135 = vpack.c.b16 %v2121, %v2120
        %v2136 = vpack.c.b16 %v2123, %v2122
        %v2137 = vpack.c.b16 %v2125, %v2124
        %v2138 = vpack.c.b16 %v2127, %v2126
        %v2139 = vpack.c.b16 %v2129, %v2128
        %v2140 = vpack.c.b16 %v2131, %v2130
        %v2141 = vpack.c.b16 %v2133, %v2132
        %v2150 = vunpack.c.l.b16 %v1416
        %v2151 = vunpack.c.l.b16 %v1419
        %v2152 = vunpack.c.l.b16 %v1423
        %v2153 = vunpack.c.l.b16 %v1426
        %v2154 = vunpack.c.l.b16 %v1430
        %v2155 = vunpack.c.l.b16 %v1433
        %v2156 = vunpack.c.l.b16 %v1437
        %v2157 = vunpack.c.l.b16 %v1440
        %v2158 = vunpack.c.l.b16 %v1444
        %v2159 = vunpack.c.l.b16 %v1447
        %v2160 = vunpack.c.l.b16 %v1451
        %v2161 = vunpack.c.l.b16 %v1454
        %v2162 = vunpack.c.l.b16 %v1458
        %v2163 = vunpack.c.l.b16 %v1461
        %v2164 = vunpack.c.l.b16 %v1465
        %v2165 = vunpack.c.l.b16 %v1468
        %v2166 = vpack.c.b16 %v2151, %v2150
        %v2167 = vpack.c.b16 %v2153, %v2152
        %v2168 = vpack.c.b16 %v2155, %v2154
        %v2169 = vpack.c.b16 %v2157, %v2156
        %v2170 = vpack.c.b16 %v2159, %v2158
        %v2171 = vpack.c.b16 %v2161, %v2160
        %v2172 = vpack.c.b16 %v2163, %v2162
        %v2173 = vpack.c.b16 %v2165, %v2164
        %v2190 = vunpack.c.l.b16 %v1469
        %v2191 = vunpack.c.l.b16 %v1470
        %v2192 = vunpack.c.l.b16 %v1471
        %v2193 = vunpack.c.l.b16 %v1472
        %v2194 = vunpack.c.l.b16 %v1473
        %v2195 = vunpack.c.l.b16 %v1474
        %v2196 = vunpack.c.l.b16 %v1475
        %v2197 = vunpack.c.l.b16 %v1476
        %v2198 = vunpack.c.l.b16 %v1477
        %v2199 = vunpack.c.l.b16 %v1478
        %v2200 = vunpack.c.l.b16 %v1479
        %v2201 = vunpack.c.l.b16 %v1480
        %v2202 = vunpack.c.l.b16 %v1481
        %v2203 = vunpack.c.l.b16 %v1482
        %v2204 = vunpack.c.l.b16 %v1483
        %v2205 = vunpack.c.l.b16 %v1484
        %v2206 = vpack.c.b16 %v2191, %v2190
        %v2207 = vpack.c.b16 %v2193, %v2192
        %v2208 = vpack.c.b16 %v2195, %v2194
        %v2209 = vpack.c.b16 %v2197, %v2196
        %v2210 = vpack.c.b16 %v2199, %v2198
        %v2211 = vpack.c.b16 %v2201, %v2200
        %v2212 = vpack.c.b16 %v2203, %v2202
        %v2213 = vpack.c.b16 %v2205, %v2204
        %v2222 = vunpack.c.l.b16 %v1506
        %v2223 = vunpack.c.l.b16 %v1516
        %v2224 = vunpack.c.l.b16 %v1530
        %v2225 = vunpack.c.l.b16 %v1540
        %v2226 = vunpack.c.l.b16 %v1554
        %v2227 = vunpack.c.l.b16 %v1564
        %v2228 = vunpack.c.l.b16 %v1578
        %v2229 = vunpack.c.l.b16 %v1588
        %v2230 = vunpack.c.l.b16 %v1602
        %v2231 = vunpack.c.l.b16 %v1612
        %v2232 = vunpack.c.l.b16 %v1626
        %v2233 = vunpack.c.l.b16 %v1636
        %v2234 = vunpack.c.l.b16 %v1650
        %v2235 = vunpack.c.l.b16 %v1660
        %v2236 = vunpack.c.l.b16 %v1674
        %v2237 = vunpack.c.l.b16 %v1684
        %v2238 = vpack.c.b16 %v2223, %v2222
        %v2239 = vpack.c.b16 %v2225, %v2224
        %v2240 = vpack.c.b16 %v2227, %v2226
        %v2241 = vpack.c.b16 %v2229, %v2228
        %v2242 = vpack.c.b16 %v2231, %v2230
        %v2243 = vpack.c.b16 %v2233, %v2232
        %v2244 = vpack.c.b16 %v2235, %v2234
        %v2245 = vpack.c.b16 %v2237, %v2236
        %v2254 = vunpack.c.l.b16 %v1720
        %v2255 = vunpack.c.l.b16 %v1723
        %v2256 = vunpack.c.l.b16 %v1727
        %v2257 = vunpack.c.l.b16 %v1730
        %v2258 = vunpack.c.l.b16 %v1734
        %v2259 = vunpack.c.l.b16 %v1737
        %v2260 = vunpack.c.l.b16 %v1741
        %v2261 = vunpack.c.l.b16 %v1744
        %v2262 = vunpack.c.l.b16 %v1748
        %v2263 = vunpack.c.l.b16 %v1751
        %v2264 = vunpack.c.l.b16 %v1755
        %v2265 = vunpack.c.l.b16 %v1758
        %v2266 = vunpack.c.l.b16 %v1762
        %v2267 = vunpack.c.l.b16 %v1765
        %v2268 = vunpack.c.l.b16 %v1769
        %v2269 = vunpack.c.l.b16 %v1772
        %v2270 = vpack.c.b16 %v2255, %v2254
        %v2271 = vpack.c.b16 %v2257, %v2256
        %v2272 = vpack.c.b16 %v2259, %v2258
        %v2273 = vpack.c.b16 %v2261, %v2260
        %v2274 = vpack.c.b16 %v2263, %v2262
        %v2275 = vpack.c.b16 %v2265, %v2264
        %v2276 = vpack.c.b16 %v2267, %v2266
        %v2277 = vpack.c.b16 %v2269, %v2268
        %v2294 = vunpack.c.l.b16 %v1774
        %v2295 = vunpack.c.l.b16 %v1775
        %v2296 = vunpack.c.l.b16 %v1776
        %v2297 = vunpack.c.l.b16 %v1777
        %v2298 = vunpack.c.l.b16 %v1778
        %v2299 = vunpack.c.l.b16 %v1779
        %v2300 = vunpack.c.l.b16 %v1780
        %v2301 = vunpack.c.l.b16 %v1781
        %v2302 = vunpack.c.l.b16 %v1782
        %v2303 = vunpack.c.l.b16 %v1783
        %v2304 = vunpack.c.l.b16 %v1784
        %v2305 = vunpack.c.l.b16 %v1785
        %v2306 = vunpack.c.l.b16 %v1786
        %v2307 = vunpack.c.l.b16 %v1787
        %v2308 = vunpack.c.l.b16 %v1788
        %v2309 = vunpack.c.l.b16 %v1789
        %v2310 = vpack.c.b16 %v2295, %v2294
        %v2311 = vpack.c.b16 %v2297, %v2296
        %v2312 = vpack.c.b16 %v2299, %v2298
        %v2313 = vpack.c.b16 %v2301, %v2300
        %v2314 = vpack.c.b16 %v2303, %v2302
        %v2315 = vpack.c.b16 %v2305, %v2304
        %v2316 = vpack.c.b16 %v2307, %v2306
        %v2317 = vpack.c.b16 %v2309, %v2308
        %v2326 = vunpack.c.l.b16 %v1811
        %v2327 = vunpack.c.l.b16 %v1821
        %v2328 = vunpack.c.l.b16 %v1835
        %v2329 = vunpack.c.l.b16 %v1845
        %v2330 = vunpack.c.l.b16 %v1859
        %v2331 = vunpack.c.l.b16 %v1869
        %v2332 = vunpack.c.l.b16 %v1883
        %v2333 = vunpack.c.l.b16 %v1893
        %v2334 = vunpack.c.l.b16 %v1907
        %v2335 = vunpack.c.l.b16 %v1917
        %v2336 = vunpack.c.l.b16 %v1931
        %v2337 = vunpack.c.l.b16 %v1941
        %v2338 = vunpack.c.l.b16 %v1955
        %v2339 = vunpack.c.l.b16 %v1965
        %v2340 = vunpack.c.l.b16 %v1979
        %v2341 = vunpack.c.l.b16 %v1989
        %v2342 = vpack.c.b16 %v2327, %v2326
        %v2343 = vpack.c.b16 %v2329, %v2328
        %v2344 = vpack.c.b16 %v2331, %v2330
        %v2345 = vpack.c.b16 %v2333, %v2332
        %v2346 = vpack.c.b16 %v2335, %v2334
        %v2347 = vpack.c.b16 %v2337, %v2336
        %v2348 = vpack.c.b16 %v2339, %v2338
        %v2349 = vpack.c.b16 %v2341, %v2340
        %v2358 = vunpack.c.l.b16 %v2025
        %v2359 = vunpack.c.l.b16 %v2028
        %v2360 = vunpack.c.l.b16 %v2032
        %v2361 = vunpack.c.l.b16 %v2035
        %v2362 = vunpack.c.l.b16 %v2039
        %v2363 = vunpack.c.l.b16 %v2042
        %v2364 = vunpack.c.l.b16 %v2046
        %v2365 = vunpack.c.l.b16 %v2049
        %v2366 = vunpack.c.l.b16 %v2053
        %v2367 = vunpack.c.l.b16 %v2056
        %v2368 = vunpack.c.l.b16 %v2060
        %v2369 = vunpack.c.l.b16 %v2063
        %v2370 = vunpack.c.l.b16 %v2067
        %v2371 = vunpack.c.l.b16 %v2070
        %v2372 = vunpack.c.l.b16 %v2074
        %v2373 = vunpack.c.l.b16 %v2077
        %v2374 = vpack.c.b16 %v2359, %v2358
        %v2375 = vpack.c.b16 %v2361, %v2360
        %v2376 = vpack.c.b16 %v2363, %v2362
        %v2377 = vpack.c.b16 %v2365, %v2364
        %v2378 = vpack.c.b16 %v2367, %v2366
        %v2379 = vpack.c.b16 %v2369, %v2368
        %v2380 = vpack.c.b16 %v2371, %v2370
        %v2381 = vpack.c.b16 %v2373, %v2372
        %v2390 = vld [vmem:[#allocation11] sm:$0xf]
        %v2391 = vld [vmem:[#allocation11 + $0x4] sm:$0xf]
        %v2392 = vld [vmem:[#allocation11 + $0x8] sm:$0xf]
        %v2393 = vld [vmem:[#allocation11 + $0xc] sm:$0xf]
        %v2394 = vld [vmem:[#allocation11 + $0x10] sm:$0xf]
        %v2395 = vld [vmem:[#allocation11 + $0x14] sm:$0xf]
        %v2396 = vld [vmem:[#allocation11 + $0x18] sm:$0xf]
        %v2397 = vld [vmem:[#allocation11 + $0x1c] sm:$0xf]
        %v2398 = vld [vmem:[#allocation11 + $0x20] sm:$0xf]
        %v2399 = vld [vmem:[#allocation11 + $0x24] sm:$0xf]
        %v2400 = vld [vmem:[#allocation11 + $0x28] sm:$0xf]
        %v2401 = vld [vmem:[#allocation11 + $0x2c] sm:$0xf]
        %v2402 = vld [vmem:[#allocation11 + $0x30] sm:$0xf]
        %v2403 = vld [vmem:[#allocation11 + $0x34] sm:$0xf]
        %v2404 = vld [vmem:[#allocation11 + $0x38] sm:$0xf]
        %v2405 = vld [vmem:[#allocation11 + $0x3c] sm:$0xf]
        %v2406 = vld [vmem:[#allocation11 + $0x40] sm:$0xf]
        %v2407 = vld [vmem:[#allocation11 + $0x44] sm:$0xf]
        %v2408 = vld [vmem:[#allocation11 + $0x48] sm:$0xf]
        %v2409 = vld [vmem:[#allocation11 + $0x4c] sm:$0xf]
        %v2410 = vld [vmem:[#allocation11 + $0x50] sm:$0xf]
        %v2411 = vld [vmem:[#allocation11 + $0x54] sm:$0xf]
        %v2412 = vld [vmem:[#allocation11 + $0x58] sm:$0xf]
        %v2413 = vld [vmem:[#allocation11 + $0x5c] sm:$0xf]
        %v2414 = vld [vmem:[#allocation11 + $0x60] sm:$0xf]
        %v2415 = vld [vmem:[#allocation11 + $0x64] sm:$0xf]
        %v2416 = vld [vmem:[#allocation11 + $0x68] sm:$0xf]
        %v2417 = vld [vmem:[#allocation11 + $0x6c] sm:$0xf]
        %v2418 = vld [vmem:[#allocation11 + $0x70] sm:$0xf]
        %v2419 = vld [vmem:[#allocation11 + $0x74] sm:$0xf]
        %v2420 = vld [vmem:[#allocation11 + $0x78] sm:$0xf]
        %v2421 = vld [vmem:[#allocation11 + $0x7c] sm:$0xf]
        %v2422 = vld [vmem:[#allocation11 + $0x80] sm:$0xf]
        %v2423 = vld [vmem:[#allocation11 + $0x84] sm:$0xf]
        %v2424 = vld [vmem:[#allocation11 + $0x88] sm:$0xf]
        %v2425 = vld [vmem:[#allocation11 + $0x8c] sm:$0xf]
        %v2426 = vld [vmem:[#allocation11 + $0x90] sm:$0xf]
        %v2427 = vld [vmem:[#allocation11 + $0x94] sm:$0xf]
        %v2428 = vld [vmem:[#allocation11 + $0x98] sm:$0xf]
        %v2429 = vld [vmem:[#allocation11 + $0x9c] sm:$0xf]
        %v2430 = vld [vmem:[#allocation11 + $0xa0] sm:$0xf]
        %v2431 = vld [vmem:[#allocation11 + $0xa4] sm:$0xf]
        %v2432 = vld [vmem:[#allocation11 + $0xa8] sm:$0xf]
        %v2433 = vld [vmem:[#allocation11 + $0xac] sm:$0xf]
        %v2434 = vld [vmem:[#allocation11 + $0xb0] sm:$0xf]
        %v2435 = vld [vmem:[#allocation11 + $0xb4] sm:$0xf]
        %v2436 = vld [vmem:[#allocation11 + $0xb8] sm:$0xf]
        %v2437 = vld [vmem:[#allocation11 + $0xbc] sm:$0xf]
        %v2438 = vld [vmem:[#allocation11 + $0xc0] sm:$0xf]
        %v2439 = vld [vmem:[#allocation11 + $0xc4] sm:$0xf]
        %v2440 = vld [vmem:[#allocation11 + $0xc8] sm:$0xf]
        %v2441 = vld [vmem:[#allocation11 + $0xcc] sm:$0xf]
        %v2442 = vld [vmem:[#allocation11 + $0xd0] sm:$0xf]
        %v2443 = vld [vmem:[#allocation11 + $0xd4] sm:$0xf]
        %v2444 = vld [vmem:[#allocation11 + $0xd8] sm:$0xf]
        %v2445 = vld [vmem:[#allocation11 + $0xdc] sm:$0xf]
        %v2446 = vld [vmem:[#allocation11 + $0xe0] sm:$0xf]
        %v2447 = vld [vmem:[#allocation11 + $0xe4] sm:$0xf]
        %v2448 = vld [vmem:[#allocation11 + $0xe8] sm:$0xf]
        %v2449 = vld [vmem:[#allocation11 + $0xec] sm:$0xf]
        %v2450 = vld [vmem:[#allocation11 + $0xf0] sm:$0xf]
        %v2451 = vld [vmem:[#allocation11 + $0xf4] sm:$0xf]
        %v2452 = vld [vmem:[#allocation11 + $0xf8] sm:$0xf]
        %v2453 = vld [vmem:[#allocation11 + $0xfc] sm:$0xf]
        %v2454 = vld [vmem:[#allocation11 + $0x100] sm:$0xf]
        %v2455 = vld [vmem:[#allocation11 + $0x104] sm:$0xf]
        %v2456 = vld [vmem:[#allocation11 + $0x108] sm:$0xf]
        %v2457 = vld [vmem:[#allocation11 + $0x10c] sm:$0xf]
        %v2458 = vld [vmem:[#allocation11 + $0x110] sm:$0xf]
        %v2459 = vld [vmem:[#allocation11 + $0x114] sm:$0xf]
        %v2460 = vld [vmem:[#allocation11 + $0x118] sm:$0xf]
        %v2461 = vld [vmem:[#allocation11 + $0x11c] sm:$0xf]
        %v2462 = vld [vmem:[#allocation11 + $0x120] sm:$0xf]
        %v2463 = vld [vmem:[#allocation11 + $0x124] sm:$0xf]
        %v2464 = vld [vmem:[#allocation11 + $0x128] sm:$0xf]
        %v2465 = vld [vmem:[#allocation11 + $0x12c] sm:$0xf]
        %v2466 = vld [vmem:[#allocation11 + $0x130] sm:$0xf]
        %v2467 = vld [vmem:[#allocation11 + $0x134] sm:$0xf]
        %v2468 = vld [vmem:[#allocation11 + $0x138] sm:$0xf]
        %v2469 = vld [vmem:[#allocation11 + $0x13c] sm:$0xf]
        %v2470 = vld [vmem:[#allocation11 + $0x140] sm:$0xf]
        %v2471 = vld [vmem:[#allocation11 + $0x144] sm:$0xf]
        %v2472 = vld [vmem:[#allocation11 + $0x148] sm:$0xf]
        %v2473 = vld [vmem:[#allocation11 + $0x14c] sm:$0xf]
        %v2474 = vld [vmem:[#allocation11 + $0x150] sm:$0xf]
        %v2475 = vld [vmem:[#allocation11 + $0x154] sm:$0xf]
        %v2476 = vld [vmem:[#allocation11 + $0x158] sm:$0xf]
        %v2477 = vld [vmem:[#allocation11 + $0x15c] sm:$0xf]
        %v2478 = vld [vmem:[#allocation11 + $0x160] sm:$0xf]
        %v2479 = vld [vmem:[#allocation11 + $0x164] sm:$0xf]
        %v2480 = vld [vmem:[#allocation11 + $0x168] sm:$0xf]
        %v2481 = vld [vmem:[#allocation11 + $0x16c] sm:$0xf]
        %v2482 = vld [vmem:[#allocation11 + $0x170] sm:$0xf]
        %v2483 = vld [vmem:[#allocation11 + $0x174] sm:$0xf]
        %v2484 = vld [vmem:[#allocation11 + $0x178] sm:$0xf]
        %v2485 = vld [vmem:[#allocation11 + $0x17c] sm:$0xf]
        %v2486 = vld [vmem:[#allocation11 + $0x180] sm:$0xf]
        %v2487 = vld [vmem:[#allocation11 + $0x184] sm:$0xf]
        %v2488 = vld [vmem:[#allocation11 + $0x188] sm:$0xf]
        %v2489 = vld [vmem:[#allocation11 + $0x18c] sm:$0xf]
        %v2490 = vld [vmem:[#allocation11 + $0x190] sm:$0xf]
        %v2491 = vld [vmem:[#allocation11 + $0x194] sm:$0xf]
        %v2492 = vld [vmem:[#allocation11 + $0x198] sm:$0xf]
        %v2493 = vld [vmem:[#allocation11 + $0x19c] sm:$0xf]
        %v2494 = vld [vmem:[#allocation11 + $0x1a0] sm:$0xf]
        %v2495 = vld [vmem:[#allocation11 + $0x1a4] sm:$0xf]
        %v2496 = vld [vmem:[#allocation11 + $0x1a8] sm:$0xf]
        %v2497 = vld [vmem:[#allocation11 + $0x1ac] sm:$0xf]
        %v2498 = vld [vmem:[#allocation11 + $0x1b0] sm:$0xf]
        %v2499 = vld [vmem:[#allocation11 + $0x1b4] sm:$0xf]
        %v2500 = vld [vmem:[#allocation11 + $0x1b8] sm:$0xf]
        %v2501 = vld [vmem:[#allocation11 + $0x1bc] sm:$0xf]
        %v2502 = vld [vmem:[#allocation11 + $0x1c0] sm:$0xf]
        %v2503 = vld [vmem:[#allocation11 + $0x1c4] sm:$0xf]
        %v2504 = vld [vmem:[#allocation11 + $0x1c8] sm:$0xf]
        %v2505 = vld [vmem:[#allocation11 + $0x1cc] sm:$0xf]
        %v2506 = vld [vmem:[#allocation11 + $0x1d0] sm:$0xf]
        %v2507 = vld [vmem:[#allocation11 + $0x1d4] sm:$0xf]
        %v2508 = vld [vmem:[#allocation11 + $0x1d8] sm:$0xf]
        %v2509 = vld [vmem:[#allocation11 + $0x1dc] sm:$0xf]
        %v2510 = vld [vmem:[#allocation11 + $0x1e0] sm:$0xf]
        %v2511 = vld [vmem:[#allocation11 + $0x1e4] sm:$0xf]
        %v2512 = vld [vmem:[#allocation11 + $0x1e8] sm:$0xf]
        %v2513 = vld [vmem:[#allocation11 + $0x1ec] sm:$0xf]
        %v2514 = vld [vmem:[#allocation11 + $0x1f0] sm:$0xf]
        %v2515 = vld [vmem:[#allocation11 + $0x1f4] sm:$0xf]
        %v2516 = vld [vmem:[#allocation11 + $0x1f8] sm:$0xf]
        %v2517 = vld [vmem:[#allocation11 + $0x1fc] sm:$0xf]
        %v2518 = vld [vmem:[#allocation11 + $0x200] sm:$0xf]
        %v2519 = vld [vmem:[#allocation11 + $0x204] sm:$0xf]
        %v2520 = vld [vmem:[#allocation11 + $0x208] sm:$0xf]
        %v2521 = vld [vmem:[#allocation11 + $0x20c] sm:$0xf]
        %v2522 = vld [vmem:[#allocation11 + $0x210] sm:$0xf]
        %v2523 = vld [vmem:[#allocation11 + $0x214] sm:$0xf]
        %v2524 = vld [vmem:[#allocation11 + $0x218] sm:$0xf]
        %v2525 = vld [vmem:[#allocation11 + $0x21c] sm:$0xf]
        %v2526 = vld [vmem:[#allocation11 + $0x220] sm:$0xf]
        %v2527 = vld [vmem:[#allocation11 + $0x224] sm:$0xf]
        %v2528 = vld [vmem:[#allocation11 + $0x228] sm:$0xf]
        %v2529 = vld [vmem:[#allocation11 + $0x22c] sm:$0xf]
        %v2530 = vld [vmem:[#allocation11 + $0x230] sm:$0xf]
        %v2531 = vld [vmem:[#allocation11 + $0x234] sm:$0xf]
        %v2532 = vld [vmem:[#allocation11 + $0x238] sm:$0xf]
        %v2533 = vld [vmem:[#allocation11 + $0x23c] sm:$0xf]
        %v2534 = vld [vmem:[%s5] sm:$0x1]
        %v2536 = vlaneseq
        %v2537 = vshrl.u32 %v2536, 7
        %v2538 = vsub.s32 0, %v2537
        %v2539 = vrot.slane %v2534, %v2538
        %v2685 = vunpack.c.l.b16 %v2390
        %v2686 = vunpack.c.l.b16 %v2391
        %v2687 = vunpack.c.l.b16 %v2392
        %v2688 = vunpack.c.l.b16 %v2393
        %v2689 = vunpack.c.l.b16 %v2394
        %v2690 = vunpack.c.l.b16 %v2395
        %v2691 = vunpack.c.l.b16 %v2396
        %v2692 = vunpack.c.l.b16 %v2397
        %v2693 = vunpack.c.l.b16 %v2398
        %v2694 = vunpack.c.l.b16 %v2399
        %v2695 = vunpack.c.l.b16 %v2400
        %v2696 = vunpack.c.l.b16 %v2401
        %v2697 = vunpack.c.l.b16 %v2402
        %v2698 = vunpack.c.l.b16 %v2403
        %v2699 = vunpack.c.l.b16 %v2404
        %v2700 = vunpack.c.l.b16 %v2405
        %v2701 = vunpack.c.l.b16 %v2406
        %v2702 = vunpack.c.l.b16 %v2407
        %v2703 = vunpack.c.l.b16 %v2408
        %v2704 = vunpack.c.l.b16 %v2409
        %v2705 = vunpack.c.l.b16 %v2410
        %v2706 = vunpack.c.l.b16 %v2411
        %v2707 = vunpack.c.l.b16 %v2412
        %v2708 = vunpack.c.l.b16 %v2413
        %v2709 = vunpack.c.l.b16 %v2414
        %v2710 = vunpack.c.l.b16 %v2415
        %v2711 = vunpack.c.l.b16 %v2416
        %v2712 = vunpack.c.l.b16 %v2417
        %v2713 = vunpack.c.l.b16 %v2418
        %v2714 = vunpack.c.l.b16 %v2419
        %v2715 = vunpack.c.l.b16 %v2420
        %v2716 = vunpack.c.l.b16 %v2421
        %v2717 = vunpack.c.l.b16 %v2422
        %v2718 = vunpack.c.l.b16 %v2423
        %v2719 = vunpack.c.l.b16 %v2424
        %v2720 = vunpack.c.l.b16 %v2425
        %v2721 = vunpack.c.l.b16 %v2426
        %v2722 = vunpack.c.l.b16 %v2427
        %v2723 = vunpack.c.l.b16 %v2428
        %v2724 = vunpack.c.l.b16 %v2429
        %v2725 = vunpack.c.l.b16 %v2430
        %v2726 = vunpack.c.l.b16 %v2431
        %v2727 = vunpack.c.l.b16 %v2432
        %v2728 = vunpack.c.l.b16 %v2433
        %v2729 = vunpack.c.l.b16 %v2434
        %v2730 = vunpack.c.l.b16 %v2435
        %v2731 = vunpack.c.l.b16 %v2436
        %v2732 = vunpack.c.l.b16 %v2437
        %v2733 = vunpack.c.l.b16 %v2438
        %v2734 = vunpack.c.l.b16 %v2439
        %v2735 = vunpack.c.l.b16 %v2440
        %v2736 = vunpack.c.l.b16 %v2441
        %v2737 = vunpack.c.l.b16 %v2442
        %v2738 = vunpack.c.l.b16 %v2443
        %v2739 = vunpack.c.l.b16 %v2444
        %v2740 = vunpack.c.l.b16 %v2445
        %v2741 = vunpack.c.l.b16 %v2446
        %v2742 = vunpack.c.l.b16 %v2447
        %v2743 = vunpack.c.l.b16 %v2448
        %v2744 = vunpack.c.l.b16 %v2449
        %v2745 = vunpack.c.l.b16 %v2450
        %v2746 = vunpack.c.l.b16 %v2451
        %v2747 = vunpack.c.l.b16 %v2452
        %v2748 = vunpack.c.l.b16 %v2453
        %v2749 = vunpack.c.l.b16 %v2454
        %v2750 = vunpack.c.l.b16 %v2455
        %v2751 = vunpack.c.l.b16 %v2456
        %v2752 = vunpack.c.l.b16 %v2457
        %v2753 = vunpack.c.l.b16 %v2458
        %v2754 = vunpack.c.l.b16 %v2459
        %v2755 = vunpack.c.l.b16 %v2460
        %v2756 = vunpack.c.l.b16 %v2461
        %v2757 = vunpack.c.l.b16 %v2462
        %v2758 = vunpack.c.l.b16 %v2463
        %v2759 = vunpack.c.l.b16 %v2464
        %v2760 = vunpack.c.l.b16 %v2465
        %v2761 = vunpack.c.l.b16 %v2466
        %v2762 = vunpack.c.l.b16 %v2467
        %v2763 = vunpack.c.l.b16 %v2468
        %v2764 = vunpack.c.l.b16 %v2469
        %v2765 = vunpack.c.l.b16 %v2470
        %v2766 = vunpack.c.l.b16 %v2471
        %v2767 = vunpack.c.l.b16 %v2472
        %v2768 = vunpack.c.l.b16 %v2473
        %v2769 = vunpack.c.l.b16 %v2474
        %v2770 = vunpack.c.l.b16 %v2475
        %v2771 = vunpack.c.l.b16 %v2476
        %v2772 = vunpack.c.l.b16 %v2477
        %v2773 = vunpack.c.l.b16 %v2478
        %v2774 = vunpack.c.l.b16 %v2479
        %v2775 = vunpack.c.l.b16 %v2480
        %v2776 = vunpack.c.l.b16 %v2481
        %v2777 = vunpack.c.l.b16 %v2482
        %v2778 = vunpack.c.l.b16 %v2483
        %v2779 = vunpack.c.l.b16 %v2484
        %v2780 = vunpack.c.l.b16 %v2485
        %v2781 = vunpack.c.l.b16 %v2486
        %v2782 = vunpack.c.l.b16 %v2487
        %v2783 = vunpack.c.l.b16 %v2488
        %v2784 = vunpack.c.l.b16 %v2489
        %v2785 = vunpack.c.l.b16 %v2490
        %v2786 = vunpack.c.l.b16 %v2491
        %v2787 = vunpack.c.l.b16 %v2492
        %v2788 = vunpack.c.l.b16 %v2493
        %v2789 = vunpack.c.l.b16 %v2494
        %v2790 = vunpack.c.l.b16 %v2495
        %v2791 = vunpack.c.l.b16 %v2496
        %v2792 = vunpack.c.l.b16 %v2497
        %v2793 = vunpack.c.l.b16 %v2498
        %v2794 = vunpack.c.l.b16 %v2499
        %v2795 = vunpack.c.l.b16 %v2500
        %v2796 = vunpack.c.l.b16 %v2501
        %v2797 = vunpack.c.l.b16 %v2502
        %v2798 = vunpack.c.l.b16 %v2503
        %v2799 = vunpack.c.l.b16 %v2504
        %v2800 = vunpack.c.l.b16 %v2505
        %v2801 = vunpack.c.l.b16 %v2506
        %v2802 = vunpack.c.l.b16 %v2507
        %v2803 = vunpack.c.l.b16 %v2508
        %v2804 = vunpack.c.l.b16 %v2509
        %v2805 = vunpack.c.l.b16 %v2510
        %v2806 = vunpack.c.l.b16 %v2511
        %v2807 = vunpack.c.l.b16 %v2512
        %v2808 = vunpack.c.l.b16 %v2513
        %v2809 = vunpack.c.l.b16 %v2514
        %v2810 = vunpack.c.l.b16 %v2515
        %v2811 = vunpack.c.l.b16 %v2516
        %v2812 = vunpack.c.l.b16 %v2517
        %v2813 = vunpack.c.l.b16 %v2518
        %v2814 = vunpack.c.l.b16 %v2519
        %v2815 = vunpack.c.l.b16 %v2520
        %v2816 = vunpack.c.l.b16 %v2521
        %v2817 = vunpack.c.l.b16 %v2522
        %v2818 = vunpack.c.l.b16 %v2523
        %v2819 = vunpack.c.l.b16 %v2524
        %v2820 = vunpack.c.l.b16 %v2525
        %v2821 = vunpack.c.l.b16 %v2526
        %v2822 = vunpack.c.l.b16 %v2527
        %v2823 = vunpack.c.l.b16 %v2528
        %v2824 = vunpack.c.l.b16 %v2529
        %v2825 = vunpack.c.l.b16 %v2530
        %v2826 = vunpack.c.l.b16 %v2531
        %v2827 = vunpack.c.l.b16 %v2532
        %v2828 = vunpack.c.l.b16 %v2533
        %v2829 = vpack.c.b16 %v2686, %v2685
        %v2830 = vpack.c.b16 %v2688, %v2687
        %v2831 = vpack.c.b16 %v2690, %v2689
        %v2832 = vpack.c.b16 %v2692, %v2691
        %v2833 = vpack.c.b16 %v2694, %v2693
        %v2834 = vpack.c.b16 %v2696, %v2695
        %v2835 = vpack.c.b16 %v2698, %v2697
        %v2836 = vpack.c.b16 %v2700, %v2699
        %v2837 = vpack.c.b16 %v2702, %v2701
        %v2838 = vpack.c.b16 %v2704, %v2703
        %v2839 = vpack.c.b16 %v2706, %v2705
        %v2840 = vpack.c.b16 %v2708, %v2707
        %v2841 = vpack.c.b16 %v2710, %v2709
        %v2842 = vpack.c.b16 %v2712, %v2711
        %v2843 = vpack.c.b16 %v2714, %v2713
        %v2844 = vpack.c.b16 %v2716, %v2715
        %v2845 = vpack.c.b16 %v2718, %v2717
        %v2846 = vpack.c.b16 %v2720, %v2719
        %v2847 = vpack.c.b16 %v2722, %v2721
        %v2848 = vpack.c.b16 %v2724, %v2723
        %v2849 = vpack.c.b16 %v2726, %v2725
        %v2850 = vpack.c.b16 %v2728, %v2727
        %v2851 = vpack.c.b16 %v2730, %v2729
        %v2852 = vpack.c.b16 %v2732, %v2731
        %v2853 = vpack.c.b16 %v2734, %v2733
        %v2854 = vpack.c.b16 %v2736, %v2735
        %v2855 = vpack.c.b16 %v2738, %v2737
        %v2856 = vpack.c.b16 %v2740, %v2739
        %v2857 = vpack.c.b16 %v2742, %v2741
        %v2858 = vpack.c.b16 %v2744, %v2743
        %v2859 = vpack.c.b16 %v2746, %v2745
        %v2860 = vpack.c.b16 %v2748, %v2747
        %v2861 = vpack.c.b16 %v2750, %v2749
        %v2862 = vpack.c.b16 %v2752, %v2751
        %v2863 = vpack.c.b16 %v2754, %v2753
        %v2864 = vpack.c.b16 %v2756, %v2755
        %v2865 = vpack.c.b16 %v2758, %v2757
        %v2866 = vpack.c.b16 %v2760, %v2759
        %v2867 = vpack.c.b16 %v2762, %v2761
        %v2868 = vpack.c.b16 %v2764, %v2763
        %v2869 = vpack.c.b16 %v2766, %v2765
        %v2870 = vpack.c.b16 %v2768, %v2767
        %v2871 = vpack.c.b16 %v2770, %v2769
        %v2872 = vpack.c.b16 %v2772, %v2771
        %v2873 = vpack.c.b16 %v2774, %v2773
        %v2874 = vpack.c.b16 %v2776, %v2775
        %v2875 = vpack.c.b16 %v2778, %v2777
        %v2876 = vpack.c.b16 %v2780, %v2779
        %v2877 = vpack.c.b16 %v2782, %v2781
        %v2878 = vpack.c.b16 %v2784, %v2783
        %v2879 = vpack.c.b16 %v2786, %v2785
        %v2880 = vpack.c.b16 %v2788, %v2787
        %v2881 = vpack.c.b16 %v2790, %v2789
        %v2882 = vpack.c.b16 %v2792, %v2791
        %v2883 = vpack.c.b16 %v2794, %v2793
        %v2884 = vpack.c.b16 %v2796, %v2795
        %v2885 = vpack.c.b16 %v2798, %v2797
        %v2886 = vpack.c.b16 %v2800, %v2799
        %v2887 = vpack.c.b16 %v2802, %v2801
        %v2888 = vpack.c.b16 %v2804, %v2803
        %v2889 = vpack.c.b16 %v2806, %v2805
        %v2890 = vpack.c.b16 %v2808, %v2807
        %v2891 = vpack.c.b16 %v2810, %v2809
        %v2892 = vpack.c.b16 %v2812, %v2811
        %v2893 = vpack.c.b16 %v2814, %v2813
        %v2894 = vpack.c.b16 %v2816, %v2815
        %v2895 = vpack.c.b16 %v2818, %v2817
        %v2896 = vpack.c.b16 %v2820, %v2819
        %v2897 = vpack.c.b16 %v2822, %v2821
        %v2898 = vpack.c.b16 %v2824, %v2823
        %v2899 = vpack.c.b16 %v2826, %v2825
        %v2900 = vpack.c.b16 %v2828, %v2827
        %2973 = vmatprep.subr.bf16.mxu0 0
        %2974 = vmatpush1.bf16.msra.mxu0 %v2836
        %2975 = vmatprep.subr.bf16.mxu0 0
        %2976 = vmatpush1.bf16.msra.mxu0 %v2835
        %2977 = vmatprep.subr.bf16.mxu0 0
        %2978 = vmatpush1.bf16.msra.mxu0 %v2834
        %2979 = vmatprep.subr.bf16.mxu0 0
        %2980 = vmatpush1.bf16.msra.mxu0 %v2833
        %2981 = vmatprep.subr.bf16.mxu0 0
        %2982 = vmatpush1.bf16.msra.mxu0 %v2832
        %2983 = vmatprep.subr.bf16.mxu0 0
        %2984 = vmatpush1.bf16.msra.mxu0 %v2831
        %2985 = vmatprep.subr.bf16.mxu0 0
        %2986 = vmatpush1.bf16.msra.mxu0 %v2830
        %2987 = vmatprep.subr.bf16.mxu0 0
        %2988 = vmatpush1.bf16.msra.mxu0 %v2829
        %2989 = vmatprep.subr.bf16.mxu0 0
        %2990 = vmatpush2.bf16.msra.mxu0 %v2844
        %2991 = vmatprep.subr.bf16.mxu0 0
        %2992 = vmatpush2.bf16.msra.mxu0 %v2843
        %2993 = vmatprep.subr.bf16.mxu0 0
        %2994 = vmatpush2.bf16.msra.mxu0 %v2842
        %2995 = vmatprep.subr.bf16.mxu0 0
        %2996 = vmatpush2.bf16.msra.mxu0 %v2841
        %2997 = vmatprep.subr.bf16.mxu0 0
        %2998 = vmatpush2.bf16.msra.mxu0 %v2840
        %2999 = vmatprep.subr.bf16.mxu0 0
        %3000 = vmatpush2.bf16.msra.mxu0 %v2839
        %3001 = vmatprep.subr.bf16.mxu0 0
        %3002 = vmatpush2.bf16.msra.mxu0 %v2838
        %3003 = vmatprep.subr.bf16.mxu0 0
        %3004 = vmatpush2.bf16.msra.mxu0 %v2837
        %3005 = vmatprep.mubr.bf16.mxu0 %v2134
        %3006 = vmatmul.mubr.bf16.gmra.mxu0 %v2102
        %v3007 = vpop.f32.mrf.mxu0
        %v3008 = vadd.f32 %v2539, %v3007
        %v3009 = vpop.f32.mrf.mxu0
        %v3010 = vpop.f32.mrf.mxu0
        %v3011 = vadd.f32 %v2539, %v3010
        %v3012 = vpop.f32.mrf.mxu0
        %3013 = vmatprep.mubr.bf16.mxu0 %v2135
        %3014 = vmatmul.mubr.bf16.gmra.mxu0 %v2103
        %v3015 = vpop.f32.mrf.mxu0
        %v3016 = vadd.f32 %v2539, %v3015
        %v3017 = vpop.f32.mrf.mxu0
        %v3018 = vpop.f32.mrf.mxu0
        %v3019 = vadd.f32 %v2539, %v3018
        %v3020 = vpop.f32.mrf.mxu0
        %3021 = vmatprep.mubr.bf16.mxu0 %v2136
        %3022 = vmatmul.mubr.bf16.gmra.mxu0 %v2104
        %v3023 = vpop.f32.mrf.mxu0
        %v3024 = vadd.f32 %v2539, %v3023
        %v3025 = vpop.f32.mrf.mxu0
        %v3026 = vpop.f32.mrf.mxu0
        %v3027 = vadd.f32 %v2539, %v3026
        %v3028 = vpop.f32.mrf.mxu0
        %3029 = vmatprep.mubr.bf16.mxu0 %v2137
        %3030 = vmatmul.mubr.bf16.gmra.mxu0 %v2105
        %v3031 = vpop.f32.mrf.mxu0
        %v3032 = vadd.f32 %v2539, %v3031
        %v3033 = vpop.f32.mrf.mxu0
        %v3034 = vpop.f32.mrf.mxu0
        %v3035 = vadd.f32 %v2539, %v3034
        %v3036 = vpop.f32.mrf.mxu0
        %3037 = vmatprep.mubr.bf16.mxu0 %v2138
        %3038 = vmatmul.mubr.bf16.gmra.mxu0 %v2106
        %v3039 = vpop.f32.mrf.mxu0
        %v3040 = vadd.f32 %v2539, %v3039
        %v3041 = vpop.f32.mrf.mxu0
        %v3042 = vpop.f32.mrf.mxu0
        %v3043 = vadd.f32 %v2539, %v3042
        %v3044 = vpop.f32.mrf.mxu0
        %3045 = vmatprep.mubr.bf16.mxu0 %v2139
        %3046 = vmatmul.mubr.bf16.gmra.mxu0 %v2107
        %v3047 = vpop.f32.mrf.mxu0
        %v3048 = vadd.f32 %v2539, %v3047
        %v3049 = vpop.f32.mrf.mxu0
        %v3050 = vpop.f32.mrf.mxu0
        %v3051 = vadd.f32 %v2539, %v3050
        %v3052 = vpop.f32.mrf.mxu0
        %3053 = vmatprep.mubr.bf16.mxu0 %v2140
        %3054 = vmatmul.mubr.bf16.gmra.mxu0 %v2108
        %v3055 = vpop.f32.mrf.mxu0
        %v3056 = vadd.f32 %v2539, %v3055
        %v3057 = vpop.f32.mrf.mxu0
        %v3058 = vpop.f32.mrf.mxu0
        %v3059 = vadd.f32 %v2539, %v3058
        %v3060 = vpop.f32.mrf.mxu0
        %3061 = vmatprep.mubr.bf16.mxu0 %v2141
        %3062 = vmatmul.mubr.bf16.gmra.mxu0 %v2109
        %v3063 = vpop.f32.mrf.mxu0
        %v3064 = vadd.f32 %v2539, %v3063
        %v3065 = vpop.f32.mrf.mxu0
        %v3066 = vpop.f32.mrf.mxu0
        %v3067 = vadd.f32 %v2539, %v3066
        %v3068 = vpop.f32.mrf.mxu0
        %3069 = vdwg.mxu0
        %3070 = vmatprep.subr.bf16.mxu0 0
        %3071 = vmatpush1.bf16.msra.mxu0 %v2852
        %3072 = vmatprep.subr.bf16.mxu0 0
        %3073 = vmatpush1.bf16.msra.mxu0 %v2851
        %3074 = vmatprep.subr.bf16.mxu0 0
        %3075 = vmatpush1.bf16.msra.mxu0 %v2850
        %3076 = vmatprep.subr.bf16.mxu0 0
        %3077 = vmatpush1.bf16.msra.mxu0 %v2849
        %3078 = vmatprep.subr.bf16.mxu0 0
        %3079 = vmatpush1.bf16.msra.mxu0 %v2848
        %3080 = vmatprep.subr.bf16.mxu0 0
        %3081 = vmatpush1.bf16.msra.mxu0 %v2847
        %3082 = vmatprep.subr.bf16.mxu0 0
        %3083 = vmatpush1.bf16.msra.mxu0 %v2846
        %3084 = vmatprep.subr.bf16.mxu0 0
        %3085 = vmatpush1.bf16.msra.mxu0 %v2845
        %3086 = vmatprep.subr.bf16.mxu0 0
        %3087 = vmatpush2.bf16.msra.mxu0 %v2860
        %3088 = vmatprep.subr.bf16.mxu0 0
        %3089 = vmatpush2.bf16.msra.mxu0 %v2859
        %3090 = vmatprep.subr.bf16.mxu0 0
        %3091 = vmatpush2.bf16.msra.mxu0 %v2858
        %3092 = vmatprep.subr.bf16.mxu0 0
        %3093 = vmatpush2.bf16.msra.mxu0 %v2857
        %3094 = vmatprep.subr.bf16.mxu0 0
        %3095 = vmatpush2.bf16.msra.mxu0 %v2856
        %3096 = vmatprep.subr.bf16.mxu0 0
        %3097 = vmatpush2.bf16.msra.mxu0 %v2855
        %3098 = vmatprep.subr.bf16.mxu0 0
        %3099 = vmatpush2.bf16.msra.mxu0 %v2854
        %3100 = vmatprep.subr.bf16.mxu0 0
        %3101 = vmatpush2.bf16.msra.mxu0 %v2853
        %3102 = vmatprep.mubr.bf16.mxu0 %v2206
        %3103 = vmatmul.mubr.bf16.gmra.mxu0 %v2166
        %v3104 = vpop.f32.mrf.mxu0
        %v3105 = vadd.f32 %v3008, %v3104
        %v3106 = vpop.f32.mrf.mxu0
        %v3107 = vpop.f32.mrf.mxu0
        %v3108 = vadd.f32 %v3011, %v3107
        %v3109 = vpop.f32.mrf.mxu0
        %3110 = vmatprep.mubr.bf16.mxu0 %v2207
        %3111 = vmatmul.mubr.bf16.gmra.mxu0 %v2167
        %v3112 = vpop.f32.mrf.mxu0
        %v3113 = vadd.f32 %v3016, %v3112
        %v3114 = vpop.f32.mrf.mxu0
        %v3115 = vpop.f32.mrf.mxu0
        %v3116 = vadd.f32 %v3019, %v3115
        %v3117 = vpop.f32.mrf.mxu0
        %3118 = vmatprep.mubr.bf16.mxu0 %v2208
        %3119 = vmatmul.mubr.bf16.gmra.mxu0 %v2168
        %v3120 = vpop.f32.mrf.mxu0
        %v3121 = vadd.f32 %v3024, %v3120
        %v3122 = vpop.f32.mrf.mxu0
        %v3123 = vpop.f32.mrf.mxu0
        %v3124 = vadd.f32 %v3027, %v3123
        %v3125 = vpop.f32.mrf.mxu0
        %3126 = vmatprep.mubr.bf16.mxu0 %v2209
        %3127 = vmatmul.mubr.bf16.gmra.mxu0 %v2169
        %v3128 = vpop.f32.mrf.mxu0
        %v3129 = vadd.f32 %v3032, %v3128
        %v3130 = vpop.f32.mrf.mxu0
        %v3131 = vpop.f32.mrf.mxu0
        %v3132 = vadd.f32 %v3035, %v3131
        %v3133 = vpop.f32.mrf.mxu0
        %3134 = vmatprep.mubr.bf16.mxu0 %v2210
        %3135 = vmatmul.mubr.bf16.gmra.mxu0 %v2170
        %v3136 = vpop.f32.mrf.mxu0
        %v3137 = vadd.f32 %v3040, %v3136
        %v3138 = vpop.f32.mrf.mxu0
        %v3139 = vpop.f32.mrf.mxu0
        %v3140 = vadd.f32 %v3043, %v3139
        %v3141 = vpop.f32.mrf.mxu0
        %3142 = vmatprep.mubr.bf16.mxu0 %v2211
        %3143 = vmatmul.mubr.bf16.gmra.mxu0 %v2171
        %v3144 = vpop.f32.mrf.mxu0
        %v3145 = vadd.f32 %v3048, %v3144
        %v3146 = vpop.f32.mrf.mxu0
        %v3147 = vpop.f32.mrf.mxu0
        %v3148 = vadd.f32 %v3051, %v3147
        %v3149 = vpop.f32.mrf.mxu0
        %3150 = vmatprep.mubr.bf16.mxu0 %v2212
        %3151 = vmatmul.mubr.bf16.gmra.mxu0 %v2172
        %v3152 = vpop.f32.mrf.mxu0
        %v3153 = vadd.f32 %v3056, %v3152
        %v3154 = vpop.f32.mrf.mxu0
        %v3155 = vpop.f32.mrf.mxu0
        %v3156 = vadd.f32 %v3059, %v3155
        %v3157 = vpop.f32.mrf.mxu0
        %3158 = vmatprep.mubr.bf16.mxu0 %v2213
        %3159 = vmatmul.mubr.bf16.gmra.mxu0 %v2173
        %v3160 = vpop.f32.mrf.mxu0
        %v3161 = vadd.f32 %v3064, %v3160
        %v3162 = vpop.f32.mrf.mxu0
        %v3163 = vpop.f32.mrf.mxu0
        %v3164 = vadd.f32 %v3067, %v3163
        %v3165 = vpop.f32.mrf.mxu0
        %3166 = vdwg.mxu0
        %3167 = vmatprep.subr.bf16.mxu0 0
        %3168 = vmatpush1.bf16.msra.mxu0 %v2868
        %3169 = vmatprep.subr.bf16.mxu0 0
        %3170 = vmatpush1.bf16.msra.mxu0 %v2867
        %3171 = vmatprep.subr.bf16.mxu0 0
        %3172 = vmatpush1.bf16.msra.mxu0 %v2866
        %3173 = vmatprep.subr.bf16.mxu0 0
        %3174 = vmatpush1.bf16.msra.mxu0 %v2865
        %3175 = vmatprep.subr.bf16.mxu0 0
        %3176 = vmatpush1.bf16.msra.mxu0 %v2864
        %3177 = vmatprep.subr.bf16.mxu0 0
        %3178 = vmatpush1.bf16.msra.mxu0 %v2863
        %3179 = vmatprep.subr.bf16.mxu0 0
        %3180 = vmatpush1.bf16.msra.mxu0 %v2862
        %3181 = vmatprep.subr.bf16.mxu0 0
        %3182 = vmatpush1.bf16.msra.mxu0 %v2861
        %3183 = vmatprep.subr.bf16.mxu0 0
        %3184 = vmatpush2.bf16.msra.mxu0 %v2876
        %3185 = vmatprep.subr.bf16.mxu0 0
        %3186 = vmatpush2.bf16.msra.mxu0 %v2875
        %3187 = vmatprep.subr.bf16.mxu0 0
        %3188 = vmatpush2.bf16.msra.mxu0 %v2874
        %3189 = vmatprep.subr.bf16.mxu0 0
        %3190 = vmatpush2.bf16.msra.mxu0 %v2873
        %3191 = vmatprep.subr.bf16.mxu0 0
        %3192 = vmatpush2.bf16.msra.mxu0 %v2872
        %3193 = vmatprep.subr.bf16.mxu0 0
        %3194 = vmatpush2.bf16.msra.mxu0 %v2871
        %3195 = vmatprep.subr.bf16.mxu0 0
        %3196 = vmatpush2.bf16.msra.mxu0 %v2870
        %3197 = vmatprep.subr.bf16.mxu0 0
        %3198 = vmatpush2.bf16.msra.mxu0 %v2869
        %3199 = vmatprep.mubr.bf16.mxu0 %v2270
        %3200 = vmatmul.mubr.bf16.gmra.mxu0 %v2238
        %v3201 = vpop.f32.mrf.mxu0
        %v3202 = vadd.f32 %v3105, %v3201
        %v3203 = vpop.f32.mrf.mxu0
        %v3204 = vpop.f32.mrf.mxu0
        %v3205 = vadd.f32 %v3108, %v3204
        %v3206 = vpop.f32.mrf.mxu0
        %3207 = vmatprep.mubr.bf16.mxu0 %v2271
        %3208 = vmatmul.mubr.bf16.gmra.mxu0 %v2239
        %v3209 = vpop.f32.mrf.mxu0
        %v3210 = vadd.f32 %v3113, %v3209
        %v3211 = vpop.f32.mrf.mxu0
        %v3212 = vpop.f32.mrf.mxu0
        %v3213 = vadd.f32 %v3116, %v3212
        %v3214 = vpop.f32.mrf.mxu0
        %3215 = vmatprep.mubr.bf16.mxu0 %v2272
        %3216 = vmatmul.mubr.bf16.gmra.mxu0 %v2240
        %v3217 = vpop.f32.mrf.mxu0
        %v3218 = vadd.f32 %v3121, %v3217
        %v3219 = vpop.f32.mrf.mxu0
        %v3220 = vpop.f32.mrf.mxu0
        %v3221 = vadd.f32 %v3124, %v3220
        %v3222 = vpop.f32.mrf.mxu0
        %3223 = vmatprep.mubr.bf16.mxu0 %v2273
        %3224 = vmatmul.mubr.bf16.gmra.mxu0 %v2241
        %v3225 = vpop.f32.mrf.mxu0
        %v3226 = vadd.f32 %v3129, %v3225
        %v3227 = vpop.f32.mrf.mxu0
        %v3228 = vpop.f32.mrf.mxu0
        %v3229 = vadd.f32 %v3132, %v3228
        %v3230 = vpop.f32.mrf.mxu0
        %3231 = vmatprep.mubr.bf16.mxu0 %v2274
        %3232 = vmatmul.mubr.bf16.gmra.mxu0 %v2242
        %v3233 = vpop.f32.mrf.mxu0
        %v3234 = vadd.f32 %v3137, %v3233
        %v3235 = vpop.f32.mrf.mxu0
        %v3236 = vpop.f32.mrf.mxu0
        %v3237 = vadd.f32 %v3140, %v3236
        %v3238 = vpop.f32.mrf.mxu0
        %3239 = vmatprep.mubr.bf16.mxu0 %v2275
        %3240 = vmatmul.mubr.bf16.gmra.mxu0 %v2243
        %v3241 = vpop.f32.mrf.mxu0
        %v3242 = vadd.f32 %v3145, %v3241
        %v3243 = vpop.f32.mrf.mxu0
        %v3244 = vpop.f32.mrf.mxu0
        %v3245 = vadd.f32 %v3148, %v3244
        %v3246 = vpop.f32.mrf.mxu0
        %3247 = vmatprep.mubr.bf16.mxu0 %v2276
        %3248 = vmatmul.mubr.bf16.gmra.mxu0 %v2244
        %v3249 = vpop.f32.mrf.mxu0
        %v3250 = vadd.f32 %v3153, %v3249
        %v3251 = vpop.f32.mrf.mxu0
        %v3252 = vpop.f32.mrf.mxu0
        %v3253 = vadd.f32 %v3156, %v3252
        %v3254 = vpop.f32.mrf.mxu0
        %3255 = vmatprep.mubr.bf16.mxu0 %v2277
        %3256 = vmatmul.mubr.bf16.gmra.mxu0 %v2245
        %v3257 = vpop.f32.mrf.mxu0
        %v3258 = vadd.f32 %v3161, %v3257
        %v3259 = vpop.f32.mrf.mxu0
        %v3260 = vpop.f32.mrf.mxu0
        %v3261 = vadd.f32 %v3164, %v3260
        %v3262 = vpop.f32.mrf.mxu0
        %3263 = vdwg.mxu0
        %3264 = vmatprep.subr.bf16.mxu0 0
        %3265 = vmatpush1.bf16.msra.mxu0 %v2884
        %3266 = vmatprep.subr.bf16.mxu0 0
        %3267 = vmatpush1.bf16.msra.mxu0 %v2883
        %3268 = vmatprep.subr.bf16.mxu0 0
        %3269 = vmatpush1.bf16.msra.mxu0 %v2882
        %3270 = vmatprep.subr.bf16.mxu0 0
        %3271 = vmatpush1.bf16.msra.mxu0 %v2881
        %3272 = vmatprep.subr.bf16.mxu0 0
        %3273 = vmatpush1.bf16.msra.mxu0 %v2880
        %3274 = vmatprep.subr.bf16.mxu0 0
        %3275 = vmatpush1.bf16.msra.mxu0 %v2879
        %3276 = vmatprep.subr.bf16.mxu0 0
        %3277 = vmatpush1.bf16.msra.mxu0 %v2878
        %3278 = vmatprep.subr.bf16.mxu0 0
        %3279 = vmatpush1.bf16.msra.mxu0 %v2877
        %3280 = vmatprep.subr.bf16.mxu0 0
        %3281 = vmatpush2.bf16.msra.mxu0 %v2892
        %3282 = vmatprep.subr.bf16.mxu0 0
        %3283 = vmatpush2.bf16.msra.mxu0 %v2891
        %3284 = vmatprep.subr.bf16.mxu0 0
        %3285 = vmatpush2.bf16.msra.mxu0 %v2890
        %3286 = vmatprep.subr.bf16.mxu0 0
        %3287 = vmatpush2.bf16.msra.mxu0 %v2889
        %3288 = vmatprep.subr.bf16.mxu0 0
        %3289 = vmatpush2.bf16.msra.mxu0 %v2888
        %3290 = vmatprep.subr.bf16.mxu0 0
        %3291 = vmatpush2.bf16.msra.mxu0 %v2887
        %3292 = vmatprep.subr.bf16.mxu0 0
        %3293 = vmatpush2.bf16.msra.mxu0 %v2886
        %3294 = vmatprep.subr.bf16.mxu0 0
        %3295 = vmatpush2.bf16.msra.mxu0 %v2885
        %3296 = vmatprep.mubr.bf16.mxu0 %v2342
        %3297 = vmatmul.mubr.bf16.gmra.mxu0 %v2310
        %v3298 = vpop.f32.mrf.mxu0
        %v3299 = vadd.f32 %v3202, %v3298
        %v3300 = vpop.f32.mrf.mxu0
        %v3301 = vpop.f32.mrf.mxu0
        %v3302 = vadd.f32 %v3205, %v3301
        %v3303 = vpop.f32.mrf.mxu0
        %3304 = vmatprep.mubr.bf16.mxu0 %v2343
        %3305 = vmatmul.mubr.bf16.gmra.mxu0 %v2311
        %v3306 = vpop.f32.mrf.mxu0
        %v3307 = vadd.f32 %v3210, %v3306
        %v3308 = vpop.f32.mrf.mxu0
        %v3309 = vpop.f32.mrf.mxu0
        %v3310 = vadd.f32 %v3213, %v3309
        %v3311 = vpop.f32.mrf.mxu0
        %3312 = vmatprep.mubr.bf16.mxu0 %v2344
        %3313 = vmatmul.mubr.bf16.gmra.mxu0 %v2312
        %v3314 = vpop.f32.mrf.mxu0
        %v3315 = vadd.f32 %v3218, %v3314
        %v3316 = vpop.f32.mrf.mxu0
        %v3317 = vpop.f32.mrf.mxu0
        %v3318 = vadd.f32 %v3221, %v3317
        %v3319 = vpop.f32.mrf.mxu0
        %3320 = vmatprep.mubr.bf16.mxu0 %v2345
        %3321 = vmatmul.mubr.bf16.gmra.mxu0 %v2313
        %v3322 = vpop.f32.mrf.mxu0
        %v3323 = vadd.f32 %v3226, %v3322
        %v3324 = vpop.f32.mrf.mxu0
        %v3325 = vpop.f32.mrf.mxu0
        %v3326 = vadd.f32 %v3229, %v3325
        %v3327 = vpop.f32.mrf.mxu0
        %3328 = vmatprep.mubr.bf16.mxu0 %v2346
        %3329 = vmatmul.mubr.bf16.gmra.mxu0 %v2314
        %v3330 = vpop.f32.mrf.mxu0
        %v3331 = vadd.f32 %v3234, %v3330
        %v3332 = vpop.f32.mrf.mxu0
        %v3333 = vpop.f32.mrf.mxu0
        %v3334 = vadd.f32 %v3237, %v3333
        %v3335 = vpop.f32.mrf.mxu0
        %3336 = vmatprep.mubr.bf16.mxu0 %v2347
        %3337 = vmatmul.mubr.bf16.gmra.mxu0 %v2315
        %v3338 = vpop.f32.mrf.mxu0
        %v3339 = vadd.f32 %v3242, %v3338
        %v3340 = vpop.f32.mrf.mxu0
        %v3341 = vpop.f32.mrf.mxu0
        %v3342 = vadd.f32 %v3245, %v3341
        %v3343 = vpop.f32.mrf.mxu0
        %3344 = vmatprep.mubr.bf16.mxu0 %v2348
        %3345 = vmatmul.mubr.bf16.gmra.mxu0 %v2316
        %v3346 = vpop.f32.mrf.mxu0
        %v3347 = vadd.f32 %v3250, %v3346
        %v3348 = vpop.f32.mrf.mxu0
        %v3349 = vpop.f32.mrf.mxu0
        %v3350 = vadd.f32 %v3253, %v3349
        %v3351 = vpop.f32.mrf.mxu0
        %3352 = vmatprep.mubr.bf16.mxu0 %v2349
        %3353 = vmatmul.mubr.bf16.gmra.mxu0 %v2317
        %v3354 = vpop.f32.mrf.mxu0
        %v3355 = vadd.f32 %v3258, %v3354
        %v3356 = vpop.f32.mrf.mxu0
        %v3357 = vpop.f32.mrf.mxu0
        %v3358 = vadd.f32 %v3261, %v3357
        %v3359 = vpop.f32.mrf.mxu0
        %3360 = vdwg.mxu0
        %3361 = vmatprep.subr.bf16.mxu0 0
        %3362 = vmatpush1.bf16.msra.mxu0 %v2900
        %3363 = vmatprep.subr.bf16.mxu0 0
        %3364 = vmatpush1.bf16.msra.mxu0 %v2899
        %3365 = vmatprep.subr.bf16.mxu0 0
        %3366 = vmatpush1.bf16.msra.mxu0 %v2898
        %3367 = vmatprep.subr.bf16.mxu0 0
        %3368 = vmatpush1.bf16.msra.mxu0 %v2897
        %3369 = vmatprep.subr.bf16.mxu0 0
        %3370 = vmatpush1.bf16.msra.mxu0 %v2896
        %3371 = vmatprep.subr.bf16.mxu0 0
        %3372 = vmatpush1.bf16.msra.mxu0 %v2895
        %3373 = vmatprep.subr.bf16.mxu0 0
        %3374 = vmatpush1.bf16.msra.mxu0 %v2894
        %3375 = vmatprep.subr.bf16.mxu0 0
        %3376 = vmatpush1.bf16.msra.mxu0 %v2893
        %3377 = vmatprep.subr.bf16.mxu0 0
        %3378 = vmatpush2.bf16.msra.mxu0 0
        %3379 = vmatprep.subr.bf16.mxu0 0
        %3380 = vmatpush2.bf16.msra.mxu0 0
        %3381 = vmatprep.subr.bf16.mxu0 0
        %3382 = vmatpush2.bf16.msra.mxu0 0
        %3383 = vmatprep.subr.bf16.mxu0 0
        %3384 = vmatpush2.bf16.msra.mxu0 0
        %3385 = vmatprep.subr.bf16.mxu0 0
        %3386 = vmatpush2.bf16.msra.mxu0 0
        %3387 = vmatprep.subr.bf16.mxu0 0
        %3388 = vmatpush2.bf16.msra.mxu0 0
        %3389 = vmatprep.subr.bf16.mxu0 0
        %3390 = vmatpush2.bf16.msra.mxu0 0
        %3391 = vmatprep.subr.bf16.mxu0 0
        %3392 = vmatpush2.bf16.msra.mxu0 0
        %3393 = vmatprep.mubr.bf16.mxu0 0
        %3394 = vmatmul.mubr.bf16.gmra.mxu0 %v2374
        %v3395 = vpop.f32.mrf.mxu0
        %v3396 = vadd.f32 %v3299, %v3395
        %v3397 = vpop.f32.mrf.mxu0
        %v3398 = vpop.f32.mrf.mxu0
        %v3399 = vadd.f32 %v3302, %v3398
        %v3400 = vpop.f32.mrf.mxu0
        %3401 = vmatprep.mubr.bf16.mxu0 0
        %3402 = vmatmul.mubr.bf16.gmra.mxu0 %v2375
        %v3403 = vpop.f32.mrf.mxu0
        %v3404 = vadd.f32 %v3307, %v3403
        %v3405 = vpop.f32.mrf.mxu0
        %v3406 = vpop.f32.mrf.mxu0
        %v3407 = vadd.f32 %v3310, %v3406
        %v3408 = vpop.f32.mrf.mxu0
        %3409 = vmatprep.mubr.bf16.mxu0 0
        %3410 = vmatmul.mubr.bf16.gmra.mxu0 %v2376
        %v3411 = vpop.f32.mrf.mxu0
        %v3412 = vadd.f32 %v3315, %v3411
        %v3413 = vpop.f32.mrf.mxu0
        %v3414 = vpop.f32.mrf.mxu0
        %v3415 = vadd.f32 %v3318, %v3414
        %v3416 = vpop.f32.mrf.mxu0
        %3417 = vmatprep.mubr.bf16.mxu0 0
        %3418 = vmatmul.mubr.bf16.gmra.mxu0 %v2377
        %v3419 = vpop.f32.mrf.mxu0
        %v3420 = vadd.f32 %v3323, %v3419
        %v3421 = vpop.f32.mrf.mxu0
        %v3422 = vpop.f32.mrf.mxu0
        %v3423 = vadd.f32 %v3326, %v3422
        %v3424 = vpop.f32.mrf.mxu0
        %3425 = vmatprep.mubr.bf16.mxu0 0
        %3426 = vmatmul.mubr.bf16.gmra.mxu0 %v2378
        %v3427 = vpop.f32.mrf.mxu0
        %v3428 = vadd.f32 %v3331, %v3427
        %v3429 = vpop.f32.mrf.mxu0
        %v3430 = vpop.f32.mrf.mxu0
        %v3431 = vadd.f32 %v3334, %v3430
        %v3432 = vpop.f32.mrf.mxu0
        %3433 = vmatprep.mubr.bf16.mxu0 0
        %3434 = vmatmul.mubr.bf16.gmra.mxu0 %v2379
        %v3435 = vpop.f32.mrf.mxu0
        %v3436 = vadd.f32 %v3339, %v3435
        %v3437 = vpop.f32.mrf.mxu0
        %v3438 = vpop.f32.mrf.mxu0
        %v3439 = vadd.f32 %v3342, %v3438
        %v3440 = vpop.f32.mrf.mxu0
        %3441 = vmatprep.mubr.bf16.mxu0 0
        %3442 = vmatmul.mubr.bf16.gmra.mxu0 %v2380
        %v3443 = vpop.f32.mrf.mxu0
        %v3444 = vadd.f32 %v3347, %v3443
        %v3445 = vpop.f32.mrf.mxu0
        %v3446 = vpop.f32.mrf.mxu0
        %v3447 = vadd.f32 %v3350, %v3446
        %v3448 = vpop.f32.mrf.mxu0
        %3449 = vmatprep.mubr.bf16.mxu0 0
        %3450 = vmatmul.mubr.bf16.gmra.mxu0 %v2381
        %v3451 = vpop.f32.mrf.mxu0
        %v3452 = vadd.f32 %v3355, %v3451
        %v3453 = vpop.f32.mrf.mxu0
        %v3454 = vpop.f32.mrf.mxu0
        %v3455 = vadd.f32 %v3358, %v3454
        %v3456 = vpop.f32.mrf.mxu0
        %3457 = vdwg.mxu0
        %v3458 = vmax.f32 %v3396, 0.0
        %v3459 = vmax.f32 %v3399, 0.0
        %v3460 = vmax.f32 %v3404, 0.0
        %v3461 = vmax.f32 %v3407, 0.0
        %v3462 = vmax.f32 %v3412, 0.0
        %v3463 = vmax.f32 %v3415, 0.0
        %v3464 = vmax.f32 %v3420, 0.0
        %v3465 = vmax.f32 %v3423, 0.0
        %v3466 = vmax.f32 %v3428, 0.0
        %v3467 = vmax.f32 %v3431, 0.0
        %v3468 = vmax.f32 %v3436, 0.0
        %v3469 = vmax.f32 %v3439, 0.0
        %v3470 = vmax.f32 %v3444, 0.0
        %v3471 = vmax.f32 %v3447, 0.0
        %v3472 = vmax.f32 %v3452, 0.0
        %v3473 = vmax.f32 %v3455, 0.0
        %v3474 = vpack.c.bf16 %v3459, %v3458
        %v3475 = vpack.c.bf16 %v3461, %v3460
        %v3476 = vpack.c.bf16 %v3463, %v3462
        %v3477 = vpack.c.bf16 %v3465, %v3464
        %v3478 = vpack.c.bf16 %v3467, %v3466
        %v3479 = vpack.c.bf16 %v3469, %v3468
        %v3480 = vpack.c.bf16 %v3471, %v3470
        %v3481 = vpack.c.bf16 %v3473, %v3472
        %v3482 = vld [vmem:[#allocation12] sm:$0xf]
        %v3483 = vld [vmem:[#allocation12 + $0x4] sm:$0xf]
        %v3484 = vld [vmem:[#allocation12 + $0x8] sm:$0xf]
        %v3485 = vld [vmem:[#allocation12 + $0xc] sm:$0xf]
        %v3486 = vld [vmem:[#allocation12 + $0x10] sm:$0xf]
        %v3487 = vld [vmem:[#allocation12 + $0x14] sm:$0xf]
        %v3488 = vld [vmem:[#allocation12 + $0x18] sm:$0xf]
        %v3489 = vld [vmem:[#allocation12 + $0x1c] sm:$0xf]
        %v3490 = vld [vmem:[#allocation12 + $0x20] sm:$0xf]
        %v3491 = vld [vmem:[#allocation12 + $0x24] sm:$0xf]
        %v3492 = vld [vmem:[#allocation12 + $0x28] sm:$0xf]
        %v3493 = vld [vmem:[#allocation12 + $0x2c] sm:$0xf]
        %v3494 = vld [vmem:[#allocation12 + $0x30] sm:$0xf]
        %v3495 = vld [vmem:[#allocation12 + $0x34] sm:$0xf]
        %v3496 = vld [vmem:[#allocation12 + $0x38] sm:$0xf]
        %v3497 = vld [vmem:[#allocation12 + $0x3c] sm:$0xf]
        %v3498 = vld [vmem:[%s7] sm:$0x1]
        %v3500 = vlaneseq
        %v3501 = vshrl.u32 %v3500, 7
        %v3502 = vsub.s32 0, %v3501
        %v3503 = vrot.slane %v3498, %v3502
        %v3521 = vunpack.c.l.b16 %v3482
        %v3522 = vunpack.c.l.b16 %v3483
        %v3523 = vunpack.c.l.b16 %v3484
        %v3524 = vunpack.c.l.b16 %v3485
        %v3525 = vunpack.c.l.b16 %v3486
        %v3526 = vunpack.c.l.b16 %v3487
        %v3527 = vunpack.c.l.b16 %v3488
        %v3528 = vunpack.c.l.b16 %v3489
        %v3529 = vunpack.c.l.b16 %v3490
        %v3530 = vunpack.c.l.b16 %v3491
        %v3531 = vunpack.c.l.b16 %v3492
        %v3532 = vunpack.c.l.b16 %v3493
        %v3533 = vunpack.c.l.b16 %v3494
        %v3534 = vunpack.c.l.b16 %v3495
        %v3535 = vunpack.c.l.b16 %v3496
        %v3536 = vunpack.c.l.b16 %v3497
        %v3537 = vpack.c.b16 %v3522, %v3521
        %v3538 = vpack.c.b16 %v3524, %v3523
        %v3539 = vpack.c.b16 %v3526, %v3525
        %v3540 = vpack.c.b16 %v3528, %v3527
        %v3541 = vpack.c.b16 %v3530, %v3529
        %v3542 = vpack.c.b16 %v3532, %v3531
        %v3543 = vpack.c.b16 %v3534, %v3533
        %v3544 = vpack.c.b16 %v3536, %v3535
        %3553 = vmatprep.subr.bf16.mxu0 0
        %3554 = vmatpush1.bf16.msra.mxu0 %v3544
        %3555 = vmatprep.subr.bf16.mxu0 0
        %3556 = vmatpush1.bf16.msra.mxu0 %v3543
        %3557 = vmatprep.subr.bf16.mxu0 0
        %3558 = vmatpush1.bf16.msra.mxu0 %v3542
        %3559 = vmatprep.subr.bf16.mxu0 0
        %3560 = vmatpush1.bf16.msra.mxu0 %v3541
        %3561 = vmatprep.subr.bf16.mxu0 0
        %3562 = vmatpush1.bf16.msra.mxu0 %v3540
        %3563 = vmatprep.subr.bf16.mxu0 0
        %3564 = vmatpush1.bf16.msra.mxu0 %v3539
        %3565 = vmatprep.subr.bf16.mxu0 0
        %3566 = vmatpush1.bf16.msra.mxu0 %v3538
        %3567 = vmatprep.subr.bf16.mxu0 0
        %3568 = vmatpush1.bf16.msra.mxu0 %v3537
        %3569 = vmatprep.subr.bf16.mxu0 0
        %3570 = vmatpush2.bf16.msra.mxu0 0
        %3571 = vmatprep.subr.bf16.mxu0 0
        %3572 = vmatpush2.bf16.msra.mxu0 0
        %3573 = vmatprep.subr.bf16.mxu0 0
        %3574 = vmatpush2.bf16.msra.mxu0 0
        %3575 = vmatprep.subr.bf16.mxu0 0
        %3576 = vmatpush2.bf16.msra.mxu0 0
        %3577 = vmatprep.subr.bf16.mxu0 0
        %3578 = vmatpush2.bf16.msra.mxu0 0
        %3579 = vmatprep.subr.bf16.mxu0 0
        %3580 = vmatpush2.bf16.msra.mxu0 0
        %3581 = vmatprep.subr.bf16.mxu0 0
        %3582 = vmatpush2.bf16.msra.mxu0 0
        %3583 = vmatprep.subr.bf16.mxu0 0
        %3584 = vmatpush2.bf16.msra.mxu0 0
        %3585 = vmatprep.mubr.bf16.mxu0 0
        %3586 = vmatmul.mubr.bf16.gmra.mxu0 %v3474
        %v3587 = vpop.f32.mrf.mxu0
        %v3588 = vadd.f32 %v3503, %v3587
        %v3589 = vpop.f32.mrf.mxu0
        %v3590 = vpop.f32.mrf.mxu0
        %v3591 = vadd.f32 %v3503, %v3590
        %v3592 = vpop.f32.mrf.mxu0
        %3593 = vmatprep.mubr.bf16.mxu0 0
        %3594 = vmatmul.mubr.bf16.gmra.mxu0 %v3475
        %v3595 = vpop.f32.mrf.mxu0
        %v3596 = vadd.f32 %v3503, %v3595
        %v3597 = vpop.f32.mrf.mxu0
        %v3598 = vpop.f32.mrf.mxu0
        %v3599 = vadd.f32 %v3503, %v3598
        %v3600 = vpop.f32.mrf.mxu0
        %3601 = vmatprep.mubr.bf16.mxu0 0
        %3602 = vmatmul.mubr.bf16.gmra.mxu0 %v3476
        %v3603 = vpop.f32.mrf.mxu0
        %v3604 = vadd.f32 %v3503, %v3603
        %v3605 = vpop.f32.mrf.mxu0
        %v3606 = vpop.f32.mrf.mxu0
        %v3607 = vadd.f32 %v3503, %v3606
        %v3608 = vpop.f32.mrf.mxu0
        %3609 = vmatprep.mubr.bf16.mxu0 0
        %3610 = vmatmul.mubr.bf16.gmra.mxu0 %v3477
        %v3611 = vpop.f32.mrf.mxu0
        %v3612 = vadd.f32 %v3503, %v3611
        %v3613 = vpop.f32.mrf.mxu0
        %v3614 = vpop.f32.mrf.mxu0
        %v3615 = vadd.f32 %v3503, %v3614
        %v3616 = vpop.f32.mrf.mxu0
        %3617 = vmatprep.mubr.bf16.mxu0 0
        %3618 = vmatmul.mubr.bf16.gmra.mxu0 %v3478
        %v3619 = vpop.f32.mrf.mxu0
        %v3620 = vadd.f32 %v3503, %v3619
        %v3621 = vpop.f32.mrf.mxu0
        %v3622 = vpop.f32.mrf.mxu0
        %v3623 = vadd.f32 %v3503, %v3622
        %v3624 = vpop.f32.mrf.mxu0
        %3625 = vmatprep.mubr.bf16.mxu0 0
        %3626 = vmatmul.mubr.bf16.gmra.mxu0 %v3479
        %v3627 = vpop.f32.mrf.mxu0
        %v3628 = vadd.f32 %v3503, %v3627
        %v3629 = vpop.f32.mrf.mxu0
        %v3630 = vpop.f32.mrf.mxu0
        %v3631 = vadd.f32 %v3503, %v3630
        %v3632 = vpop.f32.mrf.mxu0
        %3633 = vmatprep.mubr.bf16.mxu0 0
        %3634 = vmatmul.mubr.bf16.gmra.mxu0 %v3480
        %v3635 = vpop.f32.mrf.mxu0
        %v3636 = vadd.f32 %v3503, %v3635
        %v3637 = vpop.f32.mrf.mxu0
        %v3638 = vpop.f32.mrf.mxu0
        %v3639 = vadd.f32 %v3503, %v3638
        %v3640 = vpop.f32.mrf.mxu0
        %3641 = vmatprep.mubr.bf16.mxu0 0
        %3642 = vmatmul.mubr.bf16.gmra.mxu0 %v3481
        %v3643 = vpop.f32.mrf.mxu0
        %v3644 = vadd.f32 %v3503, %v3643
        %v3645 = vpop.f32.mrf.mxu0
        %v3646 = vpop.f32.mrf.mxu0
        %v3647 = vadd.f32 %v3503, %v3646
        %v3648 = vpop.f32.mrf.mxu0
        %3649 = vdwg.mxu0
        %v3650 = vadd.f32 %v3588, %v403
        %v3651 = vadd.f32 %v3591, %v404
        %v3652 = vadd.f32 %v3596, %v405
        %v3653 = vadd.f32 %v3599, %v406
        %v3654 = vadd.f32 %v3604, %v407
        %v3655 = vadd.f32 %v3607, %v408
        %v3656 = vadd.f32 %v3612, %v409
        %v3657 = vadd.f32 %v3615, %v410
        %v3658 = vadd.f32 %v3620, %v411
        %v3659 = vadd.f32 %v3623, %v412
        %v3660 = vadd.f32 %v3628, %v413
        %v3661 = vadd.f32 %v3631, %v414
        %v3662 = vadd.f32 %v3636, %v415
        %v3663 = vadd.f32 %v3639, %v416
        %v3664 = vadd.f32 %v3644, %v417
        %v3665 = vadd.f32 %v3647, %v418
        %3666 = vst [vmem:[%s360] sm:$0xff] %v3650
        %3667 = vst [vmem:[%s360 + $0x8] sm:$0xff] %v3651
        %3668 = vst [vmem:[%s360 + $0x10] sm:$0xff] %v3652
        %3669 = vst [vmem:[%s360 + $0x18] sm:$0xff] %v3653
        %3670 = vst [vmem:[%s360 + $0x20] sm:$0xff] %v3654
        %3671 = vst [vmem:[%s360 + $0x28] sm:$0xff] %v3655
        %3672 = vst [vmem:[%s360 + $0x30] sm:$0xff] %v3656
        %3673 = vst [vmem:[%s360 + $0x38] sm:$0xff] %v3657
        %3674 = vst [vmem:[%s360 + $0x40] sm:$0xff] %v3658
        %3675 = vst [vmem:[%s360 + $0x48] sm:$0xff] %v3659
        %3676 = vst [vmem:[%s360 + $0x50] sm:$0xff] %v3660
        %3677 = vst [vmem:[%s360 + $0x58] sm:$0xff] %v3661
        %3678 = vst [vmem:[%s360 + $0x60] sm:$0xff] %v3662
        %3679 = vst [vmem:[%s360 + $0x68] sm:$0xff] %v3663
        %3680 = vst [vmem:[%s360 + $0x70] sm:$0xff] %v3664
        %3681 = vst [vmem:[%s360 + $0x78] sm:$0xff] %v3665
        %s3682 = sand.u32 %s203, 1
        %s3683 = scalar_lea.sflag [#allocation8], %s3682
        %s3684 = sand.u32 %s203, 1
        %s3685 = smul.addr %s3684, 128
        %s3686 = scalar_lea.vmem [#allocation14], %s3685
        // Predicated region
        $region73: #{tpu_custom_call.1} parent=47 // pred_check
          %p3687 = pneg %p213
        $region74: #{tpu_custom_call.1} parent=47 // pred_check_branch
          %3689 = sbr.rel (%p3687) target = $region76
        $region75: #{tpu_custom_call.1} parent=47 // pred_region
          %s3690 = smul.u32 8, %s32
          %s3692 = ssub.s32 2048, 2048
          %3693 = vsyncadd %s3683, %s3692
          %s3694 = smul.addr %s3690, 2
          %s3695 = smul.addr %s31, 32
          %s3696 = sadd.s32 %s3694, %s3695
          %s3697 = smul.addr %s3696, 128
          %s3698 = scalar_lea.hbm %s8, %s3697
          %s3699 = sshll.u32 %s3686, 4
          %s3700 = int_to_ptr.vmem [resolvable:$true] %s3699
          %3705 = dma.vmem_to_hbm [thread:$0]  %s3700, 2048, %s3698, %s3683, 128, 128, 8
        $region76: #{tpu_custom_call.1} parent=47 // pred_fallthru
          _
      $region48: #{tpu_custom_call.1} parent=5 // pred_fallthru
        _
      %p3706 = scmp.le.s32.totalorder 2, %s22
      // Predicated region
      $region77: #{tpu_custom_call.1} parent=5 // pred_check
        %p3707 = pneg %p3706
      $region78: #{tpu_custom_call.1} parent=5 // pred_check_branch
        %3709 = sbr.rel (%p3707) target = $region80
      $region79: #{tpu_custom_call.1} parent=5 // pred_region
        %s3710 = ssub.s32 %s22, 2
        // Predicated region
        $region81: #{tpu_custom_call.1} parent=79 // pred_check
          %p3711 = pneg %p219
        $region82: #{tpu_custom_call.1} parent=79 // pred_check_branch
          %3713 = sbr.rel (%p3711) target = $region84
        $region83: #{tpu_custom_call.1} parent=79 // pred_region
          %s3714 = sand.u32 %s204, 1
          %s3715 = scalar_lea.sflag [#allocation8], %s3714
          %s3716 = sand.u32 %s204, 1
          %s3717 = smul.addr %s3716, 128
          %s3718 = scalar_lea.vmem [#allocation14], %s3717
          %3719 = dma.done %s3715, 2048
        $region84: #{tpu_custom_call.1} parent=79 // pred_fallthru
          _
      $region80: #{tpu_custom_call.1} parent=5 // pred_fallthru
        _
    $region6: #{tpu_custom_call.1} parent=1 // loop_footer
      %s26 = sadd.s32 1, %s22
    $region7: #{tpu_custom_call.1} parent=1 // loop_footer_branch
      %21 = sbr.rel target = $region3
    $region8: #{tpu_custom_call.1} parent=1 // loop_exit
      _
    %3720 = vsyncpa [#allocation7], 1
    %s3721 = scalar_lea.sflag [#allocation7], 1
    %3722 = vsyncpa %s3721, 1
    %3723 = vsyncpa [#allocation10], 1
    %3724 = vsyncpa [#allocation13], 1
    %3725 = vsyncpa [#allocation8], 1
    %s3726 = scalar_lea.sflag [#allocation8], 1
    %3727 = vsyncpa %s3726, 1
  %3728 = vsyncmov [#allocation4]
  %s3729 = vpop.sfrf %3728
  %p3730 = scmp.eq.s32.totalorder %s3729, 0
  %p3731 = pneg %p3730
  %3733 = shalt.err (%p3731)
  %s3734 = scalar_lea.sflag [#allocation4], 1
  %3735 = vsyncmov %s3734
  %s3736 = vpop.sfrf %3735
  %p3737 = scmp.eq.s32.totalorder %s3736, 0
  %p3738 = pneg %p3737
  %3740 = shalt.err (%p3738)

</llo_original>
